<compile_context>
chip_gen: v7x
topology: tpu7x:2x2x1
jax: 0.10.0
libtpu: 0.0.40
codegen_flags: <defaults>
</compile_context>

<pallas_src>
import functools

import jax
import jax.numpy as jnp
from jax.experimental import pallas as pl
from jax.experimental.pallas import tpu as pltpu

# Original (PyTorch) feature chain: 8 Linear layers.
FEATS = [28 * 28, 128, 64, 12, 3, 12, 64, 128, 28 * 28]
ALL_DIMS = list(zip(FEATS[:-1], FEATS[1:]))
N_LAYERS = len(ALL_DIMS)  # 8


def _round_up(x, m):
    return (x + m - 1) // m * m


# Lane-padded feature chain used inside the kernel: [784, 128 x 7, 896].
FEATS_PAD = [FEATS[0]] + [_round_up(f, 128) for f in FEATS[1:]]


def _autoencoder_kernel(x_ref, *refs, ew_dtype):
    # refs = w1..w8 (padded), b1..b8 (padded, f32), enc_ref, dec_ref
    w_refs = refs[0:N_LAYERS]
    b_refs = refs[N_LAYERS:2 * N_LAYERS]
    enc_ref, dec_ref = refs[2 * N_LAYERS], refs[2 * N_LAYERS + 1]

    # In-kernel cast: x arrives from HBM as f32 exactly once; cast to the MXU
    # operand dtype of the first weight here (free on the VPU, saves HBM bytes).
    h = x_ref[...].astype(w_refs[0].dtype)

    for li in range(N_LAYERS):
        w = w_refs[li][...]
        # Operand dtype follows the (per-layer) weight dtype; accumulate in f32.
        acc = jnp.dot(h.astype(w.dtype), w, preferred_element_type=jnp.float32)
        acc = acc + b_refs[li][...]  # bias add in f32
        if li == 3:
            # Encoder head: Linear only (no activation). Pad lanes are exact zeros.
            enc_ref[...] = acc.astype(enc_ref.dtype)
            h = acc  # keep f32; next layer's dot casts to its weight dtype
        elif li == N_LAYERS - 1:
            # Decoder head: Linear + Sigmoid.
            dec_ref[...] = jax.nn.sigmoid(acc.astype(ew_dtype)).astype(dec_ref.dtype)
        else:
            # tanh in ew_dtype (bf16 on v6e/v7x EUP, f32 on v5e).
            h = jnp.tanh(acc.astype(ew_dtype))


def autoencoder_forward(x, weights, biases, *, tb=256,
                        compute_dtype=jnp.bfloat16,
                        elementwise_dtype=None,
                        latent_f32=True,
                        enc_dtype=jnp.float32,
                        dec_dtype=jnp.bfloat16):
    """x: (B, 784) f32; weights[i]: (din, dout) f32; biases[i]: (1, dout) f32.

    Returns (encoded (B, 3) enc_dtype, decoded (B, 784) dec_dtype).

    Tiling guidance: tb=128 for B <= 512 on v7x (>=2 grid steps per TensorCore),
    tb=512 on v5e/v6e for large batches (amortizes the ~0.35 us per-step cost);
    VMEM is not a constraint at any of these sizes.
    """
    B, D = x.shape
    assert D == FEATS[0]
    assert tb % 128 == 0
    for li, (din, dout) in enumerate(ALL_DIMS):
        assert weights[li].shape == (din, dout)
        assert biases[li].shape == (1, dout)

    # Elementwise (tanh/sigmoid) dtype: f32 for the exact path, else bf16 only
    # on chips with a bf16 VPU/EUP (v6e / v7x).
    if elementwise_dtype is None:
        if jnp.dtype(compute_dtype) == jnp.dtype(jnp.float32):
            elementwise_dtype = jnp.float32
        else:
            try:
                kind = jax.devices()[0].device_kind.lower()
            except Exception:  # pragma: no cover - fall back to the safe choice
                kind = ""
            elementwise_dtype = (jnp.bfloat16 if ("v6" in kind or "v7" in kind)
                                 else jnp.float32)

    # ---- batch tiling: no wrapper-side padding; Pallas masks the ragged tail ----
    tb_eff = min(tb, _round_up(B, 128))
    n_tiles = pl.cdiv(B, tb_eff)

    # ---- zero-pad params to lane-dense feature sizes (once, outside the kernel) ----
    w_pad, b_pad = [], []
    for li in range(N_LAYERS):
        din, dout = ALL_DIMS[li]
        din_p, dout_p = FEATS_PAD[li], FEATS_PAD[li + 1]
        # Keep the tiny latent-bottleneck layers (12->3, 3->12) in f32 operands.
        w_dt = jnp.float32 if (latent_f32 and li in (3, 4)) else compute_dtype
        w_pad.append(
            jnp.pad(weights[li], ((0, din_p - din), (0, dout_p - dout))).astype(w_dt))
        b_pad.append(
            jnp.pad(biases[li], ((0, 0), (0, dout_p - dout))).astype(jnp.float32))

    def const_spec(shape):
        # Whole array resident in VMEM; block index never changes across the grid,
        # so Pallas does not re-issue the parameter DMAs per step.
        return pl.BlockSpec(shape, lambda i: (0,) * len(shape))

    in_specs = [pl.BlockSpec((tb_eff, D), lambda i: (i, 0))]   # x stays f32 in HBM
    in_specs += [const_spec(w.shape) for w in w_pad]
    in_specs += [const_spec(b.shape) for b in b_pad]

    enc_pad, dec_pad = FEATS_PAD[4], FEATS_PAD[-1]  # 128, 896 (lane-dense outputs)
    out_specs = [
        pl.BlockSpec((tb_eff, enc_pad), lambda i: (i, 0)),
        pl.BlockSpec((tb_eff, dec_pad), lambda i: (i, 0)),
    ]
    out_shape = [
        jax.ShapeDtypeStruct((B, enc_pad), enc_dtype),
        jax.ShapeDtypeStruct((B, dec_pad), dec_dtype),
    ]

    itemsize = lambda dt: jnp.dtype(dt).itemsize
    flops = 2 * B * sum(FEATS_PAD[i] * FEATS_PAD[i + 1] for i in range(N_LAYERS))
    transcendentals = B * (6 * 128 + dec_pad)  # 6 tanh layers + final sigmoid
    bytes_accessed = (B * D * 4                                    # x read once (f32)
                      + sum(w.size * itemsize(w.dtype) for w in w_pad)
                      + sum(b.size * 4 for b in b_pad)
                      + B * enc_pad * itemsize(enc_dtype)
                      + B * dec_pad * itemsize(dec_dtype))

    enc_full, dec_full = pl.pallas_call(
        functools.partial(_autoencoder_kernel, ew_dtype=elementwise_dtype),
        out_shape=out_shape,
        grid_spec=pltpu.PrefetchScalarGridSpec(
            num_scalar_prefetch=0,
            grid=(n_tiles,),
            in_specs=in_specs,
            out_specs=out_specs,
        ),
        compiler_params=pltpu.CompilerParams(
            dimension_semantics=("parallel",),
            vmem_limit_bytes=32 * 1024 * 1024,  # safe on v5e/v6e/v7x; tiles are small
        ),
        cost_estimate=pl.CostEstimate(
            flops=flops,
            transcendentals=transcendentals,
            bytes_accessed=bytes_accessed,
        ),
    )(x, *w_pad, *b_pad)

    # Slice away lane padding outside the kernel ([:B] is a no-op kept for clarity).
    return enc_full[:B, :FEATS[4]], dec_full[:B, :FEATS[-1]]


def init_params(key):
    """PyTorch nn.Linear default init: U(-1/sqrt(in), 1/sqrt(in)).
    Weights returned already transposed to (in, out); biases as (1, out)."""
    weights, biases = [], []
    for li, (din, dout) in enumerate(ALL_DIMS):
        kw, kb = jax.random.split(jax.random.fold_in(key, li))
        bound = 1.0 / (din ** 0.5)
        weights.append(jax.random.uniform(kw, (din, dout), jnp.float32, -bound, bound))
        biases.append(jax.random.uniform(kb, (1, dout), jnp.float32, -bound, bound))
    return weights, biases


def reference_forward(x, weights, biases):
    h = x
    for li in range(4):
        h = h @ weights[li] + biases[li]
        if li < 3:
            h = jnp.tanh(h)
    enc = h
    d = h
    for li in range(4, 8):
        d = d @ weights[li] + biases[li]
        if li < 7:
            d = jnp.tanh(d)
    return enc, jax.nn.sigmoid(d)


if __name__ == "__main__":
    key = jax.random.PRNGKey(0)
    kx, kp = jax.random.split(key)

    B = 256  # 2 tiles of 128 -> both v7x TensorCores get work; small & fast
    x = jax.random.uniform(kx, (B, 28 * 28), jnp.float32)  # MNIST-like pixels in [0,1)
    weights, biases = init_params(kp)

    enc_ref, dec_ref = reference_forward(x, weights, biases)

    # f32 everywhere: exact-semantics check.
    fwd_f32 = jax.jit(functools.partial(
        autoencoder_forward, tb=128, compute_dtype=jnp.float32,
        elementwise_dtype=jnp.float32, enc_dtype=jnp.float32, dec_dtype=jnp.float32))
    enc32, dec32 = jax.block_until_ready(fwd_f32(x, weights, biases))
    assert enc32.shape == (B, 3) and dec32.shape == (B, 28 * 28)
    assert jnp.allclose(enc32, enc_ref, atol=1e-4, rtol=1e-4)
    assert jnp.allclose(dec32, dec_ref, atol=1e-4, rtol=1e-4)

    # Default fast path: bf16 MXU operands, bf16 decoded output, auto elementwise
    # dtype (bf16 on v6e/v7x, f32 elsewhere), f32 latent bottleneck; loosened tol.
    fwd_fast = jax.jit(functools.partial(autoencoder_forward, tb=128))
    enc16, dec16 = jax.block_until_ready(fwd_fast(x, weights, biases))
    assert enc16.shape == (B, 3) and dec16.shape == (B, 28 * 28)
    assert jnp.allclose(enc16.astype(jnp.float32), enc_ref, atol=7e-2, rtol=7e-2)
    assert jnp.allclose(dec16.astype(jnp.float32), dec_ref, atol=7e-2, rtol=7e-2)

    print("KERNEL_OK")
</pallas_src>

<mosaic_0001>
module attributes {stable_mosaic.version = 11 : i64} {
  func.func @_autoencoder_kernel(%arg0: i32, %arg1: memref<128x784xf32, #tpu.memory_space<vmem>>, %arg2: memref<784x128xf32, #tpu.memory_space<vmem>>, %arg3: memref<128x128xf32, #tpu.memory_space<vmem>>, %arg4: memref<128x128xf32, #tpu.memory_space<vmem>>, %arg5: memref<128x128xf32, #tpu.memory_space<vmem>>, %arg6: memref<128x128xf32, #tpu.memory_space<vmem>>, %arg7: memref<128x128xf32, #tpu.memory_space<vmem>>, %arg8: memref<128x128xf32, #tpu.memory_space<vmem>>, %arg9: memref<128x896xf32, #tpu.memory_space<vmem>>, %arg10: memref<1x128xf32, #tpu.memory_space<vmem>>, %arg11: memref<1x128xf32, #tpu.memory_space<vmem>>, %arg12: memref<1x128xf32, #tpu.memory_space<vmem>>, %arg13: memref<1x128xf32, #tpu.memory_space<vmem>>, %arg14: memref<1x128xf32, #tpu.memory_space<vmem>>, %arg15: memref<1x128xf32, #tpu.memory_space<vmem>>, %arg16: memref<1x128xf32, #tpu.memory_space<vmem>>, %arg17: memref<1x896xf32, #tpu.memory_space<vmem>>, %arg18: memref<128x128xf32, #tpu.memory_space<vmem>>, %arg19: memref<128x896xf32, #tpu.memory_space<vmem>>) attributes {dimension_semantics = [#tpu.dimension_semantics<parallel>], iteration_bounds = array<i64: 2>, scalar_prefetch = 0 : i64, scratch_operands = 0 : i64, tpu.core_type = #tpu.core_type<tc>, window_params = [{transform_indices = @transform_0, window_bounds = array<i64: 128, 784>}, {pipeline_mode = #tpu.pipeline_mode<synchronous>, transform_indices = @transform_1, window_bounds = array<i64: 784, 128>}, {pipeline_mode = #tpu.pipeline_mode<synchronous>, transform_indices = @transform_2, window_bounds = array<i64: 128, 128>}, {pipeline_mode = #tpu.pipeline_mode<synchronous>, transform_indices = @transform_3, window_bounds = array<i64: 128, 128>}, {pipeline_mode = #tpu.pipeline_mode<synchronous>, transform_indices = @transform_4, window_bounds = array<i64: 128, 128>}, {pipeline_mode = #tpu.pipeline_mode<synchronous>, transform_indices = @transform_5, window_bounds = array<i64: 128, 128>}, {pipeline_mode = #tpu.pipeline_mode<synchronous>, transform_indices = @transform_6, window_bounds = array<i64: 128, 128>}, {pipeline_mode = #tpu.pipeline_mode<synchronous>, transform_indices = @transform_7, window_bounds = array<i64: 128, 128>}, {pipeline_mode = #tpu.pipeline_mode<synchronous>, transform_indices = @transform_8, window_bounds = array<i64: 128, 896>}, {pipeline_mode = #tpu.pipeline_mode<synchronous>, transform_indices = @transform_9, window_bounds = array<i64: 1, 128>}, {pipeline_mode = #tpu.pipeline_mode<synchronous>, transform_indices = @transform_10, window_bounds = array<i64: 1, 128>}, {pipeline_mode = #tpu.pipeline_mode<synchronous>, transform_indices = @transform_11, window_bounds = array<i64: 1, 128>}, {pipeline_mode = #tpu.pipeline_mode<synchronous>, transform_indices = @transform_12, window_bounds = array<i64: 1, 128>}, {pipeline_mode = #tpu.pipeline_mode<synchronous>, transform_indices = @transform_13, window_bounds = array<i64: 1, 128>}, {pipeline_mode = #tpu.pipeline_mode<synchronous>, transform_indices = @transform_14, window_bounds = array<i64: 1, 128>}, {pipeline_mode = #tpu.pipeline_mode<synchronous>, transform_indices = @transform_15, window_bounds = array<i64: 1, 128>}, {pipeline_mode = #tpu.pipeline_mode<synchronous>, transform_indices = @transform_16, window_bounds = array<i64: 1, 896>}, {transform_indices = @transform_17, window_bounds = array<i64: 128, 128>}, {transform_indices = @transform_18, window_bounds = array<i64: 128, 896>}]} {
    %c0 = arith.constant 0 : index
    %c0_0 = arith.constant 0 : index
    %0 = vector.load %arg1[%c0, %c0_0] : memref<128x784xf32, #tpu.memory_space<vmem>>, vector<128x784xf32>
    %c0_1 = arith.constant 0 : index
    %c0_2 = arith.constant 0 : index
    %1 = vector.load %arg2[%c0_1, %c0_2] : memref<784x128xf32, #tpu.memory_space<vmem>>, vector<784x128xf32>
    %cst = arith.constant dense<0.000000e+00> : vector<128x128xf32>
    %2 = tpu.matmul %0, %1, %cst {dimension_numbers = #tpu.dot_dimension_numbers<[1], [0], [0], [1], [0, 0, 1, 1], [], []>} : vector<128x784xf32>, vector<784x128xf32>, vector<128x128xf32> -> vector<128x128xf32>
    %c0_3 = arith.constant 0 : index
    %c0_4 = arith.constant 0 : index
    %3 = vector.load %arg10[%c0_3, %c0_4] : memref<1x128xf32, #tpu.memory_space<vmem>>, vector<1x128xf32>
    %4 = vector.broadcast %3 : vector<1x128xf32> to vector<128x128xf32>
    %5 = arith.addf %2, %4 : vector<128x128xf32>
    %6 = math.tanh %5 : vector<128x128xf32>
    %c0_5 = arith.constant 0 : index
    %c0_6 = arith.constant 0 : index
    %7 = vector.load %arg3[%c0_5, %c0_6] : memref<128x128xf32, #tpu.memory_space<vmem>>, vector<128x128xf32>
    %cst_7 = arith.constant dense<0.000000e+00> : vector<128x128xf32>
    %8 = tpu.matmul %6, %7, %cst_7 {dimension_numbers = #tpu.dot_dimension_numbers<[1], [0], [0], [1], [0, 0, 1, 1], [], []>} : vector<128x128xf32>, vector<128x128xf32>, vector<128x128xf32> -> vector<128x128xf32>
    %c0_8 = arith.constant 0 : index
    %c0_9 = arith.constant 0 : index
    %9 = vector.load %arg11[%c0_8, %c0_9] : memref<1x128xf32, #tpu.memory_space<vmem>>, vector<1x128xf32>
    %10 = vector.broadcast %9 : vector<1x128xf32> to vector<128x128xf32>
    %11 = arith.addf %8, %10 : vector<128x128xf32>
    %12 = math.tanh %11 : vector<128x128xf32>
    %c0_10 = arith.constant 0 : index
    %c0_11 = arith.constant 0 : index
    %13 = vector.load %arg4[%c0_10, %c0_11] : memref<128x128xf32, #tpu.memory_space<vmem>>, vector<128x128xf32>
    %cst_12 = arith.constant dense<0.000000e+00> : vector<128x128xf32>
    %14 = tpu.matmul %12, %13, %cst_12 {dimension_numbers = #tpu.dot_dimension_numbers<[1], [0], [0], [1], [0, 0, 1, 1], [], []>} : vector<128x128xf32>, vector<128x128xf32>, vector<128x128xf32> -> vector<128x128xf32>
    %c0_13 = arith.constant 0 : index
    %c0_14 = arith.constant 0 : index
    %15 = vector.load %arg12[%c0_13, %c0_14] : memref<1x128xf32, #tpu.memory_space<vmem>>, vector<1x128xf32>
    %16 = vector.broadcast %15 : vector<1x128xf32> to vector<128x128xf32>
    %17 = arith.addf %14, %16 : vector<128x128xf32>
    %18 = math.tanh %17 : vector<128x128xf32>
    %c0_15 = arith.constant 0 : index
    %c0_16 = arith.constant 0 : index
    %19 = vector.load %arg5[%c0_15, %c0_16] : memref<128x128xf32, #tpu.memory_space<vmem>>, vector<128x128xf32>
    %cst_17 = arith.constant dense<0.000000e+00> : vector<128x128xf32>
    %20 = tpu.matmul %18, %19, %cst_17 {dimension_numbers = #tpu.dot_dimension_numbers<[1], [0], [0], [1], [0, 0, 1, 1], [], []>} : vector<128x128xf32>, vector<128x128xf32>, vector<128x128xf32> -> vector<128x128xf32>
    %c0_18 = arith.constant 0 : index
    %c0_19 = arith.constant 0 : index
    %21 = vector.load %arg13[%c0_18, %c0_19] : memref<1x128xf32, #tpu.memory_space<vmem>>, vector<1x128xf32>
    %22 = vector.broadcast %21 : vector<1x128xf32> to vector<128x128xf32>
    %23 = arith.addf %20, %22 : vector<128x128xf32>
    %c0_20 = arith.constant 0 : index
    %c0_21 = arith.constant 0 : index
    %24 = vector.load %arg18[%c0_20, %c0_21] : memref<128x128xf32, #tpu.memory_space<vmem>>, vector<128x128xf32>
    tpu.vector_store %arg18[%c0_20, %c0_21], %23 {strides = array<i32>} : memref<128x128xf32, #tpu.memory_space<vmem>>, vector<128x128xf32>,
    %c0_22 = arith.constant 0 : index
    %c0_23 = arith.constant 0 : index
    %25 = vector.load %arg6[%c0_22, %c0_23] : memref<128x128xf32, #tpu.memory_space<vmem>>, vector<128x128xf32>
    %cst_24 = arith.constant dense<0.000000e+00> : vector<128x128xf32>
    %26 = tpu.matmul %23, %25, %cst_24 {dimension_numbers = #tpu.dot_dimension_numbers<[1], [0], [0], [1], [0, 0, 1, 1], [], []>} : vector<128x128xf32>, vector<128x128xf32>, vector<128x128xf32> -> vector<128x128xf32>
    %c0_25 = arith.constant 0 : index
    %c0_26 = arith.constant 0 : index
    %27 = vector.load %arg14[%c0_25, %c0_26] : memref<1x128xf32, #tpu.memory_space<vmem>>, vector<1x128xf32>
    %28 = vector.broadcast %27 : vector<1x128xf32> to vector<128x128xf32>
    %29 = arith.addf %26, %28 : vector<128x128xf32>
    %30 = math.tanh %29 : vector<128x128xf32>
    %c0_27 = arith.constant 0 : index
    %c0_28 = arith.constant 0 : index
    %31 = vector.load %arg7[%c0_27, %c0_28] : memref<128x128xf32, #tpu.memory_space<vmem>>, vector<128x128xf32>
    %cst_29 = arith.constant dense<0.000000e+00> : vector<128x128xf32>
    %32 = tpu.matmul %30, %31, %cst_29 {dimension_numbers = #tpu.dot_dimension_numbers<[1], [0], [0], [1], [0, 0, 1, 1], [], []>} : vector<128x128xf32>, vector<128x128xf32>, vector<128x128xf32> -> vector<128x128xf32>
    %c0_30 = arith.constant 0 : index
    %c0_31 = arith.constant 0 : index
    %33 = vector.load %arg15[%c0_30, %c0_31] : memref<1x128xf32, #tpu.memory_space<vmem>>, vector<1x128xf32>
    %34 = vector.broadcast %33 : vector<1x128xf32> to vector<128x128xf32>
    %35 = arith.addf %32, %34 : vector<128x128xf32>
    %36 = math.tanh %35 : vector<128x128xf32>
    %c0_32 = arith.constant 0 : index
    %c0_33 = arith.constant 0 : index
    %37 = vector.load %arg8[%c0_32, %c0_33] : memref<128x128xf32, #tpu.memory_space<vmem>>, vector<128x128xf32>
    %cst_34 = arith.constant dense<0.000000e+00> : vector<128x128xf32>
    %38 = tpu.matmul %36, %37, %cst_34 {dimension_numbers = #tpu.dot_dimension_numbers<[1], [0], [0], [1], [0, 0, 1, 1], [], []>} : vector<128x128xf32>, vector<128x128xf32>, vector<128x128xf32> -> vector<128x128xf32>
    %c0_35 = arith.constant 0 : index
    %c0_36 = arith.constant 0 : index
    %39 = vector.load %arg16[%c0_35, %c0_36] : memref<1x128xf32, #tpu.memory_space<vmem>>, vector<1x128xf32>
    %40 = vector.broadcast %39 : vector<1x128xf32> to vector<128x128xf32>
    %41 = arith.addf %38, %40 : vector<128x128xf32>
    %42 = math.tanh %41 : vector<128x128xf32>
    %c0_37 = arith.constant 0 : index
    %c0_38 = arith.constant 0 : index
    %43 = vector.load %arg9[%c0_37, %c0_38] : memref<128x896xf32, #tpu.memory_space<vmem>>, vector<128x896xf32>
    %cst_39 = arith.constant dense<0.000000e+00> : vector<128x896xf32>
    %44 = tpu.matmul %42, %43, %cst_39 {dimension_numbers = #tpu.dot_dimension_numbers<[1], [0], [0], [1], [0, 0, 1, 1], [], []>} : vector<128x128xf32>, vector<128x896xf32>, vector<128x896xf32> -> vector<128x896xf32>
    %c0_40 = arith.constant 0 : index
    %c0_41 = arith.constant 0 : index
    %45 = vector.load %arg17[%c0_40, %c0_41] : memref<1x896xf32, #tpu.memory_space<vmem>>, vector<1x896xf32>
    %46 = vector.broadcast %45 : vector<1x896xf32> to vector<128x896xf32>
    %47 = arith.addf %44, %46 : vector<128x896xf32>
    %48 = arith.negf %47 : vector<128x896xf32>
    %49 = math.exp %48 : vector<128x896xf32>
    %cst_42 = arith.constant 1.000000e+00 : f32
    %50 = vector.broadcast %cst_42 : f32 to vector<128x896xf32>
    %51 = arith.addf %50, %49 : vector<128x896xf32>
    %52 = arith.divf %50, %51 : vector<128x896xf32>
    %c0_43 = arith.constant 0 : index
    %c0_44 = arith.constant 0 : index
    %53 = vector.load %arg19[%c0_43, %c0_44] : memref<128x896xf32, #tpu.memory_space<vmem>>, vector<128x896xf32>
    tpu.vector_store %arg19[%c0_43, %c0_44], %52 {strides = array<i32>} : memref<128x896xf32, #tpu.memory_space<vmem>>, vector<128x896xf32>,
    return
  }
  func.func @transform_0(%arg0: i32) -> (i32, i32) {
    %c0_i32 = arith.constant 0 : i32
    %c0_i32_0 = arith.constant 0 : i32
    return %arg0, %c0_i32 : i32, i32
  }
  func.func @transform_1(%arg0: i32) -> (i32, i32) {
    %c0_i32 = arith.constant 0 : i32
    %c0_i32_0 = arith.constant 0 : i32
    %c0_i32_1 = arith.constant 0 : i32
    return %c0_i32, %c0_i32_0 : i32, i32
  }
  func.func @transform_2(%arg0: i32) -> (i32, i32) {
    %c0_i32 = arith.constant 0 : i32
    %c0_i32_0 = arith.constant 0 : i32
    %c0_i32_1 = arith.constant 0 : i32
    return %c0_i32, %c0_i32_0 : i32, i32
  }
  func.func @transform_3(%arg0: i32) -> (i32, i32) {
    %c0_i32 = arith.constant 0 : i32
    %c0_i32_0 = arith.constant 0 : i32
    %c0_i32_1 = arith.constant 0 : i32
    return %c0_i32, %c0_i32_0 : i32, i32
  }
  func.func @transform_4(%arg0: i32) -> (i32, i32) {
    %c0_i32 = arith.constant 0 : i32
    %c0_i32_0 = arith.constant 0 : i32
    %c0_i32_1 = arith.constant 0 : i32
    return %c0_i32, %c0_i32_0 : i32, i32
  }
  func.func @transform_5(%arg0: i32) -> (i32, i32) {
    %c0_i32 = arith.constant 0 : i32
    %c0_i32_0 = arith.constant 0 : i32
    %c0_i32_1 = arith.constant 0 : i32
    return %c0_i32, %c0_i32_0 : i32, i32
  }
  func.func @transform_6(%arg0: i32) -> (i32, i32) {
    %c0_i32 = arith.constant 0 : i32
    %c0_i32_0 = arith.constant 0 : i32
    %c0_i32_1 = arith.constant 0 : i32
    return %c0_i32, %c0_i32_0 : i32, i32
  }
  func.func @transform_7(%arg0: i32) -> (i32, i32) {
    %c0_i32 = arith.constant 0 : i32
    %c0_i32_0 = arith.constant 0 : i32
    %c0_i32_1 = arith.constant 0 : i32
    return %c0_i32, %c0_i32_0 : i32, i32
  }
  func.func @transform_8(%arg0: i32) -> (i32, i32) {
    %c0_i32 = arith.constant 0 : i32
    %c0_i32_0 = arith.constant 0 : i32
    %c0_i32_1 = arith.constant 0 : i32
    return %c0_i32, %c0_i32_0 : i32, i32
  }
  func.func @transform_9(%arg0: i32) -> (i32, i32) {
    %c0_i32 = arith.constant 0 : i32
    %c0_i32_0 = arith.constant 0 : i32
    %c0_i32_1 = arith.constant 0 : i32
    return %c0_i32, %c0_i32_0 : i32, i32
  }
  func.func @transform_10(%arg0: i32) -> (i32, i32) {
    %c0_i32 = arith.constant 0 : i32
    %c0_i32_0 = arith.constant 0 : i32
    %c0_i32_1 = arith.constant 0 : i32
    return %c0_i32, %c0_i32_0 : i32, i32
  }
  func.func @transform_11(%arg0: i32) -> (i32, i32) {
    %c0_i32 = arith.constant 0 : i32
    %c0_i32_0 = arith.constant 0 : i32
    %c0_i32_1 = arith.constant 0 : i32
    return %c0_i32, %c0_i32_0 : i32, i32
  }
  func.func @transform_12(%arg0: i32) -> (i32, i32) {
    %c0_i32 = arith.constant 0 : i32
    %c0_i32_0 = arith.constant 0 : i32
    %c0_i32_1 = arith.constant 0 : i32
    return %c0_i32, %c0_i32_0 : i32, i32
  }
  func.func @transform_13(%arg0: i32) -> (i32, i32) {
    %c0_i32 = arith.constant 0 : i32
    %c0_i32_0 = arith.constant 0 : i32
    %c0_i32_1 = arith.constant 0 : i32
    return %c0_i32, %c0_i32_0 : i32, i32
  }
  func.func @transform_14(%arg0: i32) -> (i32, i32) {
    %c0_i32 = arith.constant 0 : i32
    %c0_i32_0 = arith.constant 0 : i32
    %c0_i32_1 = arith.constant 0 : i32
    return %c0_i32, %c0_i32_0 : i32, i32
  }
  func.func @transform_15(%arg0: i32) -> (i32, i32) {
    %c0_i32 = arith.constant 0 : i32
    %c0_i32_0 = arith.constant 0 : i32
    %c0_i32_1 = arith.constant 0 : i32
    return %c0_i32, %c0_i32_0 : i32, i32
  }
  func.func @transform_16(%arg0: i32) -> (i32, i32) {
    %c0_i32 = arith.constant 0 : i32
    %c0_i32_0 = arith.constant 0 : i32
    %c0_i32_1 = arith.constant 0 : i32
    return %c0_i32, %c0_i32_0 : i32, i32
  }
  func.func @transform_17(%arg0: i32) -> (i32, i32) {
    %c0_i32 = arith.constant 0 : i32
    %c0_i32_0 = arith.constant 0 : i32
    return %arg0, %c0_i32 : i32, i32
  }
  func.func @transform_18(%arg0: i32) -> (i32, i32) {
    %c0_i32 = arith.constant 0 : i32
    %c0_i32_0 = arith.constant 0 : i32
    return %arg0, %c0_i32 : i32, i32
  }
}

</mosaic_0001>

<llo_original>
// kernel: autoencoder_forward.1
$region0: #{autoencoder_forward.1}
  #allocation0 [shape = 'u32[]', space=smem, size = 0x4, offset = 0x4, fixed_abs, tag = 'smem constant byte address 0x4 - core index']
  #allocation1 [shape = 'u32[144,128]{1,0:T(1,128)}', space=vmem, size = 0x12000, scoped, tag = 'internal scratch']
  %s0 = inlined_call_operand.vmem [shape: f32[256,784], index: 0, kind: input, shape index: {}]
  %s1 = inlined_call_operand.vmem [shape: f32[784,128], index: 1, kind: input, shape index: {}]
  %s2 = inlined_call_operand.vmem [shape: f32[128,128], index: 2, kind: input, shape index: {}]
  %s3 = inlined_call_operand.vmem [shape: f32[128,128], index: 3, kind: input, shape index: {}]
  %s4 = inlined_call_operand.vmem [shape: f32[128,128], index: 4, kind: input, shape index: {}]
  %s5 = inlined_call_operand.vmem [shape: f32[128,128], index: 5, kind: input, shape index: {}]
  %s6 = inlined_call_operand.vmem [shape: f32[128,128], index: 6, kind: input, shape index: {}]
  %s7 = inlined_call_operand.vmem [shape: f32[128,128], index: 7, kind: input, shape index: {}]
  %s8 = inlined_call_operand.vmem [shape: f32[128,896], index: 8, kind: input, shape index: {}]
  %s9 = inlined_call_operand.vmem [shape: f32[1,128], index: 9, kind: input, shape index: {}]
  %s10 = inlined_call_operand.vmem [shape: f32[1,128], index: 10, kind: input, shape index: {}]
  %s11 = inlined_call_operand.vmem [shape: f32[1,128], index: 11, kind: input, shape index: {}]
  %s12 = inlined_call_operand.vmem [shape: f32[1,128], index: 12, kind: input, shape index: {}]
  %s13 = inlined_call_operand.vmem [shape: f32[1,128], index: 13, kind: input, shape index: {}]
  %s14 = inlined_call_operand.vmem [shape: f32[1,128], index: 14, kind: input, shape index: {}]
  %s15 = inlined_call_operand.vmem [shape: f32[1,128], index: 15, kind: input, shape index: {}]
  %s16 = inlined_call_operand.vmem [shape: f32[1,896], index: 16, kind: input, shape index: {}]
  %s17 = inlined_call_operand.vmem [shape: f32[256,128], index: 17, kind: output, shape index: {0}]
  %s18 = inlined_call_operand.vmem [shape: f32[256,896], index: 18, kind: output, shape index: {1}]
  %19 = xla_tuple %s17, %s18
  %s20 = sld [smem:[#allocation0]]
  $region109: #{autoencoder_forward.1} parent=0
    _
  %s22 = ssub.s32 1, %s20
  %s23 = scalar_select 0, %s22, %s20
  loop: start=0, step=1, limit=4
  $region2: #{autoencoder_forward.1} parent=0 // loop_pre_header
    _
  $region3: #{autoencoder_forward.1} parent=0 // loop_header
    %s25 = sphi 0, %s29
    %p26 = scmp.ge.s32.totalorder %s25, 4
    %s35 = sphi 0, %s37
    %s38 = sphi 0, %s35
    %s39 = sphi 0, %s38
    %s55 = sphi 0, %s39
    %s59 = sphi 0, %s59
    %s61 = sphi 0, %s59
    %s62 = sphi 0, %s61
    %s76 = sphi 0, %s62
    %s80 = sphi 0, %s80
    %s82 = sphi 0, %s80
    %s83 = sphi 0, %s82
    %s97 = sphi 0, %s83
    %s101 = sphi 0, %s101
    %s103 = sphi 0, %s101
    %s104 = sphi 0, %s103
    %s118 = sphi 0, %s104
    %s122 = sphi 0, %s122
    %s124 = sphi 0, %s122
    %s125 = sphi 0, %s124
    %s139 = sphi 0, %s125
    %s143 = sphi 0, %s143
    %s145 = sphi 0, %s143
    %s146 = sphi 0, %s145
    %s160 = sphi 0, %s146
    %s164 = sphi 0, %s164
    %s166 = sphi 0, %s164
    %s167 = sphi 0, %s166
    %s181 = sphi 0, %s167
    %s185 = sphi 0, %s185
    %s187 = sphi 0, %s185
    %s188 = sphi 0, %s187
    %s202 = sphi 0, %s188
    %s206 = sphi 0, %s206
    %s208 = sphi 0, %s206
    %s209 = sphi 0, %s208
    %s223 = sphi 0, %s209
    %s227 = sphi 0, %s227
    %s229 = sphi 0, %s227
    %s230 = sphi 0, %s229
    %s244 = sphi 0, %s230
    %s248 = sphi 0, %s248
    %s250 = sphi 0, %s248
    %s251 = sphi 0, %s250
    %s265 = sphi 0, %s251
    %s269 = sphi 0, %s269
    %s271 = sphi 0, %s269
    %s272 = sphi 0, %s271
    %s286 = sphi 0, %s272
    %s290 = sphi 0, %s290
    %s292 = sphi 0, %s290
    %s293 = sphi 0, %s292
    %s307 = sphi 0, %s293
    %s311 = sphi 0, %s311
    %s313 = sphi 0, %s311
    %s314 = sphi 0, %s313
    %s328 = sphi 0, %s314
    %s332 = sphi 0, %s332
    %s334 = sphi 0, %s332
    %s335 = sphi 0, %s334
    %s349 = sphi 0, %s335
    %s353 = sphi 0, %s353
    %s355 = sphi 0, %s353
    %s356 = sphi 0, %s355
    %s370 = sphi 0, %s356
    %s374 = sphi 0, %s374
    %s376 = sphi 0, %s374
    %s377 = sphi 0, %s376
    %s391 = sphi 0, %s377
    %s397 = sphi 0, %s399
    %s400 = sphi 0, %s397
    %s401 = sphi 0, %s400
    %s417 = sphi 0, %s401
    %s423 = sphi 0, %s425
    %s426 = sphi 0, %s423
    %s427 = sphi 0, %s426
    %s443 = sphi 0, %s427
  $region4: #{autoencoder_forward.1} parent=0 // loop_header_branch
    %28 = sbr.rel (%p26) target = $region8
  $region5: #{autoencoder_forward.1} parent=0 // loop_body
    %s30 = ssub.s32 %s25, 1
    %s31 = ssub.s32 %s25, 2
    %s32 = sadd.s32 %s25, 1
    %s33 = ssub.s32 %s25, %s32
    %p34 = scmp.eq.s32.totalorder %s33, 0
    %s36 = sadd.s32 %s35, 1
    %s37 = scalar_select %p34, %s35, %s36
    %p40 = pneg %p34
    %p41 = scmp.eq.s32.totalorder %s25, 1
    %p42 = por %p40, %p41
    %p43 = scmp.ne.s32.totalorder %s35, %s38
    %p44 = scmp.eq.s32.totalorder %s25, 0
    %p45 = por %p43, %p44
    %p46 = scmp.ne.s32.totalorder %s35, %s38
    %p47 = scmp.eq.s32.totalorder %s30, 1
    %p48 = por %p46, %p47
    %p49 = scmp.ne.s32.totalorder %s38, %s39
    %p50 = scmp.eq.s32.totalorder %s30, 0
    %p51 = por %p49, %p50
    %p52 = scmp.ne.s32.totalorder %s38, %s39
    %p53 = scmp.eq.s32.totalorder %s31, 1
    %p54 = por %p52, %p53
    %p56 = scmp.ne.s32.totalorder %s39, %s55
    %p57 = scmp.eq.s32.totalorder %s31, 0
    %p58 = por %p56, %p57
    %s60 = sadd.s32 %s59, 1
    %p63 = scmp.eq.s32.totalorder %s25, 1
    %p64 = scmp.ne.s32.totalorder %s59, %s61
    %p65 = scmp.eq.s32.totalorder %s25, 0
    %p66 = por %p64, %p65
    %p67 = scmp.ne.s32.totalorder %s59, %s61
    %p68 = scmp.eq.s32.totalorder %s30, 1
    %p69 = por %p67, %p68
    %p70 = scmp.ne.s32.totalorder %s61, %s62
    %p71 = scmp.eq.s32.totalorder %s30, 0
    %p72 = por %p70, %p71
    %p73 = scmp.ne.s32.totalorder %s61, %s62
    %p74 = scmp.eq.s32.totalorder %s31, 1
    %p75 = por %p73, %p74
    %p77 = scmp.ne.s32.totalorder %s62, %s76
    %p78 = scmp.eq.s32.totalorder %s31, 0
    %p79 = por %p77, %p78
    %s81 = sadd.s32 %s80, 1
    %p84 = scmp.eq.s32.totalorder %s25, 1
    %p85 = scmp.ne.s32.totalorder %s80, %s82
    %p86 = scmp.eq.s32.totalorder %s25, 0
    %p87 = por %p85, %p86
    %p88 = scmp.ne.s32.totalorder %s80, %s82
    %p89 = scmp.eq.s32.totalorder %s30, 1
    %p90 = por %p88, %p89
    %p91 = scmp.ne.s32.totalorder %s82, %s83
    %p92 = scmp.eq.s32.totalorder %s30, 0
    %p93 = por %p91, %p92
    %p94 = scmp.ne.s32.totalorder %s82, %s83
    %p95 = scmp.eq.s32.totalorder %s31, 1
    %p96 = por %p94, %p95
    %p98 = scmp.ne.s32.totalorder %s83, %s97
    %p99 = scmp.eq.s32.totalorder %s31, 0
    %p100 = por %p98, %p99
    %s102 = sadd.s32 %s101, 1
    %p105 = scmp.eq.s32.totalorder %s25, 1
    %p106 = scmp.ne.s32.totalorder %s101, %s103
    %p107 = scmp.eq.s32.totalorder %s25, 0
    %p108 = por %p106, %p107
    %p109 = scmp.ne.s32.totalorder %s101, %s103
    %p110 = scmp.eq.s32.totalorder %s30, 1
    %p111 = por %p109, %p110
    %p112 = scmp.ne.s32.totalorder %s103, %s104
    %p113 = scmp.eq.s32.totalorder %s30, 0
    %p114 = por %p112, %p113
    %p115 = scmp.ne.s32.totalorder %s103, %s104
    %p116 = scmp.eq.s32.totalorder %s31, 1
    %p117 = por %p115, %p116
    %p119 = scmp.ne.s32.totalorder %s104, %s118
    %p120 = scmp.eq.s32.totalorder %s31, 0
    %p121 = por %p119, %p120
    %s123 = sadd.s32 %s122, 1
    %p126 = scmp.eq.s32.totalorder %s25, 1
    %p127 = scmp.ne.s32.totalorder %s122, %s124
    %p128 = scmp.eq.s32.totalorder %s25, 0
    %p129 = por %p127, %p128
    %p130 = scmp.ne.s32.totalorder %s122, %s124
    %p131 = scmp.eq.s32.totalorder %s30, 1
    %p132 = por %p130, %p131
    %p133 = scmp.ne.s32.totalorder %s124, %s125
    %p134 = scmp.eq.s32.totalorder %s30, 0
    %p135 = por %p133, %p134
    %p136 = scmp.ne.s32.totalorder %s124, %s125
    %p137 = scmp.eq.s32.totalorder %s31, 1
    %p138 = por %p136, %p137
    %p140 = scmp.ne.s32.totalorder %s125, %s139
    %p141 = scmp.eq.s32.totalorder %s31, 0
    %p142 = por %p140, %p141
    %s144 = sadd.s32 %s143, 1
    %p147 = scmp.eq.s32.totalorder %s25, 1
    %p148 = scmp.ne.s32.totalorder %s143, %s145
    %p149 = scmp.eq.s32.totalorder %s25, 0
    %p150 = por %p148, %p149
    %p151 = scmp.ne.s32.totalorder %s143, %s145
    %p152 = scmp.eq.s32.totalorder %s30, 1
    %p153 = por %p151, %p152
    %p154 = scmp.ne.s32.totalorder %s145, %s146
    %p155 = scmp.eq.s32.totalorder %s30, 0
    %p156 = por %p154, %p155
    %p157 = scmp.ne.s32.totalorder %s145, %s146
    %p158 = scmp.eq.s32.totalorder %s31, 1
    %p159 = por %p157, %p158
    %p161 = scmp.ne.s32.totalorder %s146, %s160
    %p162 = scmp.eq.s32.totalorder %s31, 0
    %p163 = por %p161, %p162
    %s165 = sadd.s32 %s164, 1
    %p168 = scmp.eq.s32.totalorder %s25, 1
    %p169 = scmp.ne.s32.totalorder %s164, %s166
    %p170 = scmp.eq.s32.totalorder %s25, 0
    %p171 = por %p169, %p170
    %p172 = scmp.ne.s32.totalorder %s164, %s166
    %p173 = scmp.eq.s32.totalorder %s30, 1
    %p174 = por %p172, %p173
    %p175 = scmp.ne.s32.totalorder %s166, %s167
    %p176 = scmp.eq.s32.totalorder %s30, 0
    %p177 = por %p175, %p176
    %p178 = scmp.ne.s32.totalorder %s166, %s167
    %p179 = scmp.eq.s32.totalorder %s31, 1
    %p180 = por %p178, %p179
    %p182 = scmp.ne.s32.totalorder %s167, %s181
    %p183 = scmp.eq.s32.totalorder %s31, 0
    %p184 = por %p182, %p183
    %s186 = sadd.s32 %s185, 1
    %p189 = scmp.eq.s32.totalorder %s25, 1
    %p190 = scmp.ne.s32.totalorder %s185, %s187
    %p191 = scmp.eq.s32.totalorder %s25, 0
    %p192 = por %p190, %p191
    %p193 = scmp.ne.s32.totalorder %s185, %s187
    %p194 = scmp.eq.s32.totalorder %s30, 1
    %p195 = por %p193, %p194
    %p196 = scmp.ne.s32.totalorder %s187, %s188
    %p197 = scmp.eq.s32.totalorder %s30, 0
    %p198 = por %p196, %p197
    %p199 = scmp.ne.s32.totalorder %s187, %s188
    %p200 = scmp.eq.s32.totalorder %s31, 1
    %p201 = por %p199, %p200
    %p203 = scmp.ne.s32.totalorder %s188, %s202
    %p204 = scmp.eq.s32.totalorder %s31, 0
    %p205 = por %p203, %p204
    %s207 = sadd.s32 %s206, 1
    %p210 = scmp.eq.s32.totalorder %s25, 1
    %p211 = scmp.ne.s32.totalorder %s206, %s208
    %p212 = scmp.eq.s32.totalorder %s25, 0
    %p213 = por %p211, %p212
    %p214 = scmp.ne.s32.totalorder %s206, %s208
    %p215 = scmp.eq.s32.totalorder %s30, 1
    %p216 = por %p214, %p215
    %p217 = scmp.ne.s32.totalorder %s208, %s209
    %p218 = scmp.eq.s32.totalorder %s30, 0
    %p219 = por %p217, %p218
    %p220 = scmp.ne.s32.totalorder %s208, %s209
    %p221 = scmp.eq.s32.totalorder %s31, 1
    %p222 = por %p220, %p221
    %p224 = scmp.ne.s32.totalorder %s209, %s223
    %p225 = scmp.eq.s32.totalorder %s31, 0
    %p226 = por %p224, %p225
    %s228 = sadd.s32 %s227, 1
    %p231 = scmp.eq.s32.totalorder %s25, 1
    %p232 = scmp.ne.s32.totalorder %s227, %s229
    %p233 = scmp.eq.s32.totalorder %s25, 0
    %p234 = por %p232, %p233
    %p235 = scmp.ne.s32.totalorder %s227, %s229
    %p236 = scmp.eq.s32.totalorder %s30, 1
    %p237 = por %p235, %p236
    %p238 = scmp.ne.s32.totalorder %s229, %s230
    %p239 = scmp.eq.s32.totalorder %s30, 0
    %p240 = por %p238, %p239
    %p241 = scmp.ne.s32.totalorder %s229, %s230
    %p242 = scmp.eq.s32.totalorder %s31, 1
    %p243 = por %p241, %p242
    %p245 = scmp.ne.s32.totalorder %s230, %s244
    %p246 = scmp.eq.s32.totalorder %s31, 0
    %p247 = por %p245, %p246
    %s249 = sadd.s32 %s248, 1
    %p252 = scmp.eq.s32.totalorder %s25, 1
    %p253 = scmp.ne.s32.totalorder %s248, %s250
    %p254 = scmp.eq.s32.totalorder %s25, 0
    %p255 = por %p253, %p254
    %p256 = scmp.ne.s32.totalorder %s248, %s250
    %p257 = scmp.eq.s32.totalorder %s30, 1
    %p258 = por %p256, %p257
    %p259 = scmp.ne.s32.totalorder %s250, %s251
    %p260 = scmp.eq.s32.totalorder %s30, 0
    %p261 = por %p259, %p260
    %p262 = scmp.ne.s32.totalorder %s250, %s251
    %p263 = scmp.eq.s32.totalorder %s31, 1
    %p264 = por %p262, %p263
    %p266 = scmp.ne.s32.totalorder %s251, %s265
    %p267 = scmp.eq.s32.totalorder %s31, 0
    %p268 = por %p266, %p267
    %s270 = sadd.s32 %s269, 1
    %p273 = scmp.eq.s32.totalorder %s25, 1
    %p274 = scmp.ne.s32.totalorder %s269, %s271
    %p275 = scmp.eq.s32.totalorder %s25, 0
    %p276 = por %p274, %p275
    %p277 = scmp.ne.s32.totalorder %s269, %s271
    %p278 = scmp.eq.s32.totalorder %s30, 1
    %p279 = por %p277, %p278
    %p280 = scmp.ne.s32.totalorder %s271, %s272
    %p281 = scmp.eq.s32.totalorder %s30, 0
    %p282 = por %p280, %p281
    %p283 = scmp.ne.s32.totalorder %s271, %s272
    %p284 = scmp.eq.s32.totalorder %s31, 1
    %p285 = por %p283, %p284
    %p287 = scmp.ne.s32.totalorder %s272, %s286
    %p288 = scmp.eq.s32.totalorder %s31, 0
    %p289 = por %p287, %p288
    %s291 = sadd.s32 %s290, 1
    %p294 = scmp.eq.s32.totalorder %s25, 1
    %p295 = scmp.ne.s32.totalorder %s290, %s292
    %p296 = scmp.eq.s32.totalorder %s25, 0
    %p297 = por %p295, %p296
    %p298 = scmp.ne.s32.totalorder %s290, %s292
    %p299 = scmp.eq.s32.totalorder %s30, 1
    %p300 = por %p298, %p299
    %p301 = scmp.ne.s32.totalorder %s292, %s293
    %p302 = scmp.eq.s32.totalorder %s30, 0
    %p303 = por %p301, %p302
    %p304 = scmp.ne.s32.totalorder %s292, %s293
    %p305 = scmp.eq.s32.totalorder %s31, 1
    %p306 = por %p304, %p305
    %p308 = scmp.ne.s32.totalorder %s293, %s307
    %p309 = scmp.eq.s32.totalorder %s31, 0
    %p310 = por %p308, %p309
    %s312 = sadd.s32 %s311, 1
    %p315 = scmp.eq.s32.totalorder %s25, 1
    %p316 = scmp.ne.s32.totalorder %s311, %s313
    %p317 = scmp.eq.s32.totalorder %s25, 0
    %p318 = por %p316, %p317
    %p319 = scmp.ne.s32.totalorder %s311, %s313
    %p320 = scmp.eq.s32.totalorder %s30, 1
    %p321 = por %p319, %p320
    %p322 = scmp.ne.s32.totalorder %s313, %s314
    %p323 = scmp.eq.s32.totalorder %s30, 0
    %p324 = por %p322, %p323
    %p325 = scmp.ne.s32.totalorder %s313, %s314
    %p326 = scmp.eq.s32.totalorder %s31, 1
    %p327 = por %p325, %p326
    %p329 = scmp.ne.s32.totalorder %s314, %s328
    %p330 = scmp.eq.s32.totalorder %s31, 0
    %p331 = por %p329, %p330
    %s333 = sadd.s32 %s332, 1
    %p336 = scmp.eq.s32.totalorder %s25, 1
    %p337 = scmp.ne.s32.totalorder %s332, %s334
    %p338 = scmp.eq.s32.totalorder %s25, 0
    %p339 = por %p337, %p338
    %p340 = scmp.ne.s32.totalorder %s332, %s334
    %p341 = scmp.eq.s32.totalorder %s30, 1
    %p342 = por %p340, %p341
    %p343 = scmp.ne.s32.totalorder %s334, %s335
    %p344 = scmp.eq.s32.totalorder %s30, 0
    %p345 = por %p343, %p344
    %p346 = scmp.ne.s32.totalorder %s334, %s335
    %p347 = scmp.eq.s32.totalorder %s31, 1
    %p348 = por %p346, %p347
    %p350 = scmp.ne.s32.totalorder %s335, %s349
    %p351 = scmp.eq.s32.totalorder %s31, 0
    %p352 = por %p350, %p351
    %s354 = sadd.s32 %s353, 1
    %p357 = scmp.eq.s32.totalorder %s25, 1
    %p358 = scmp.ne.s32.totalorder %s353, %s355
    %p359 = scmp.eq.s32.totalorder %s25, 0
    %p360 = por %p358, %p359
    %p361 = scmp.ne.s32.totalorder %s353, %s355
    %p362 = scmp.eq.s32.totalorder %s30, 1
    %p363 = por %p361, %p362
    %p364 = scmp.ne.s32.totalorder %s355, %s356
    %p365 = scmp.eq.s32.totalorder %s30, 0
    %p366 = por %p364, %p365
    %p367 = scmp.ne.s32.totalorder %s355, %s356
    %p368 = scmp.eq.s32.totalorder %s31, 1
    %p369 = por %p367, %p368
    %p371 = scmp.ne.s32.totalorder %s356, %s370
    %p372 = scmp.eq.s32.totalorder %s31, 0
    %p373 = por %p371, %p372
    %s375 = sadd.s32 %s374, 1
    %p378 = scmp.eq.s32.totalorder %s25, 1
    %p379 = scmp.ne.s32.totalorder %s374, %s376
    %p380 = scmp.eq.s32.totalorder %s25, 0
    %p381 = por %p379, %p380
    %p382 = scmp.ne.s32.totalorder %s374, %s376
    %p383 = scmp.eq.s32.totalorder %s30, 1
    %p384 = por %p382, %p383
    %p385 = scmp.ne.s32.totalorder %s376, %s377
    %p386 = scmp.eq.s32.totalorder %s30, 0
    %p387 = por %p385, %p386
    %p388 = scmp.ne.s32.totalorder %s376, %s377
    %p389 = scmp.eq.s32.totalorder %s31, 1
    %p390 = por %p388, %p389
    %p392 = scmp.ne.s32.totalorder %s377, %s391
    %p393 = scmp.eq.s32.totalorder %s31, 0
    %p394 = por %p392, %p393
    %s395 = ssub.s32 %s25, %s32
    %p396 = scmp.eq.s32.totalorder %s395, 0
    %s398 = sadd.s32 %s397, 1
    %s399 = scalar_select %p396, %s397, %s398
    %p402 = pneg %p396
    %p403 = scmp.eq.s32.totalorder %s25, 1
    %p404 = por %p402, %p403
    %p405 = scmp.ne.s32.totalorder %s397, %s400
    %p406 = scmp.eq.s32.totalorder %s25, 0
    %p407 = por %p405, %p406
    %p408 = scmp.ne.s32.totalorder %s397, %s400
    %p409 = scmp.eq.s32.totalorder %s30, 1
    %p410 = por %p408, %p409
    %p411 = scmp.ne.s32.totalorder %s400, %s401
    %p412 = scmp.eq.s32.totalorder %s30, 0
    %p413 = por %p411, %p412
    %p414 = scmp.ne.s32.totalorder %s400, %s401
    %p415 = scmp.eq.s32.totalorder %s31, 1
    %p416 = por %p414, %p415
    %p418 = scmp.ne.s32.totalorder %s401, %s417
    %p419 = scmp.eq.s32.totalorder %s31, 0
    %p420 = por %p418, %p419
    %s421 = ssub.s32 %s25, %s32
    %p422 = scmp.eq.s32.totalorder %s421, 0
    %s424 = sadd.s32 %s423, 1
    %s425 = scalar_select %p422, %s423, %s424
    %p428 = pneg %p422
    %p429 = scmp.eq.s32.totalorder %s25, 1
    %p430 = por %p428, %p429
    %p431 = scmp.ne.s32.totalorder %s423, %s426
    %p432 = scmp.eq.s32.totalorder %s25, 0
    %p433 = por %p431, %p432
    %p434 = scmp.ne.s32.totalorder %s423, %s426
    %p435 = scmp.eq.s32.totalorder %s30, 1
    %p436 = por %p434, %p435
    %p437 = scmp.ne.s32.totalorder %s426, %s427
    %p438 = scmp.eq.s32.totalorder %s30, 0
    %p439 = por %p437, %p438
    %p440 = scmp.ne.s32.totalorder %s426, %s427
    %p441 = scmp.eq.s32.totalorder %s31, 1
    %p442 = por %p440, %p441
    %p444 = scmp.ne.s32.totalorder %s427, %s443
    %p445 = scmp.eq.s32.totalorder %s31, 0
    %p446 = por %p444, %p445
    %p447 = scmp.le.s32.totalorder 1, %s25
    %p448 = scmp.lt.s32.totalorder %s25, 3
    %p449 = pnand %p447, %p448
    %p450 = pneg %p449
    // Predicated region
    $region9: #{autoencoder_forward.1} parent=5 // pred_check
      _
    $region10: #{autoencoder_forward.1} parent=5 // pred_check_branch
      %452 = sbr.rel (%p449) target = $region12
    $region11: #{autoencoder_forward.1} parent=5 // pred_region
      %s453 = ssub.s32 %s25, 1
      // Predicated region
      $region13: #{autoencoder_forward.1} parent=11 // pred_check
        %p454 = pneg %p72
      $region14: #{autoencoder_forward.1} parent=11 // pred_check_branch
        %456 = sbr.rel (%p454) target = $region16
      $region15: #{autoencoder_forward.1} parent=11 // pred_region
        _
      $region16: #{autoencoder_forward.1} parent=11 // pred_fallthru
        _
      // Predicated region
      $region17: #{autoencoder_forward.1} parent=11 // pred_check
        %p457 = pneg %p93
      $region18: #{autoencoder_forward.1} parent=11 // pred_check_branch
        %459 = sbr.rel (%p457) target = $region20
      $region19: #{autoencoder_forward.1} parent=11 // pred_region
        _
      $region20: #{autoencoder_forward.1} parent=11 // pred_fallthru
        _
      // Predicated region
      $region21: #{autoencoder_forward.1} parent=11 // pred_check
        %p460 = pneg %p114
      $region22: #{autoencoder_forward.1} parent=11 // pred_check_branch
        %462 = sbr.rel (%p460) target = $region24
      $region23: #{autoencoder_forward.1} parent=11 // pred_region
        _
      $region24: #{autoencoder_forward.1} parent=11 // pred_fallthru
        _
      // Predicated region
      $region25: #{autoencoder_forward.1} parent=11 // pred_check
        %p463 = pneg %p135
      $region26: #{autoencoder_forward.1} parent=11 // pred_check_branch
        %465 = sbr.rel (%p463) target = $region28
      $region27: #{autoencoder_forward.1} parent=11 // pred_region
        _
      $region28: #{autoencoder_forward.1} parent=11 // pred_fallthru
        _
      // Predicated region
      $region29: #{autoencoder_forward.1} parent=11 // pred_check
        %p466 = pneg %p156
      $region30: #{autoencoder_forward.1} parent=11 // pred_check_branch
        %468 = sbr.rel (%p466) target = $region32
      $region31: #{autoencoder_forward.1} parent=11 // pred_region
        _
      $region32: #{autoencoder_forward.1} parent=11 // pred_fallthru
        _
      // Predicated region
      $region33: #{autoencoder_forward.1} parent=11 // pred_check
        %p469 = pneg %p177
      $region34: #{autoencoder_forward.1} parent=11 // pred_check_branch
        %471 = sbr.rel (%p469) target = $region36
      $region35: #{autoencoder_forward.1} parent=11 // pred_region
        _
      $region36: #{autoencoder_forward.1} parent=11 // pred_fallthru
        _
      // Predicated region
      $region37: #{autoencoder_forward.1} parent=11 // pred_check
        %p472 = pneg %p198
      $region38: #{autoencoder_forward.1} parent=11 // pred_check_branch
        %474 = sbr.rel (%p472) target = $region40
      $region39: #{autoencoder_forward.1} parent=11 // pred_region
        _
      $region40: #{autoencoder_forward.1} parent=11 // pred_fallthru
        _
      // Predicated region
      $region41: #{autoencoder_forward.1} parent=11 // pred_check
        %p475 = pneg %p219
      $region42: #{autoencoder_forward.1} parent=11 // pred_check_branch
        %477 = sbr.rel (%p475) target = $region44
      $region43: #{autoencoder_forward.1} parent=11 // pred_region
        _
      $region44: #{autoencoder_forward.1} parent=11 // pred_fallthru
        _
      // Predicated region
      $region45: #{autoencoder_forward.1} parent=11 // pred_check
        %p478 = pneg %p240
      $region46: #{autoencoder_forward.1} parent=11 // pred_check_branch
        %480 = sbr.rel (%p478) target = $region48
      $region47: #{autoencoder_forward.1} parent=11 // pred_region
        _
      $region48: #{autoencoder_forward.1} parent=11 // pred_fallthru
        _
      // Predicated region
      $region49: #{autoencoder_forward.1} parent=11 // pred_check
        %p481 = pneg %p261
      $region50: #{autoencoder_forward.1} parent=11 // pred_check_branch
        %483 = sbr.rel (%p481) target = $region52
      $region51: #{autoencoder_forward.1} parent=11 // pred_region
        _
      $region52: #{autoencoder_forward.1} parent=11 // pred_fallthru
        _
      // Predicated region
      $region53: #{autoencoder_forward.1} parent=11 // pred_check
        %p484 = pneg %p282
      $region54: #{autoencoder_forward.1} parent=11 // pred_check_branch
        %486 = sbr.rel (%p484) target = $region56
      $region55: #{autoencoder_forward.1} parent=11 // pred_region
        _
      $region56: #{autoencoder_forward.1} parent=11 // pred_fallthru
        _
      // Predicated region
      $region57: #{autoencoder_forward.1} parent=11 // pred_check
        %p487 = pneg %p303
      $region58: #{autoencoder_forward.1} parent=11 // pred_check_branch
        %489 = sbr.rel (%p487) target = $region60
      $region59: #{autoencoder_forward.1} parent=11 // pred_region
        _
      $region60: #{autoencoder_forward.1} parent=11 // pred_fallthru
        _
      // Predicated region
      $region61: #{autoencoder_forward.1} parent=11 // pred_check
        %p490 = pneg %p324
      $region62: #{autoencoder_forward.1} parent=11 // pred_check_branch
        %492 = sbr.rel (%p490) target = $region64
      $region63: #{autoencoder_forward.1} parent=11 // pred_region
        _
      $region64: #{autoencoder_forward.1} parent=11 // pred_fallthru
        _
      // Predicated region
      $region65: #{autoencoder_forward.1} parent=11 // pred_check
        %p493 = pneg %p345
      $region66: #{autoencoder_forward.1} parent=11 // pred_check_branch
        %495 = sbr.rel (%p493) target = $region68
      $region67: #{autoencoder_forward.1} parent=11 // pred_region
        _
      $region68: #{autoencoder_forward.1} parent=11 // pred_fallthru
        _
      // Predicated region
      $region69: #{autoencoder_forward.1} parent=11 // pred_check
        %p496 = pneg %p366
      $region70: #{autoencoder_forward.1} parent=11 // pred_check_branch
        %498 = sbr.rel (%p496) target = $region72
      $region71: #{autoencoder_forward.1} parent=11 // pred_region
        _
      $region72: #{autoencoder_forward.1} parent=11 // pred_fallthru
        _
      // Predicated region
      $region73: #{autoencoder_forward.1} parent=11 // pred_check
        %p499 = pneg %p387
      $region74: #{autoencoder_forward.1} parent=11 // pred_check_branch
        %501 = sbr.rel (%p499) target = $region76
      $region75: #{autoencoder_forward.1} parent=11 // pred_region
        _
      $region76: #{autoencoder_forward.1} parent=11 // pred_fallthru
        _
    $region12: #{autoencoder_forward.1} parent=5 // pred_fallthru
      _
    %p502 = scmp.lt.s32.totalorder %s25, 2
    // Predicated region
    $region77: #{autoencoder_forward.1} parent=5 // pred_check
      %p503 = pneg %p502
    $region78: #{autoencoder_forward.1} parent=5 // pred_check_branch
      %505 = sbr.rel (%p503) target = $region80
    $region79: #{autoencoder_forward.1} parent=5 // pred_region
      // Predicated region
      $region81: #{autoencoder_forward.1} parent=79 // pred_check
        %p506 = pneg %p45
      $region82: #{autoencoder_forward.1} parent=79 // pred_check_branch
        %508 = sbr.rel (%p506) target = $region84
      $region83: #{autoencoder_forward.1} parent=79 // pred_region
        %s509 = smul.u32 16, %s25
        %p510 = scmp.lt.s32.totalorder %s509, 31
        %s511 = scalar_select %p510, %s509, 31
        %s512 = smul.addr %s511, 7
        %s513 = smul.addr %s512, 8
        %s514 = scalar_lea.vmem %s0, %s513
        %s515 = smul.u32 16, %s25
      $region84: #{autoencoder_forward.1} parent=79 // pred_fallthru
        _
    $region80: #{autoencoder_forward.1} parent=5 // pred_fallthru
      _
    %p516 = scmp.le.s32.totalorder 1, %s25
    %p517 = scmp.lt.s32.totalorder %s25, 3
    %p518 = pnand %p516, %p517
    %p519 = pneg %p518
    // Predicated region
    $region85: #{autoencoder_forward.1} parent=5 // pred_check
      _
    $region86: #{autoencoder_forward.1} parent=5 // pred_check_branch
      %521 = sbr.rel (%p518) target = $region88
    $region87: #{autoencoder_forward.1} parent=5 // pred_region
      %s522 = ssub.s32 %s25, 1
      %s523 = smul.u32 16, %s30
      %p524 = scmp.lt.s32.totalorder %s523, 31
      %s525 = scalar_select %p524, %s523, 31
      %s526 = smul.addr %s525, 7
      %s527 = smul.addr %s526, 8
      %s528 = scalar_lea.vmem %s0, %s527
      %p529 = pneg %p51
      %p530 = pneg %p48
      %p531 = pneg %p72
      %p532 = pneg %p69
      %p533 = pneg %p93
      %p534 = pneg %p90
      %p535 = pneg %p114
      %p536 = pneg %p111
      %p537 = pneg %p135
      %p538 = pneg %p132
      %p539 = pneg %p156
      %p540 = pneg %p153
      %p541 = pneg %p177
      %p542 = pneg %p174
      %p543 = pneg %p198
      %p544 = pneg %p195
      %p545 = pneg %p219
      %p546 = pneg %p216
      %p547 = pneg %p240
      %p548 = pneg %p237
      %p549 = pneg %p261
      %p550 = pneg %p258
      %p551 = pneg %p282
      %p552 = pneg %p279
      %p553 = pneg %p303
      %p554 = pneg %p300
      %p555 = pneg %p324
      %p556 = pneg %p321
      %p557 = pneg %p345
      %p558 = pneg %p342
      %p559 = pneg %p366
      %p560 = pneg %p363
      %p561 = pneg %p387
      %p562 = pneg %p384
      %p563 = pneg %p413
      %p564 = pneg %p410
      %s565 = smul.u32 16, %s30
      %p566 = scmp.lt.s32.totalorder %s565, 31
      %s567 = scalar_select %p566, %s565, 31
      %s568 = smul.addr %s567, 8
      %s569 = scalar_lea.vmem %s17, %s568
      %p570 = pneg %p439
      %p571 = pneg %p436
      %s572 = smul.u32 16, %s30
      %p573 = scmp.lt.s32.totalorder %s572, 31
      %s574 = scalar_select %p573, %s572, 31
      %s575 = smul.addr %s574, 7
      %s576 = smul.addr %s575, 8
      %s577 = scalar_lea.vmem %s18, %s576
      %s578 = smul.u32 16, %s30
      %p579 = scmp.lt.s32.totalorder %s578, 31
      %s580 = scalar_select %p579, %s578, 31
      %s581 = smul.addr %s580, 7
      %s582 = smul.addr %s581, 8
      %s583 = scalar_lea.vmem %s0, %s582
      %s584 = smul.u32 16, %s30
      %s585 = smul.u32 16, %s30
      %p586 = scmp.lt.s32.totalorder %s585, 31
      %s587 = scalar_select %p586, %s585, 31
      %s588 = smul.addr %s587, 8
      %s589 = scalar_lea.vmem %s17, %s588
      %s590 = smul.u32 16, %s30
      %s591 = smul.u32 16, %s30
      %p592 = scmp.lt.s32.totalorder %s591, 31
      %s593 = scalar_select %p592, %s591, 31
      %s594 = smul.addr %s593, 7
      %s595 = smul.addr %s594, 8
      %s596 = scalar_lea.vmem %s18, %s595
      %s597 = smul.u32 16, %s30
      %v598 = vld [vmem:[%s583] sm:$0xff]
      %v599 = vld [vmem:[%s583 + $0x8] sm:$0xff]
      %v600 = vld [vmem:[%s583 + $0x10] sm:$0xff]
      %v601 = vld [vmem:[%s583 + $0x18] sm:$0xff]
      %v602 = vld [vmem:[%s583 + $0x20] sm:$0xff]
      %v603 = vld [vmem:[%s583 + $0x28] sm:$0xff]
      %v604 = vld [vmem:[%s583 + $0x30] sm:$0xff]
      %v605 = vld [vmem:[%s583 + $0x38] sm:$0xff]
      %v606 = vld [vmem:[%s583 + $0x40] sm:$0xff]
      %v607 = vld [vmem:[%s583 + $0x48] sm:$0xff]
      %v608 = vld [vmem:[%s583 + $0x50] sm:$0xff]
      %v609 = vld [vmem:[%s583 + $0x58] sm:$0xff]
      %v610 = vld [vmem:[%s583 + $0x60] sm:$0xff]
      %v611 = vld [vmem:[%s583 + $0x68] sm:$0xff]
      %v612 = vld [vmem:[%s583 + $0x70] sm:$0xff]
      %v613 = vld [vmem:[%s583 + $0x78] sm:$0xff]
      %v614 = vld [vmem:[%s583 + $0x80] sm:$0xff]
      %v615 = vld [vmem:[%s583 + $0x88] sm:$0xff]
      %v616 = vld [vmem:[%s583 + $0x90] sm:$0xff]
      %v617 = vld [vmem:[%s583 + $0x98] sm:$0xff]
      %v618 = vld [vmem:[%s583 + $0xa0] sm:$0xff]
      %v619 = vld [vmem:[%s583 + $0xa8] sm:$0xff]
      %v620 = vld [vmem:[%s583 + $0xb0] sm:$0xff]
      %v621 = vld [vmem:[%s583 + $0xb8] sm:$0xff]
      %v622 = vld [vmem:[%s583 + $0xc0] sm:$0xff]
      %v623 = vld [vmem:[%s583 + $0xc8] sm:$0xff]
      %v624 = vld [vmem:[%s583 + $0xd0] sm:$0xff]
      %v625 = vld [vmem:[%s583 + $0xd8] sm:$0xff]
      %v626 = vld [vmem:[%s583 + $0xe0] sm:$0xff]
      %v627 = vld [vmem:[%s583 + $0xe8] sm:$0xff]
      %v628 = vld [vmem:[%s583 + $0xf0] sm:$0xff]
      %v629 = vld [vmem:[%s583 + $0xf8] sm:$0xff]
      %v630 = vld [vmem:[%s583 + $0x100] sm:$0xff]
      %v631 = vld [vmem:[%s583 + $0x108] sm:$0xff]
      %v632 = vld [vmem:[%s583 + $0x110] sm:$0xff]
      %v633 = vld [vmem:[%s583 + $0x118] sm:$0xff]
      %v634 = vld [vmem:[%s583 + $0x120] sm:$0xff]
      %v635 = vld [vmem:[%s583 + $0x128] sm:$0xff]
      %v636 = vld [vmem:[%s583 + $0x130] sm:$0xff]
      %v637 = vld [vmem:[%s583 + $0x138] sm:$0xff]
      %v638 = vld [vmem:[%s583 + $0x140] sm:$0xff]
      %v639 = vld [vmem:[%s583 + $0x148] sm:$0xff]
      %v640 = vld [vmem:[%s583 + $0x150] sm:$0xff]
      %v641 = vld [vmem:[%s583 + $0x158] sm:$0xff]
      %v642 = vld [vmem:[%s583 + $0x160] sm:$0xff]
      %v643 = vld [vmem:[%s583 + $0x168] sm:$0xff]
      %v644 = vld [vmem:[%s583 + $0x170] sm:$0xff]
      %v645 = vld [vmem:[%s583 + $0x178] sm:$0xff]
      %v646 = vld [vmem:[%s583 + $0x180] sm:$0xff]
      %v647 = vld [vmem:[%s583 + $0x188] sm:$0xff]
      %v648 = vld [vmem:[%s583 + $0x190] sm:$0xff]
      %v649 = vld [vmem:[%s583 + $0x198] sm:$0xff]
      %v650 = vld [vmem:[%s583 + $0x1a0] sm:$0xff]
      %v651 = vld [vmem:[%s583 + $0x1a8] sm:$0xff]
      %v652 = vld [vmem:[%s583 + $0x1b0] sm:$0xff]
      %v653 = vld [vmem:[%s583 + $0x1b8] sm:$0xff]
      %v654 = vld [vmem:[%s583 + $0x1c0] sm:$0xff]
      %v655 = vld [vmem:[%s583 + $0x1c8] sm:$0xff]
      %v656 = vld [vmem:[%s583 + $0x1d0] sm:$0xff]
      %v657 = vld [vmem:[%s583 + $0x1d8] sm:$0xff]
      %v658 = vld [vmem:[%s583 + $0x1e0] sm:$0xff]
      %v659 = vld [vmem:[%s583 + $0x1e8] sm:$0xff]
      %v660 = vld [vmem:[%s583 + $0x1f0] sm:$0xff]
      %v661 = vld [vmem:[%s583 + $0x1f8] sm:$0xff]
      %v662 = vld [vmem:[%s583 + $0x200] sm:$0xff]
      %v663 = vld [vmem:[%s583 + $0x208] sm:$0xff]
      %v664 = vld [vmem:[%s583 + $0x210] sm:$0xff]
      %v665 = vld [vmem:[%s583 + $0x218] sm:$0xff]
      %v666 = vld [vmem:[%s583 + $0x220] sm:$0xff]
      %v667 = vld [vmem:[%s583 + $0x228] sm:$0xff]
      %v668 = vld [vmem:[%s583 + $0x230] sm:$0xff]
      %v669 = vld [vmem:[%s583 + $0x238] sm:$0xff]
      %v670 = vld [vmem:[%s583 + $0x240] sm:$0xff]
      %v671 = vld [vmem:[%s583 + $0x248] sm:$0xff]
      %v672 = vld [vmem:[%s583 + $0x250] sm:$0xff]
      %v673 = vld [vmem:[%s583 + $0x258] sm:$0xff]
      %v674 = vld [vmem:[%s583 + $0x260] sm:$0xff]
      %v675 = vld [vmem:[%s583 + $0x268] sm:$0xff]
      %v676 = vld [vmem:[%s583 + $0x270] sm:$0xff]
      %v677 = vld [vmem:[%s583 + $0x278] sm:$0xff]
      %v678 = vld [vmem:[%s583 + $0x280] sm:$0xff]
      %v679 = vld [vmem:[%s583 + $0x288] sm:$0xff]
      %v680 = vld [vmem:[%s583 + $0x290] sm:$0xff]
      %v681 = vld [vmem:[%s583 + $0x298] sm:$0xff]
      %v682 = vld [vmem:[%s583 + $0x2a0] sm:$0xff]
      %v683 = vld [vmem:[%s583 + $0x2a8] sm:$0xff]
      %v684 = vld [vmem:[%s583 + $0x2b0] sm:$0xff]
      %v685 = vld [vmem:[%s583 + $0x2b8] sm:$0xff]
      %v686 = vld [vmem:[%s583 + $0x2c0] sm:$0xff]
      %v687 = vld [vmem:[%s583 + $0x2c8] sm:$0xff]
      %v688 = vld [vmem:[%s583 + $0x2d0] sm:$0xff]
      %v689 = vld [vmem:[%s583 + $0x2d8] sm:$0xff]
      %v690 = vld [vmem:[%s583 + $0x2e0] sm:$0xff]
      %v691 = vld [vmem:[%s583 + $0x2e8] sm:$0xff]
      %v692 = vld [vmem:[%s583 + $0x2f0] sm:$0xff]
      %v693 = vld [vmem:[%s583 + $0x2f8] sm:$0xff]
      %v694 = vld [vmem:[%s583 + $0x300] sm:$0xff]
      %v695 = vld [vmem:[%s583 + $0x308] sm:$0xff]
      %v696 = vld [vmem:[%s583 + $0x310] sm:$0xff]
      %v697 = vld [vmem:[%s583 + $0x318] sm:$0xff]
      %v698 = vld [vmem:[%s583 + $0x320] sm:$0xff]
      %v699 = vld [vmem:[%s583 + $0x328] sm:$0xff]
      %v700 = vld [vmem:[%s583 + $0x330] sm:$0xff]
      %v701 = vld [vmem:[%s583 + $0x338] sm:$0xff]
      %v702 = vld [vmem:[%s583 + $0x340] sm:$0xff]
      %v703 = vld [vmem:[%s583 + $0x348] sm:$0xff]
      %v704 = vld [vmem:[%s583 + $0x350] sm:$0xff]
      %v705 = vld [vmem:[%s583 + $0x358] sm:$0xff]
      %v706 = vld [vmem:[%s583 + $0x360] sm:$0xff]
      %v707 = vld [vmem:[%s583 + $0x368] sm:$0xff]
      %v708 = vld [vmem:[%s583 + $0x370] sm:$0xff]
      %v709 = vld [vmem:[%s583 + $0x378] sm:$0xff]
      %v710 = vld [vmem:[%s1] sm:$0xff]
      %v711 = vld [vmem:[%s1 + $0x8] sm:$0xff]
      %v712 = vld [vmem:[%s1 + $0x10] sm:$0xff]
      %v713 = vld [vmem:[%s1 + $0x18] sm:$0xff]
      %v714 = vld [vmem:[%s1 + $0x20] sm:$0xff]
      %v715 = vld [vmem:[%s1 + $0x28] sm:$0xff]
      %v716 = vld [vmem:[%s1 + $0x30] sm:$0xff]
      %v717 = vld [vmem:[%s1 + $0x38] sm:$0xff]
      %v718 = vld [vmem:[%s1 + $0x40] sm:$0xff]
      %v719 = vld [vmem:[%s1 + $0x48] sm:$0xff]
      %v720 = vld [vmem:[%s1 + $0x50] sm:$0xff]
      %v721 = vld [vmem:[%s1 + $0x58] sm:$0xff]
      %v722 = vld [vmem:[%s1 + $0x60] sm:$0xff]
      %v723 = vld [vmem:[%s1 + $0x68] sm:$0xff]
      %v724 = vld [vmem:[%s1 + $0x70] sm:$0xff]
      %v725 = vld [vmem:[%s1 + $0x78] sm:$0xff]
      %v726 = vld [vmem:[%s1 + $0x80] sm:$0xff]
      %v727 = vld [vmem:[%s1 + $0x88] sm:$0xff]
      %v728 = vld [vmem:[%s1 + $0x90] sm:$0xff]
      %v729 = vld [vmem:[%s1 + $0x98] sm:$0xff]
      %v730 = vld [vmem:[%s1 + $0xa0] sm:$0xff]
      %v731 = vld [vmem:[%s1 + $0xa8] sm:$0xff]
      %v732 = vld [vmem:[%s1 + $0xb0] sm:$0xff]
      %v733 = vld [vmem:[%s1 + $0xb8] sm:$0xff]
      %v734 = vld [vmem:[%s1 + $0xc0] sm:$0xff]
      %v735 = vld [vmem:[%s1 + $0xc8] sm:$0xff]
      %v736 = vld [vmem:[%s1 + $0xd0] sm:$0xff]
      %v737 = vld [vmem:[%s1 + $0xd8] sm:$0xff]
      %v738 = vld [vmem:[%s1 + $0xe0] sm:$0xff]
      %v739 = vld [vmem:[%s1 + $0xe8] sm:$0xff]
      %v740 = vld [vmem:[%s1 + $0xf0] sm:$0xff]
      %v741 = vld [vmem:[%s1 + $0xf8] sm:$0xff]
      %v742 = vld [vmem:[%s1 + $0x100] sm:$0xff]
      %v743 = vld [vmem:[%s1 + $0x108] sm:$0xff]
      %v744 = vld [vmem:[%s1 + $0x110] sm:$0xff]
      %v745 = vld [vmem:[%s1 + $0x118] sm:$0xff]
      %v746 = vld [vmem:[%s1 + $0x120] sm:$0xff]
      %v747 = vld [vmem:[%s1 + $0x128] sm:$0xff]
      %v748 = vld [vmem:[%s1 + $0x130] sm:$0xff]
      %v749 = vld [vmem:[%s1 + $0x138] sm:$0xff]
      %v750 = vld [vmem:[%s1 + $0x140] sm:$0xff]
      %v751 = vld [vmem:[%s1 + $0x148] sm:$0xff]
      %v752 = vld [vmem:[%s1 + $0x150] sm:$0xff]
      %v753 = vld [vmem:[%s1 + $0x158] sm:$0xff]
      %v754 = vld [vmem:[%s1 + $0x160] sm:$0xff]
      %v755 = vld [vmem:[%s1 + $0x168] sm:$0xff]
      %v756 = vld [vmem:[%s1 + $0x170] sm:$0xff]
      %v757 = vld [vmem:[%s1 + $0x178] sm:$0xff]
      %v758 = vld [vmem:[%s1 + $0x180] sm:$0xff]
      %v759 = vld [vmem:[%s1 + $0x188] sm:$0xff]
      %v760 = vld [vmem:[%s1 + $0x190] sm:$0xff]
      %v761 = vld [vmem:[%s1 + $0x198] sm:$0xff]
      %v762 = vld [vmem:[%s1 + $0x1a0] sm:$0xff]
      %v763 = vld [vmem:[%s1 + $0x1a8] sm:$0xff]
      %v764 = vld [vmem:[%s1 + $0x1b0] sm:$0xff]
      %v765 = vld [vmem:[%s1 + $0x1b8] sm:$0xff]
      %v766 = vld [vmem:[%s1 + $0x1c0] sm:$0xff]
      %v767 = vld [vmem:[%s1 + $0x1c8] sm:$0xff]
      %v768 = vld [vmem:[%s1 + $0x1d0] sm:$0xff]
      %v769 = vld [vmem:[%s1 + $0x1d8] sm:$0xff]
      %v770 = vld [vmem:[%s1 + $0x1e0] sm:$0xff]
      %v771 = vld [vmem:[%s1 + $0x1e8] sm:$0xff]
      %v772 = vld [vmem:[%s1 + $0x1f0] sm:$0xff]
      %v773 = vld [vmem:[%s1 + $0x1f8] sm:$0xff]
      %v774 = vld [vmem:[%s1 + $0x200] sm:$0xff]
      %v775 = vld [vmem:[%s1 + $0x208] sm:$0xff]
      %v776 = vld [vmem:[%s1 + $0x210] sm:$0xff]
      %v777 = vld [vmem:[%s1 + $0x218] sm:$0xff]
      %v778 = vld [vmem:[%s1 + $0x220] sm:$0xff]
      %v779 = vld [vmem:[%s1 + $0x228] sm:$0xff]
      %v780 = vld [vmem:[%s1 + $0x230] sm:$0xff]
      %v781 = vld [vmem:[%s1 + $0x238] sm:$0xff]
      %v782 = vld [vmem:[%s1 + $0x240] sm:$0xff]
      %v783 = vld [vmem:[%s1 + $0x248] sm:$0xff]
      %v784 = vld [vmem:[%s1 + $0x250] sm:$0xff]
      %v785 = vld [vmem:[%s1 + $0x258] sm:$0xff]
      %v786 = vld [vmem:[%s1 + $0x260] sm:$0xff]
      %v787 = vld [vmem:[%s1 + $0x268] sm:$0xff]
      %v788 = vld [vmem:[%s1 + $0x270] sm:$0xff]
      %v789 = vld [vmem:[%s1 + $0x278] sm:$0xff]
      %v790 = vld [vmem:[%s1 + $0x280] sm:$0xff]
      %v791 = vld [vmem:[%s1 + $0x288] sm:$0xff]
      %v792 = vld [vmem:[%s1 + $0x290] sm:$0xff]
      %v793 = vld [vmem:[%s1 + $0x298] sm:$0xff]
      %v794 = vld [vmem:[%s1 + $0x2a0] sm:$0xff]
      %v795 = vld [vmem:[%s1 + $0x2a8] sm:$0xff]
      %v796 = vld [vmem:[%s1 + $0x2b0] sm:$0xff]
      %v797 = vld [vmem:[%s1 + $0x2b8] sm:$0xff]
      %v798 = vld [vmem:[%s1 + $0x2c0] sm:$0xff]
      %v799 = vld [vmem:[%s1 + $0x2c8] sm:$0xff]
      %v800 = vld [vmem:[%s1 + $0x2d0] sm:$0xff]
      %v801 = vld [vmem:[%s1 + $0x2d8] sm:$0xff]
      %v802 = vld [vmem:[%s1 + $0x2e0] sm:$0xff]
      %v803 = vld [vmem:[%s1 + $0x2e8] sm:$0xff]
      %v804 = vld [vmem:[%s1 + $0x2f0] sm:$0xff]
      %v805 = vld [vmem:[%s1 + $0x2f8] sm:$0xff]
      %v806 = vld [vmem:[%s1 + $0x300] sm:$0xff]
      %v807 = vld [vmem:[%s1 + $0x308] sm:$0xff]
      %v808 = vld [vmem:[%s9] sm:$0x1]
      %v810 = vlaneseq
      %v811 = vshrl.u32 %v810, 7
      %v812 = vsub.s32 0, %v811
      %v813 = vrot.slane %v808, %v812
      %vm815 = vcmask 130048
      %v817 = vsel %vm815, %v604, 0
      %v820 = vsel %vm815, %v611, 0
      %v823 = vsel %vm815, %v618, 0
      %v826 = vsel %vm815, %v625, 0
      %v829 = vsel %vm815, %v632, 0
      %v832 = vsel %vm815, %v639, 0
      %v835 = vsel %vm815, %v646, 0
      %v838 = vsel %vm815, %v653, 0
      %v841 = vsel %vm815, %v660, 0
      %v844 = vsel %vm815, %v667, 0
      %v847 = vsel %vm815, %v674, 0
      %v850 = vsel %vm815, %v681, 0
      %v853 = vsel %vm815, %v688, 0
      %v856 = vsel %vm815, %v695, 0
      %v859 = vsel %vm815, %v702, 0
      %v862 = vsel %vm815, %v709, 0
      %864 = vmatprep.subr.mxu0 0.0
      %865 = vmatpush1.msra.mxu0 %v710
      %866 = vmatprep.subr.mxu0 0.0
      %867 = vmatpush1.msra.mxu0 %v711
      %868 = vmatprep.subr.mxu0 0.0
      %869 = vmatpush1.msra.mxu0 %v712
      %870 = vmatprep.subr.mxu0 0.0
      %871 = vmatpush1.msra.mxu0 %v713
      %872 = vmatprep.subr.mxu0 0.0
      %873 = vmatpush1.msra.mxu0 %v714
      %874 = vmatprep.subr.mxu0 0.0
      %875 = vmatpush1.msra.mxu0 %v715
      %876 = vmatprep.subr.mxu0 0.0
      %877 = vmatpush1.msra.mxu0 %v716
      %878 = vmatprep.subr.mxu0 0.0
      %879 = vmatpush1.msra.mxu0 %v717
      %880 = vmatprep.subr.mxu0 0.0
      %881 = vmatpush1.msra.mxu0 %v718
      %882 = vmatprep.subr.mxu0 0.0
      %883 = vmatpush1.msra.mxu0 %v719
      %884 = vmatprep.subr.mxu0 0.0
      %885 = vmatpush1.msra.mxu0 %v720
      %886 = vmatprep.subr.mxu0 0.0
      %887 = vmatpush1.msra.mxu0 %v721
      %888 = vmatprep.subr.mxu0 0.0
      %889 = vmatpush1.msra.mxu0 %v722
      %890 = vmatprep.subr.mxu0 0.0
      %891 = vmatpush1.msra.mxu0 %v723
      %892 = vmatprep.subr.mxu0 0.0
      %893 = vmatpush1.msra.mxu0 %v724
      %894 = vmatprep.subr.mxu0 0.0
      %895 = vmatpush1.msra.mxu0 %v725
      %896 = vmatprep.subr.mxu0 0.0
      %897 = vmatpush1.msra.mxu0 %v726
      %898 = vmatprep.subr.mxu0 0.0
      %899 = vmatpush1.msra.mxu0 %v727
      %900 = vmatprep.subr.mxu0 0.0
      %901 = vmatpush1.msra.mxu0 %v728
      %902 = vmatprep.subr.mxu0 0.0
      %903 = vmatpush1.msra.mxu0 %v729
      %904 = vmatprep.subr.mxu0 0.0
      %905 = vmatpush1.msra.mxu0 %v730
      %906 = vmatprep.subr.mxu0 0.0
      %907 = vmatpush1.msra.mxu0 %v731
      %908 = vmatprep.subr.mxu0 0.0
      %909 = vmatpush1.msra.mxu0 %v732
      %910 = vmatprep.subr.mxu0 0.0
      %911 = vmatpush1.msra.mxu0 %v733
      %912 = vmatprep.subr.mxu0 0.0
      %913 = vmatpush1.msra.mxu0 %v734
      %914 = vmatprep.subr.mxu0 0.0
      %915 = vmatpush1.msra.mxu0 %v735
      %916 = vmatprep.subr.mxu0 0.0
      %917 = vmatpush1.msra.mxu0 %v736
      %918 = vmatprep.subr.mxu0 0.0
      %919 = vmatpush1.msra.mxu0 %v737
      %920 = vmatprep.subr.mxu0 0.0
      %921 = vmatpush1.msra.mxu0 %v738
      %922 = vmatprep.subr.mxu0 0.0
      %923 = vmatpush1.msra.mxu0 %v739
      %924 = vmatprep.subr.mxu0 0.0
      %925 = vmatpush1.msra.mxu0 %v740
      %926 = vmatprep.subr.mxu0 0.0
      %927 = vmatpush1.msra.mxu0 %v741
      %928 = vmatprep.mubr.f32.mxu0 %v599
      %929 = vmatmul.mubr.f32.gmra.mrb[0].mxu0 %v598
      %v930 = vpop.f32.mrb[0].mxu0
      %v931 = vadd.f32 %v813, %v930
      %v932 = vpop.f32.mrb[0].mxu0
      %933 = vmatprep.mubr.f32.mxu0 %v606
      %934 = vmatmul.mubr.f32.gmra.mrb[0].mxu0 %v605
      %v935 = vpop.f32.mrb[0].mxu0
      %v936 = vadd.f32 %v813, %v935
      %v937 = vpop.f32.mrb[0].mxu0
      %938 = vmatprep.mubr.f32.mxu0 %v613
      %939 = vmatmul.mubr.f32.gmra.mrb[0].mxu0 %v612
      %v940 = vpop.f32.mrb[0].mxu0
      %v941 = vadd.f32 %v813, %v940
      %v942 = vpop.f32.mrb[0].mxu0
      %943 = vmatprep.mubr.f32.mxu0 %v620
      %944 = vmatmul.mubr.f32.gmra.mrb[0].mxu0 %v619
      %v945 = vpop.f32.mrb[0].mxu0
      %v946 = vadd.f32 %v813, %v945
      %v947 = vpop.f32.mrb[0].mxu0
      %948 = vmatprep.mubr.f32.mxu0 %v627
      %949 = vmatmul.mubr.f32.gmra.mrb[0].mxu0 %v626
      %v950 = vpop.f32.mrb[0].mxu0
      %v951 = vadd.f32 %v813, %v950
      %v952 = vpop.f32.mrb[0].mxu0
      %953 = vmatprep.mubr.f32.mxu0 %v634
      %954 = vmatmul.mubr.f32.gmra.mrb[0].mxu0 %v633
      %v955 = vpop.f32.mrb[0].mxu0
      %v956 = vadd.f32 %v813, %v955
      %v957 = vpop.f32.mrb[0].mxu0
      %958 = vmatprep.mubr.f32.mxu0 %v641
      %959 = vmatmul.mubr.f32.gmra.mrb[0].mxu0 %v640
      %v960 = vpop.f32.mrb[0].mxu0
      %v961 = vadd.f32 %v813, %v960
      %v962 = vpop.f32.mrb[0].mxu0
      %963 = vmatprep.mubr.f32.mxu0 %v648
      %964 = vmatmul.mubr.f32.gmra.mrb[0].mxu0 %v647
      %v965 = vpop.f32.mrb[0].mxu0
      %v966 = vadd.f32 %v813, %v965
      %v967 = vpop.f32.mrb[0].mxu0
      %968 = vmatprep.mubr.f32.mxu0 %v655
      %969 = vmatmul.mubr.f32.gmra.mrb[0].mxu0 %v654
      %v970 = vpop.f32.mrb[0].mxu0
      %v971 = vadd.f32 %v813, %v970
      %v972 = vpop.f32.mrb[0].mxu0
      %973 = vmatprep.mubr.f32.mxu0 %v662
      %974 = vmatmul.mubr.f32.gmra.mrb[0].mxu0 %v661
      %v975 = vpop.f32.mrb[0].mxu0
      %v976 = vadd.f32 %v813, %v975
      %v977 = vpop.f32.mrb[0].mxu0
      %978 = vmatprep.mubr.f32.mxu0 %v669
      %979 = vmatmul.mubr.f32.gmra.mrb[0].mxu0 %v668
      %v980 = vpop.f32.mrb[0].mxu0
      %v981 = vadd.f32 %v813, %v980
      %v982 = vpop.f32.mrb[0].mxu0
      %983 = vmatprep.mubr.f32.mxu0 %v676
      %984 = vmatmul.mubr.f32.gmra.mrb[0].mxu0 %v675
      %v985 = vpop.f32.mrb[0].mxu0
      %v986 = vadd.f32 %v813, %v985
      %v987 = vpop.f32.mrb[0].mxu0
      %988 = vmatprep.mubr.f32.mxu0 %v683
      %989 = vmatmul.mubr.f32.gmra.mrb[0].mxu0 %v682
      %v990 = vpop.f32.mrb[0].mxu0
      %v991 = vadd.f32 %v813, %v990
      %v992 = vpop.f32.mrb[0].mxu0
      %993 = vmatprep.mubr.f32.mxu0 %v690
      %994 = vmatmul.mubr.f32.gmra.mrb[0].mxu0 %v689
      %v995 = vpop.f32.mrb[0].mxu0
      %v996 = vadd.f32 %v813, %v995
      %v997 = vpop.f32.mrb[0].mxu0
      %998 = vmatprep.mubr.f32.mxu0 %v697
      %999 = vmatmul.mubr.f32.gmra.mrb[0].mxu0 %v696
      %v1000 = vpop.f32.mrb[0].mxu0
      %v1001 = vadd.f32 %v813, %v1000
      %v1002 = vpop.f32.mrb[0].mxu0
      %1003 = vmatprep.mubr.f32.mxu0 %v704
      %1004 = vmatmul.mubr.f32.gmra.mrb[0].mxu0 %v703
      %v1005 = vpop.f32.mrb[0].mxu0
      %v1006 = vadd.f32 %v813, %v1005
      %v1007 = vpop.f32.mrb[0].mxu0
      %1008 = vdwg.mxu0
      %1009 = vmatprep.subr.mxu0 0.0
      %1010 = vmatpush1.msra.mxu0 %v742
      %1011 = vmatprep.subr.mxu0 0.0
      %1012 = vmatpush1.msra.mxu0 %v743
      %1013 = vmatprep.subr.mxu0 0.0
      %1014 = vmatpush1.msra.mxu0 %v744
      %1015 = vmatprep.subr.mxu0 0.0
      %1016 = vmatpush1.msra.mxu0 %v745
      %1017 = vmatprep.subr.mxu0 0.0
      %1018 = vmatpush1.msra.mxu0 %v746
      %1019 = vmatprep.subr.mxu0 0.0
      %1020 = vmatpush1.msra.mxu0 %v747
      %1021 = vmatprep.subr.mxu0 0.0
      %1022 = vmatpush1.msra.mxu0 %v748
      %1023 = vmatprep.subr.mxu0 0.0
      %1024 = vmatpush1.msra.mxu0 %v749
      %1025 = vmatprep.subr.mxu0 0.0
      %1026 = vmatpush1.msra.mxu0 %v750
      %1027 = vmatprep.subr.mxu0 0.0
      %1028 = vmatpush1.msra.mxu0 %v751
      %1029 = vmatprep.subr.mxu0 0.0
      %1030 = vmatpush1.msra.mxu0 %v752
      %1031 = vmatprep.subr.mxu0 0.0
      %1032 = vmatpush1.msra.mxu0 %v753
      %1033 = vmatprep.subr.mxu0 0.0
      %1034 = vmatpush1.msra.mxu0 %v754
      %1035 = vmatprep.subr.mxu0 0.0
      %1036 = vmatpush1.msra.mxu0 %v755
      %1037 = vmatprep.subr.mxu0 0.0
      %1038 = vmatpush1.msra.mxu0 %v756
      %1039 = vmatprep.subr.mxu0 0.0
      %1040 = vmatpush1.msra.mxu0 %v757
      %1041 = vmatprep.subr.mxu0 0.0
      %1042 = vmatpush1.msra.mxu0 %v758
      %1043 = vmatprep.subr.mxu0 0.0
      %1044 = vmatpush1.msra.mxu0 %v759
      %1045 = vmatprep.subr.mxu0 0.0
      %1046 = vmatpush1.msra.mxu0 %v760
      %1047 = vmatprep.subr.mxu0 0.0
      %1048 = vmatpush1.msra.mxu0 %v761
      %1049 = vmatprep.subr.mxu0 0.0
      %1050 = vmatpush1.msra.mxu0 %v762
      %1051 = vmatprep.subr.mxu0 0.0
      %1052 = vmatpush1.msra.mxu0 %v763
      %1053 = vmatprep.subr.mxu0 0.0
      %1054 = vmatpush1.msra.mxu0 %v764
      %1055 = vmatprep.subr.mxu0 0.0
      %1056 = vmatpush1.msra.mxu0 %v765
      %1057 = vmatprep.subr.mxu0 0.0
      %1058 = vmatpush1.msra.mxu0 %v766
      %1059 = vmatprep.subr.mxu0 0.0
      %1060 = vmatpush1.msra.mxu0 %v767
      %1061 = vmatprep.subr.mxu0 0.0
      %1062 = vmatpush1.msra.mxu0 %v768
      %1063 = vmatprep.subr.mxu0 0.0
      %1064 = vmatpush1.msra.mxu0 %v769
      %1065 = vmatprep.subr.mxu0 0.0
      %1066 = vmatpush1.msra.mxu0 %v770
      %1067 = vmatprep.subr.mxu0 0.0
      %1068 = vmatpush1.msra.mxu0 %v771
      %1069 = vmatprep.subr.mxu0 0.0
      %1070 = vmatpush1.msra.mxu0 %v772
      %1071 = vmatprep.subr.mxu0 0.0
      %1072 = vmatpush1.msra.mxu0 %v773
      %1073 = vmatprep.mubr.f32.mxu0 %v601
      %1074 = vmatmul.mubr.f32.gmra.mrb[0].mxu0 %v600
      %v1075 = vpop.f32.mrb[0].mxu0
      %v1076 = vadd.f32 %v931, %v1075
      %v1077 = vpop.f32.mrb[0].mxu0
      %1078 = vmatprep.mubr.f32.mxu0 %v608
      %1079 = vmatmul.mubr.f32.gmra.mrb[0].mxu0 %v607
      %v1080 = vpop.f32.mrb[0].mxu0
      %v1081 = vadd.f32 %v936, %v1080
      %v1082 = vpop.f32.mrb[0].mxu0
      %1083 = vmatprep.mubr.f32.mxu0 %v615
      %1084 = vmatmul.mubr.f32.gmra.mrb[0].mxu0 %v614
      %v1085 = vpop.f32.mrb[0].mxu0
      %v1086 = vadd.f32 %v941, %v1085
      %v1087 = vpop.f32.mrb[0].mxu0
      %1088 = vmatprep.mubr.f32.mxu0 %v622
      %1089 = vmatmul.mubr.f32.gmra.mrb[0].mxu0 %v621
      %v1090 = vpop.f32.mrb[0].mxu0
      %v1091 = vadd.f32 %v946, %v1090
      %v1092 = vpop.f32.mrb[0].mxu0
      %1093 = vmatprep.mubr.f32.mxu0 %v629
      %1094 = vmatmul.mubr.f32.gmra.mrb[0].mxu0 %v628
      %v1095 = vpop.f32.mrb[0].mxu0
      %v1096 = vadd.f32 %v951, %v1095
      %v1097 = vpop.f32.mrb[0].mxu0
      %1098 = vmatprep.mubr.f32.mxu0 %v636
      %1099 = vmatmul.mubr.f32.gmra.mrb[0].mxu0 %v635
      %v1100 = vpop.f32.mrb[0].mxu0
      %v1101 = vadd.f32 %v956, %v1100
      %v1102 = vpop.f32.mrb[0].mxu0
      %1103 = vmatprep.mubr.f32.mxu0 %v643
      %1104 = vmatmul.mubr.f32.gmra.mrb[0].mxu0 %v642
      %v1105 = vpop.f32.mrb[0].mxu0
      %v1106 = vadd.f32 %v961, %v1105
      %v1107 = vpop.f32.mrb[0].mxu0
      %1108 = vmatprep.mubr.f32.mxu0 %v650
      %1109 = vmatmul.mubr.f32.gmra.mrb[0].mxu0 %v649
      %v1110 = vpop.f32.mrb[0].mxu0
      %v1111 = vadd.f32 %v966, %v1110
      %v1112 = vpop.f32.mrb[0].mxu0
      %1113 = vmatprep.mubr.f32.mxu0 %v657
      %1114 = vmatmul.mubr.f32.gmra.mrb[0].mxu0 %v656
      %v1115 = vpop.f32.mrb[0].mxu0
      %v1116 = vadd.f32 %v971, %v1115
      %v1117 = vpop.f32.mrb[0].mxu0
      %1118 = vmatprep.mubr.f32.mxu0 %v664
      %1119 = vmatmul.mubr.f32.gmra.mrb[0].mxu0 %v663
      %v1120 = vpop.f32.mrb[0].mxu0
      %v1121 = vadd.f32 %v976, %v1120
      %v1122 = vpop.f32.mrb[0].mxu0
      %1123 = vmatprep.mubr.f32.mxu0 %v671
      %1124 = vmatmul.mubr.f32.gmra.mrb[0].mxu0 %v670
      %v1125 = vpop.f32.mrb[0].mxu0
      %v1126 = vadd.f32 %v981, %v1125
      %v1127 = vpop.f32.mrb[0].mxu0
      %1128 = vmatprep.mubr.f32.mxu0 %v678
      %1129 = vmatmul.mubr.f32.gmra.mrb[0].mxu0 %v677
      %v1130 = vpop.f32.mrb[0].mxu0
      %v1131 = vadd.f32 %v986, %v1130
      %v1132 = vpop.f32.mrb[0].mxu0
      %1133 = vmatprep.mubr.f32.mxu0 %v685
      %1134 = vmatmul.mubr.f32.gmra.mrb[0].mxu0 %v684
      %v1135 = vpop.f32.mrb[0].mxu0
      %v1136 = vadd.f32 %v991, %v1135
      %v1137 = vpop.f32.mrb[0].mxu0
      %1138 = vmatprep.mubr.f32.mxu0 %v692
      %1139 = vmatmul.mubr.f32.gmra.mrb[0].mxu0 %v691
      %v1140 = vpop.f32.mrb[0].mxu0
      %v1141 = vadd.f32 %v996, %v1140
      %v1142 = vpop.f32.mrb[0].mxu0
      %1143 = vmatprep.mubr.f32.mxu0 %v699
      %1144 = vmatmul.mubr.f32.gmra.mrb[0].mxu0 %v698
      %v1145 = vpop.f32.mrb[0].mxu0
      %v1146 = vadd.f32 %v1001, %v1145
      %v1147 = vpop.f32.mrb[0].mxu0
      %1148 = vmatprep.mubr.f32.mxu0 %v706
      %1149 = vmatmul.mubr.f32.gmra.mrb[0].mxu0 %v705
      %v1150 = vpop.f32.mrb[0].mxu0
      %v1151 = vadd.f32 %v1006, %v1150
      %v1152 = vpop.f32.mrb[0].mxu0
      %1153 = vdwg.mxu0
      %1154 = vmatprep.subr.mxu0 0.0
      %1155 = vmatpush1.msra.mxu0 %v774
      %1156 = vmatprep.subr.mxu0 0.0
      %1157 = vmatpush1.msra.mxu0 %v775
      %1158 = vmatprep.subr.mxu0 0.0
      %1159 = vmatpush1.msra.mxu0 %v776
      %1160 = vmatprep.subr.mxu0 0.0
      %1161 = vmatpush1.msra.mxu0 %v777
      %1162 = vmatprep.subr.mxu0 0.0
      %1163 = vmatpush1.msra.mxu0 %v778
      %1164 = vmatprep.subr.mxu0 0.0
      %1165 = vmatpush1.msra.mxu0 %v779
      %1166 = vmatprep.subr.mxu0 0.0
      %1167 = vmatpush1.msra.mxu0 %v780
      %1168 = vmatprep.subr.mxu0 0.0
      %1169 = vmatpush1.msra.mxu0 %v781
      %1170 = vmatprep.subr.mxu0 0.0
      %1171 = vmatpush1.msra.mxu0 %v782
      %1172 = vmatprep.subr.mxu0 0.0
      %1173 = vmatpush1.msra.mxu0 %v783
      %1174 = vmatprep.subr.mxu0 0.0
      %1175 = vmatpush1.msra.mxu0 %v784
      %1176 = vmatprep.subr.mxu0 0.0
      %1177 = vmatpush1.msra.mxu0 %v785
      %1178 = vmatprep.subr.mxu0 0.0
      %1179 = vmatpush1.msra.mxu0 %v786
      %1180 = vmatprep.subr.mxu0 0.0
      %1181 = vmatpush1.msra.mxu0 %v787
      %1182 = vmatprep.subr.mxu0 0.0
      %1183 = vmatpush1.msra.mxu0 %v788
      %1184 = vmatprep.subr.mxu0 0.0
      %1185 = vmatpush1.msra.mxu0 %v789
      %1186 = vmatprep.subr.mxu0 0.0
      %1187 = vmatpush1.msra.mxu0 %v790
      %1188 = vmatprep.subr.mxu0 0.0
      %1189 = vmatpush1.msra.mxu0 %v791
      %1190 = vmatprep.subr.mxu0 0.0
      %1191 = vmatpush1.msra.mxu0 %v792
      %1192 = vmatprep.subr.mxu0 0.0
      %1193 = vmatpush1.msra.mxu0 %v793
      %1194 = vmatprep.subr.mxu0 0.0
      %1195 = vmatpush1.msra.mxu0 %v794
      %1196 = vmatprep.subr.mxu0 0.0
      %1197 = vmatpush1.msra.mxu0 %v795
      %1198 = vmatprep.subr.mxu0 0.0
      %1199 = vmatpush1.msra.mxu0 %v796
      %1200 = vmatprep.subr.mxu0 0.0
      %1201 = vmatpush1.msra.mxu0 %v797
      %1202 = vmatprep.subr.mxu0 0.0
      %1203 = vmatpush1.msra.mxu0 %v798
      %1204 = vmatprep.subr.mxu0 0.0
      %1205 = vmatpush1.msra.mxu0 %v799
      %1206 = vmatprep.subr.mxu0 0.0
      %1207 = vmatpush1.msra.mxu0 %v800
      %1208 = vmatprep.subr.mxu0 0.0
      %1209 = vmatpush1.msra.mxu0 %v801
      %1210 = vmatprep.subr.mxu0 0.0
      %1211 = vmatpush1.msra.mxu0 %v802
      %1212 = vmatprep.subr.mxu0 0.0
      %1213 = vmatpush1.msra.mxu0 %v803
      %1214 = vmatprep.subr.mxu0 0.0
      %1215 = vmatpush1.msra.mxu0 %v804
      %1216 = vmatprep.subr.mxu0 0.0
      %1217 = vmatpush1.msra.mxu0 %v805
      %1218 = vmatprep.mubr.f32.mxu0 %v603
      %1219 = vmatmul.mubr.f32.gmra.mrb[0].mxu0 %v602
      %v1220 = vpop.f32.mrb[0].mxu0
      %v1221 = vadd.f32 %v1076, %v1220
      %v1222 = vpop.f32.mrb[0].mxu0
      %1223 = vmatprep.mubr.f32.mxu0 %v610
      %1224 = vmatmul.mubr.f32.gmra.mrb[0].mxu0 %v609
      %v1225 = vpop.f32.mrb[0].mxu0
      %v1226 = vadd.f32 %v1081, %v1225
      %v1227 = vpop.f32.mrb[0].mxu0
      %1228 = vmatprep.mubr.f32.mxu0 %v617
      %1229 = vmatmul.mubr.f32.gmra.mrb[0].mxu0 %v616
      %v1230 = vpop.f32.mrb[0].mxu0
      %v1231 = vadd.f32 %v1086, %v1230
      %v1232 = vpop.f32.mrb[0].mxu0
      %1233 = vmatprep.mubr.f32.mxu0 %v624
      %1234 = vmatmul.mubr.f32.gmra.mrb[0].mxu0 %v623
      %v1235 = vpop.f32.mrb[0].mxu0
      %v1236 = vadd.f32 %v1091, %v1235
      %v1237 = vpop.f32.mrb[0].mxu0
      %1238 = vmatprep.mubr.f32.mxu0 %v631
      %1239 = vmatmul.mubr.f32.gmra.mrb[0].mxu0 %v630
      %v1240 = vpop.f32.mrb[0].mxu0
      %v1241 = vadd.f32 %v1096, %v1240
      %v1242 = vpop.f32.mrb[0].mxu0
      %1243 = vmatprep.mubr.f32.mxu0 %v638
      %1244 = vmatmul.mubr.f32.gmra.mrb[0].mxu0 %v637
      %v1245 = vpop.f32.mrb[0].mxu0
      %v1246 = vadd.f32 %v1101, %v1245
      %v1247 = vpop.f32.mrb[0].mxu0
      %1248 = vmatprep.mubr.f32.mxu0 %v645
      %1249 = vmatmul.mubr.f32.gmra.mrb[0].mxu0 %v644
      %v1250 = vpop.f32.mrb[0].mxu0
      %v1251 = vadd.f32 %v1106, %v1250
      %v1252 = vpop.f32.mrb[0].mxu0
      %1253 = vmatprep.mubr.f32.mxu0 %v652
      %1254 = vmatmul.mubr.f32.gmra.mrb[0].mxu0 %v651
      %v1255 = vpop.f32.mrb[0].mxu0
      %v1256 = vadd.f32 %v1111, %v1255
      %v1257 = vpop.f32.mrb[0].mxu0
      %1258 = vmatprep.mubr.f32.mxu0 %v659
      %1259 = vmatmul.mubr.f32.gmra.mrb[0].mxu0 %v658
      %v1260 = vpop.f32.mrb[0].mxu0
      %v1261 = vadd.f32 %v1116, %v1260
      %v1262 = vpop.f32.mrb[0].mxu0
      %1263 = vmatprep.mubr.f32.mxu0 %v666
      %1264 = vmatmul.mubr.f32.gmra.mrb[0].mxu0 %v665
      %v1265 = vpop.f32.mrb[0].mxu0
      %v1266 = vadd.f32 %v1121, %v1265
      %v1267 = vpop.f32.mrb[0].mxu0
      %1268 = vmatprep.mubr.f32.mxu0 %v673
      %1269 = vmatmul.mubr.f32.gmra.mrb[0].mxu0 %v672
      %v1270 = vpop.f32.mrb[0].mxu0
      %v1271 = vadd.f32 %v1126, %v1270
      %v1272 = vpop.f32.mrb[0].mxu0
      %1273 = vmatprep.mubr.f32.mxu0 %v680
      %1274 = vmatmul.mubr.f32.gmra.mrb[0].mxu0 %v679
      %v1275 = vpop.f32.mrb[0].mxu0
      %v1276 = vadd.f32 %v1131, %v1275
      %v1277 = vpop.f32.mrb[0].mxu0
      %1278 = vmatprep.mubr.f32.mxu0 %v687
      %1279 = vmatmul.mubr.f32.gmra.mrb[0].mxu0 %v686
      %v1280 = vpop.f32.mrb[0].mxu0
      %v1281 = vadd.f32 %v1136, %v1280
      %v1282 = vpop.f32.mrb[0].mxu0
      %1283 = vmatprep.mubr.f32.mxu0 %v694
      %1284 = vmatmul.mubr.f32.gmra.mrb[0].mxu0 %v693
      %v1285 = vpop.f32.mrb[0].mxu0
      %v1286 = vadd.f32 %v1141, %v1285
      %v1287 = vpop.f32.mrb[0].mxu0
      %1288 = vmatprep.mubr.f32.mxu0 %v701
      %1289 = vmatmul.mubr.f32.gmra.mrb[0].mxu0 %v700
      %v1290 = vpop.f32.mrb[0].mxu0
      %v1291 = vadd.f32 %v1146, %v1290
      %v1292 = vpop.f32.mrb[0].mxu0
      %1293 = vmatprep.mubr.f32.mxu0 %v708
      %1294 = vmatmul.mubr.f32.gmra.mrb[0].mxu0 %v707
      %v1295 = vpop.f32.mrb[0].mxu0
      %v1296 = vadd.f32 %v1151, %v1295
      %v1297 = vpop.f32.mrb[0].mxu0
      %1298 = vdwg.mxu0
      %1299 = vmatprep.subr.mxu0 0.0
      %1300 = vmatpush1.msra.mxu0 %v806
      %1301 = vmatprep.subr.mxu0 0.0
      %1302 = vmatpush1.msra.mxu0 %v807
      %1303 = vmatprep.subr.mxu0 0.0
      %1304 = vmatpush1.msra.mxu0 0.0
      %1305 = vmatprep.subr.mxu0 0.0
      %1306 = vmatpush1.msra.mxu0 0.0
      %1307 = vmatprep.subr.mxu0 0.0
      %1308 = vmatpush1.msra.mxu0 0.0
      %1309 = vmatprep.subr.mxu0 0.0
      %1310 = vmatpush1.msra.mxu0 0.0
      %1311 = vmatprep.subr.mxu0 0.0
      %1312 = vmatpush1.msra.mxu0 0.0
      %1313 = vmatprep.subr.mxu0 0.0
      %1314 = vmatpush1.msra.mxu0 0.0
      %1315 = vmatprep.subr.mxu0 0.0
      %1316 = vmatpush1.msra.mxu0 0.0
      %1317 = vmatprep.subr.mxu0 0.0
      %1318 = vmatpush1.msra.mxu0 0.0
      %1319 = vmatprep.subr.mxu0 0.0
      %1320 = vmatpush1.msra.mxu0 0.0
      %1321 = vmatprep.subr.mxu0 0.0
      %1322 = vmatpush1.msra.mxu0 0.0
      %1323 = vmatprep.subr.mxu0 0.0
      %1324 = vmatpush1.msra.mxu0 0.0
      %1325 = vmatprep.subr.mxu0 0.0
      %1326 = vmatpush1.msra.mxu0 0.0
      %1327 = vmatprep.subr.mxu0 0.0
      %1328 = vmatpush1.msra.mxu0 0.0
      %1329 = vmatprep.subr.mxu0 0.0
      %1330 = vmatpush1.msra.mxu0 0.0
      %1331 = vmatprep.subr.mxu0 0.0
      %1332 = vmatpush1.msra.mxu0 0.0
      %1333 = vmatprep.subr.mxu0 0.0
      %1334 = vmatpush1.msra.mxu0 0.0
      %1335 = vmatprep.subr.mxu0 0.0
      %1336 = vmatpush1.msra.mxu0 0.0
      %1337 = vmatprep.subr.mxu0 0.0
      %1338 = vmatpush1.msra.mxu0 0.0
      %1339 = vmatprep.subr.mxu0 0.0
      %1340 = vmatpush1.msra.mxu0 0.0
      %1341 = vmatprep.subr.mxu0 0.0
      %1342 = vmatpush1.msra.mxu0 0.0
      %1343 = vmatprep.subr.mxu0 0.0
      %1344 = vmatpush1.msra.mxu0 0.0
      %1345 = vmatprep.subr.mxu0 0.0
      %1346 = vmatpush1.msra.mxu0 0.0
      %1347 = vmatprep.subr.mxu0 0.0
      %1348 = vmatpush1.msra.mxu0 0.0
      %1349 = vmatprep.subr.mxu0 0.0
      %1350 = vmatpush1.msra.mxu0 0.0
      %1351 = vmatprep.subr.mxu0 0.0
      %1352 = vmatpush1.msra.mxu0 0.0
      %1353 = vmatprep.subr.mxu0 0.0
      %1354 = vmatpush1.msra.mxu0 0.0
      %1355 = vmatprep.subr.mxu0 0.0
      %1356 = vmatpush1.msra.mxu0 0.0
      %1357 = vmatprep.subr.mxu0 0.0
      %1358 = vmatpush1.msra.mxu0 0.0
      %1359 = vmatprep.subr.mxu0 0.0
      %1360 = vmatpush1.msra.mxu0 0.0
      %1361 = vmatprep.subr.mxu0 0.0
      %1362 = vmatpush1.msra.mxu0 0.0
      %1363 = vmatprep.mubr.f32.mxu0 0.0
      %1364 = vmatmul.mubr.f32.gmra.mrb[0].mxu0 %v817
      %v1365 = vpop.f32.mrb[0].mxu0
      %v1366 = vadd.f32 %v1221, %v1365
      %v1367 = vpop.f32.mrb[0].mxu0
      %1368 = vmatprep.mubr.f32.mxu0 0.0
      %1369 = vmatmul.mubr.f32.gmra.mrb[0].mxu0 %v820
      %v1370 = vpop.f32.mrb[0].mxu0
      %v1371 = vadd.f32 %v1226, %v1370
      %v1372 = vpop.f32.mrb[0].mxu0
      %1373 = vmatprep.mubr.f32.mxu0 0.0
      %1374 = vmatmul.mubr.f32.gmra.mrb[0].mxu0 %v823
      %v1375 = vpop.f32.mrb[0].mxu0
      %v1376 = vadd.f32 %v1231, %v1375
      %v1377 = vpop.f32.mrb[0].mxu0
      %1378 = vmatprep.mubr.f32.mxu0 0.0
      %1379 = vmatmul.mubr.f32.gmra.mrb[0].mxu0 %v826
      %v1380 = vpop.f32.mrb[0].mxu0
      %v1381 = vadd.f32 %v1236, %v1380
      %v1382 = vpop.f32.mrb[0].mxu0
      %1383 = vmatprep.mubr.f32.mxu0 0.0
      %1384 = vmatmul.mubr.f32.gmra.mrb[0].mxu0 %v829
      %v1385 = vpop.f32.mrb[0].mxu0
      %v1386 = vadd.f32 %v1241, %v1385
      %v1387 = vpop.f32.mrb[0].mxu0
      %1388 = vmatprep.mubr.f32.mxu0 0.0
      %1389 = vmatmul.mubr.f32.gmra.mrb[0].mxu0 %v832
      %v1390 = vpop.f32.mrb[0].mxu0
      %v1391 = vadd.f32 %v1246, %v1390
      %v1392 = vpop.f32.mrb[0].mxu0
      %1393 = vmatprep.mubr.f32.mxu0 0.0
      %1394 = vmatmul.mubr.f32.gmra.mrb[0].mxu0 %v835
      %v1395 = vpop.f32.mrb[0].mxu0
      %v1396 = vadd.f32 %v1251, %v1395
      %v1397 = vpop.f32.mrb[0].mxu0
      %1398 = vmatprep.mubr.f32.mxu0 0.0
      %1399 = vmatmul.mubr.f32.gmra.mrb[0].mxu0 %v838
      %v1400 = vpop.f32.mrb[0].mxu0
      %v1401 = vadd.f32 %v1256, %v1400
      %v1402 = vpop.f32.mrb[0].mxu0
      %1403 = vmatprep.mubr.f32.mxu0 0.0
      %1404 = vmatmul.mubr.f32.gmra.mrb[0].mxu0 %v841
      %v1405 = vpop.f32.mrb[0].mxu0
      %v1406 = vadd.f32 %v1261, %v1405
      %v1407 = vpop.f32.mrb[0].mxu0
      %1408 = vmatprep.mubr.f32.mxu0 0.0
      %1409 = vmatmul.mubr.f32.gmra.mrb[0].mxu0 %v844
      %v1410 = vpop.f32.mrb[0].mxu0
      %v1411 = vadd.f32 %v1266, %v1410
      %v1412 = vpop.f32.mrb[0].mxu0
      %1413 = vmatprep.mubr.f32.mxu0 0.0
      %1414 = vmatmul.mubr.f32.gmra.mrb[0].mxu0 %v847
      %v1415 = vpop.f32.mrb[0].mxu0
      %v1416 = vadd.f32 %v1271, %v1415
      %v1417 = vpop.f32.mrb[0].mxu0
      %1418 = vmatprep.mubr.f32.mxu0 0.0
      %1419 = vmatmul.mubr.f32.gmra.mrb[0].mxu0 %v850
      %v1420 = vpop.f32.mrb[0].mxu0
      %v1421 = vadd.f32 %v1276, %v1420
      %v1422 = vpop.f32.mrb[0].mxu0
      %1423 = vmatprep.mubr.f32.mxu0 0.0
      %1424 = vmatmul.mubr.f32.gmra.mrb[0].mxu0 %v853
      %v1425 = vpop.f32.mrb[0].mxu0
      %v1426 = vadd.f32 %v1281, %v1425
      %v1427 = vpop.f32.mrb[0].mxu0
      %1428 = vmatprep.mubr.f32.mxu0 0.0
      %1429 = vmatmul.mubr.f32.gmra.mrb[0].mxu0 %v856
      %v1430 = vpop.f32.mrb[0].mxu0
      %v1431 = vadd.f32 %v1286, %v1430
      %v1432 = vpop.f32.mrb[0].mxu0
      %1433 = vmatprep.mubr.f32.mxu0 0.0
      %1434 = vmatmul.mubr.f32.gmra.mrb[0].mxu0 %v859
      %v1435 = vpop.f32.mrb[0].mxu0
      %v1436 = vadd.f32 %v1291, %v1435
      %v1437 = vpop.f32.mrb[0].mxu0
      %1438 = vmatprep.mubr.f32.mxu0 0.0
      %1439 = vmatmul.mubr.f32.gmra.mrb[0].mxu0 %v862
      %v1440 = vpop.f32.mrb[0].mxu0
      %v1441 = vadd.f32 %v1296, %v1440
      %v1442 = vpop.f32.mrb[0].mxu0
      %1443 = vdwg.mxu0
      %v1444 = vtanh.pop %v1366
      %v1445 = vtanh.pop %v1371
      %v1446 = vtanh.pop %v1376
      %v1447 = vtanh.pop %v1381
      %v1448 = vtanh.pop %v1386
      %v1449 = vtanh.pop %v1391
      %v1450 = vtanh.pop %v1396
      %v1451 = vtanh.pop %v1401
      %v1452 = vtanh.pop %v1406
      %v1453 = vtanh.pop %v1411
      %v1454 = vtanh.pop %v1416
      %v1455 = vtanh.pop %v1421
      %v1456 = vtanh.pop %v1426
      %v1457 = vtanh.pop %v1431
      %v1458 = vtanh.pop %v1436
      %v1459 = vtanh.pop %v1441
      %v1460 = vld [vmem:[%s2] sm:$0xff]
      %v1461 = vld [vmem:[%s2 + $0x8] sm:$0xff]
      %v1462 = vld [vmem:[%s2 + $0x10] sm:$0xff]
      %v1463 = vld [vmem:[%s2 + $0x18] sm:$0xff]
      %v1464 = vld [vmem:[%s2 + $0x20] sm:$0xff]
      %v1465 = vld [vmem:[%s2 + $0x28] sm:$0xff]
      %v1466 = vld [vmem:[%s2 + $0x30] sm:$0xff]
      %v1467 = vld [vmem:[%s2 + $0x38] sm:$0xff]
      %v1468 = vld [vmem:[%s2 + $0x40] sm:$0xff]
      %v1469 = vld [vmem:[%s2 + $0x48] sm:$0xff]
      %v1470 = vld [vmem:[%s2 + $0x50] sm:$0xff]
      %v1471 = vld [vmem:[%s2 + $0x58] sm:$0xff]
      %v1472 = vld [vmem:[%s2 + $0x60] sm:$0xff]
      %v1473 = vld [vmem:[%s2 + $0x68] sm:$0xff]
      %v1474 = vld [vmem:[%s2 + $0x70] sm:$0xff]
      %v1475 = vld [vmem:[%s2 + $0x78] sm:$0xff]
      %v1476 = vld [vmem:[%s10] sm:$0x1]
      %v1478 = vlaneseq
      %v1479 = vshrl.u32 %v1478, 7
      %v1480 = vsub.s32 0, %v1479
      %v1481 = vrot.slane %v1476, %v1480
      %1483 = vmatprep.subr.mxu0 0.0
      %1484 = vmatpush1.msra.mxu0 %v1460
      %1485 = vmatprep.subr.mxu0 0.0
      %1486 = vmatpush1.msra.mxu0 %v1461
      %1487 = vmatprep.subr.mxu0 0.0
      %1488 = vmatpush1.msra.mxu0 %v1462
      %1489 = vmatprep.subr.mxu0 0.0
      %1490 = vmatpush1.msra.mxu0 %v1463
      %1491 = vmatprep.subr.mxu0 0.0
      %1492 = vmatpush1.msra.mxu0 %v1464
      %1493 = vmatprep.subr.mxu0 0.0
      %1494 = vmatpush1.msra.mxu0 %v1465
      %1495 = vmatprep.subr.mxu0 0.0
      %1496 = vmatpush1.msra.mxu0 %v1466
      %1497 = vmatprep.subr.mxu0 0.0
      %1498 = vmatpush1.msra.mxu0 %v1467
      %1499 = vmatprep.subr.mxu0 0.0
      %1500 = vmatpush1.msra.mxu0 %v1468
      %1501 = vmatprep.subr.mxu0 0.0
      %1502 = vmatpush1.msra.mxu0 %v1469
      %1503 = vmatprep.subr.mxu0 0.0
      %1504 = vmatpush1.msra.mxu0 %v1470
      %1505 = vmatprep.subr.mxu0 0.0
      %1506 = vmatpush1.msra.mxu0 %v1471
      %1507 = vmatprep.subr.mxu0 0.0
      %1508 = vmatpush1.msra.mxu0 %v1472
      %1509 = vmatprep.subr.mxu0 0.0
      %1510 = vmatpush1.msra.mxu0 %v1473
      %1511 = vmatprep.subr.mxu0 0.0
      %1512 = vmatpush1.msra.mxu0 %v1474
      %1513 = vmatprep.subr.mxu0 0.0
      %1514 = vmatpush1.msra.mxu0 %v1475
      %1515 = vmatprep.subr.mxu0 0.0
      %1516 = vmatpush1.msra.mxu0 0.0
      %1517 = vmatprep.subr.mxu0 0.0
      %1518 = vmatpush1.msra.mxu0 0.0
      %1519 = vmatprep.subr.mxu0 0.0
      %1520 = vmatpush1.msra.mxu0 0.0
      %1521 = vmatprep.subr.mxu0 0.0
      %1522 = vmatpush1.msra.mxu0 0.0
      %1523 = vmatprep.subr.mxu0 0.0
      %1524 = vmatpush1.msra.mxu0 0.0
      %1525 = vmatprep.subr.mxu0 0.0
      %1526 = vmatpush1.msra.mxu0 0.0
      %1527 = vmatprep.subr.mxu0 0.0
      %1528 = vmatpush1.msra.mxu0 0.0
      %1529 = vmatprep.subr.mxu0 0.0
      %1530 = vmatpush1.msra.mxu0 0.0
      %1531 = vmatprep.subr.mxu0 0.0
      %1532 = vmatpush1.msra.mxu0 0.0
      %1533 = vmatprep.subr.mxu0 0.0
      %1534 = vmatpush1.msra.mxu0 0.0
      %1535 = vmatprep.subr.mxu0 0.0
      %1536 = vmatpush1.msra.mxu0 0.0
      %1537 = vmatprep.subr.mxu0 0.0
      %1538 = vmatpush1.msra.mxu0 0.0
      %1539 = vmatprep.subr.mxu0 0.0
      %1540 = vmatpush1.msra.mxu0 0.0
      %1541 = vmatprep.subr.mxu0 0.0
      %1542 = vmatpush1.msra.mxu0 0.0
      %1543 = vmatprep.subr.mxu0 0.0
      %1544 = vmatpush1.msra.mxu0 0.0
      %1545 = vmatprep.subr.mxu0 0.0
      %1546 = vmatpush1.msra.mxu0 0.0
      %1547 = vmatprep.mubr.f32.mxu0 0.0
      %1548 = vmatmul.mubr.f32.gmra.mrb[0].mxu0 %v1444
      %v1549 = vpop.f32.mrb[0].mxu0
      %v1550 = vadd.f32 %v1481, %v1549
      %v1551 = vpop.f32.mrb[0].mxu0
      %1552 = vmatprep.mubr.f32.mxu0 0.0
      %1553 = vmatmul.mubr.f32.gmra.mrb[0].mxu0 %v1445
      %v1554 = vpop.f32.mrb[0].mxu0
      %v1555 = vadd.f32 %v1481, %v1554
      %v1556 = vpop.f32.mrb[0].mxu0
      %1557 = vmatprep.mubr.f32.mxu0 0.0
      %1558 = vmatmul.mubr.f32.gmra.mrb[0].mxu0 %v1446
      %v1559 = vpop.f32.mrb[0].mxu0
      %v1560 = vadd.f32 %v1481, %v1559
      %v1561 = vpop.f32.mrb[0].mxu0
      %1562 = vmatprep.mubr.f32.mxu0 0.0
      %1563 = vmatmul.mubr.f32.gmra.mrb[0].mxu0 %v1447
      %v1564 = vpop.f32.mrb[0].mxu0
      %v1565 = vadd.f32 %v1481, %v1564
      %v1566 = vpop.f32.mrb[0].mxu0
      %1567 = vmatprep.mubr.f32.mxu0 0.0
      %1568 = vmatmul.mubr.f32.gmra.mrb[0].mxu0 %v1448
      %v1569 = vpop.f32.mrb[0].mxu0
      %v1570 = vadd.f32 %v1481, %v1569
      %v1571 = vpop.f32.mrb[0].mxu0
      %1572 = vmatprep.mubr.f32.mxu0 0.0
      %1573 = vmatmul.mubr.f32.gmra.mrb[0].mxu0 %v1449
      %v1574 = vpop.f32.mrb[0].mxu0
      %v1575 = vadd.f32 %v1481, %v1574
      %v1576 = vpop.f32.mrb[0].mxu0
      %1577 = vmatprep.mubr.f32.mxu0 0.0
      %1578 = vmatmul.mubr.f32.gmra.mrb[0].mxu0 %v1450
      %v1579 = vpop.f32.mrb[0].mxu0
      %v1580 = vadd.f32 %v1481, %v1579
      %v1581 = vpop.f32.mrb[0].mxu0
      %1582 = vmatprep.mubr.f32.mxu0 0.0
      %1583 = vmatmul.mubr.f32.gmra.mrb[0].mxu0 %v1451
      %v1584 = vpop.f32.mrb[0].mxu0
      %v1585 = vadd.f32 %v1481, %v1584
      %v1586 = vpop.f32.mrb[0].mxu0
      %1587 = vmatprep.mubr.f32.mxu0 0.0
      %1588 = vmatmul.mubr.f32.gmra.mrb[0].mxu0 %v1452
      %v1589 = vpop.f32.mrb[0].mxu0
      %v1590 = vadd.f32 %v1481, %v1589
      %v1591 = vpop.f32.mrb[0].mxu0
      %1592 = vmatprep.mubr.f32.mxu0 0.0
      %1593 = vmatmul.mubr.f32.gmra.mrb[0].mxu0 %v1453
      %v1594 = vpop.f32.mrb[0].mxu0
      %v1595 = vadd.f32 %v1481, %v1594
      %v1596 = vpop.f32.mrb[0].mxu0
      %1597 = vmatprep.mubr.f32.mxu0 0.0
      %1598 = vmatmul.mubr.f32.gmra.mrb[0].mxu0 %v1454
      %v1599 = vpop.f32.mrb[0].mxu0
      %v1600 = vadd.f32 %v1481, %v1599
      %v1601 = vpop.f32.mrb[0].mxu0
      %1602 = vmatprep.mubr.f32.mxu0 0.0
      %1603 = vmatmul.mubr.f32.gmra.mrb[0].mxu0 %v1455
      %v1604 = vpop.f32.mrb[0].mxu0
      %v1605 = vadd.f32 %v1481, %v1604
      %v1606 = vpop.f32.mrb[0].mxu0
      %1607 = vmatprep.mubr.f32.mxu0 0.0
      %1608 = vmatmul.mubr.f32.gmra.mrb[0].mxu0 %v1456
      %v1609 = vpop.f32.mrb[0].mxu0
      %v1610 = vadd.f32 %v1481, %v1609
      %v1611 = vpop.f32.mrb[0].mxu0
      %1612 = vmatprep.mubr.f32.mxu0 0.0
      %1613 = vmatmul.mubr.f32.gmra.mrb[0].mxu0 %v1457
      %v1614 = vpop.f32.mrb[0].mxu0
      %v1615 = vadd.f32 %v1481, %v1614
      %v1616 = vpop.f32.mrb[0].mxu0
      %1617 = vmatprep.mubr.f32.mxu0 0.0
      %1618 = vmatmul.mubr.f32.gmra.mrb[0].mxu0 %v1458
      %v1619 = vpop.f32.mrb[0].mxu0
      %v1620 = vadd.f32 %v1481, %v1619
      %v1621 = vpop.f32.mrb[0].mxu0
      %1622 = vmatprep.mubr.f32.mxu0 0.0
      %1623 = vmatmul.mubr.f32.gmra.mrb[0].mxu0 %v1459
      %v1624 = vpop.f32.mrb[0].mxu0
      %v1625 = vadd.f32 %v1481, %v1624
      %v1626 = vpop.f32.mrb[0].mxu0
      %1627 = vdwg.mxu0
      %v1628 = vtanh.pop %v1550
      %v1629 = vtanh.pop %v1555
      %v1630 = vtanh.pop %v1560
      %v1631 = vtanh.pop %v1565
      %v1632 = vtanh.pop %v1570
      %v1633 = vtanh.pop %v1575
      %v1634 = vtanh.pop %v1580
      %v1635 = vtanh.pop %v1585
      %v1636 = vtanh.pop %v1590
      %v1637 = vtanh.pop %v1595
      %v1638 = vtanh.pop %v1600
      %v1639 = vtanh.pop %v1605
      %v1640 = vtanh.pop %v1610
      %v1641 = vtanh.pop %v1615
      %v1642 = vtanh.pop %v1620
      %v1643 = vtanh.pop %v1625
      %v1644 = vld [vmem:[%s3] sm:$0xff]
      %v1645 = vld [vmem:[%s3 + $0x8] sm:$0xff]
      %v1646 = vld [vmem:[%s3 + $0x10] sm:$0xff]
      %v1647 = vld [vmem:[%s3 + $0x18] sm:$0xff]
      %v1648 = vld [vmem:[%s3 + $0x20] sm:$0xff]
      %v1649 = vld [vmem:[%s3 + $0x28] sm:$0xff]
      %v1650 = vld [vmem:[%s3 + $0x30] sm:$0xff]
      %v1651 = vld [vmem:[%s3 + $0x38] sm:$0xff]
      %v1652 = vld [vmem:[%s3 + $0x40] sm:$0xff]
      %v1653 = vld [vmem:[%s3 + $0x48] sm:$0xff]
      %v1654 = vld [vmem:[%s3 + $0x50] sm:$0xff]
      %v1655 = vld [vmem:[%s3 + $0x58] sm:$0xff]
      %v1656 = vld [vmem:[%s3 + $0x60] sm:$0xff]
      %v1657 = vld [vmem:[%s3 + $0x68] sm:$0xff]
      %v1658 = vld [vmem:[%s3 + $0x70] sm:$0xff]
      %v1659 = vld [vmem:[%s3 + $0x78] sm:$0xff]
      %v1660 = vld [vmem:[%s11] sm:$0x1]
      %v1662 = vlaneseq
      %v1663 = vshrl.u32 %v1662, 7
      %v1664 = vsub.s32 0, %v1663
      %v1665 = vrot.slane %v1660, %v1664
      %1667 = vmatprep.subr.mxu0 0.0
      %1668 = vmatpush1.msra.mxu0 %v1644
      %1669 = vmatprep.subr.mxu0 0.0
      %1670 = vmatpush1.msra.mxu0 %v1645
      %1671 = vmatprep.subr.mxu0 0.0
      %1672 = vmatpush1.msra.mxu0 %v1646
      %1673 = vmatprep.subr.mxu0 0.0
      %1674 = vmatpush1.msra.mxu0 %v1647
      %1675 = vmatprep.subr.mxu0 0.0
      %1676 = vmatpush1.msra.mxu0 %v1648
      %1677 = vmatprep.subr.mxu0 0.0
      %1678 = vmatpush1.msra.mxu0 %v1649
      %1679 = vmatprep.subr.mxu0 0.0
      %1680 = vmatpush1.msra.mxu0 %v1650
      %1681 = vmatprep.subr.mxu0 0.0
      %1682 = vmatpush1.msra.mxu0 %v1651
      %1683 = vmatprep.subr.mxu0 0.0
      %1684 = vmatpush1.msra.mxu0 %v1652
      %1685 = vmatprep.subr.mxu0 0.0
      %1686 = vmatpush1.msra.mxu0 %v1653
      %1687 = vmatprep.subr.mxu0 0.0
      %1688 = vmatpush1.msra.mxu0 %v1654
      %1689 = vmatprep.subr.mxu0 0.0
      %1690 = vmatpush1.msra.mxu0 %v1655
      %1691 = vmatprep.subr.mxu0 0.0
      %1692 = vmatpush1.msra.mxu0 %v1656
      %1693 = vmatprep.subr.mxu0 0.0
      %1694 = vmatpush1.msra.mxu0 %v1657
      %1695 = vmatprep.subr.mxu0 0.0
      %1696 = vmatpush1.msra.mxu0 %v1658
      %1697 = vmatprep.subr.mxu0 0.0
      %1698 = vmatpush1.msra.mxu0 %v1659
      %1699 = vmatprep.subr.mxu0 0.0
      %1700 = vmatpush1.msra.mxu0 0.0
      %1701 = vmatprep.subr.mxu0 0.0
      %1702 = vmatpush1.msra.mxu0 0.0
      %1703 = vmatprep.subr.mxu0 0.0
      %1704 = vmatpush1.msra.mxu0 0.0
      %1705 = vmatprep.subr.mxu0 0.0
      %1706 = vmatpush1.msra.mxu0 0.0
      %1707 = vmatprep.subr.mxu0 0.0
      %1708 = vmatpush1.msra.mxu0 0.0
      %1709 = vmatprep.subr.mxu0 0.0
      %1710 = vmatpush1.msra.mxu0 0.0
      %1711 = vmatprep.subr.mxu0 0.0
      %1712 = vmatpush1.msra.mxu0 0.0
      %1713 = vmatprep.subr.mxu0 0.0
      %1714 = vmatpush1.msra.mxu0 0.0
      %1715 = vmatprep.subr.mxu0 0.0
      %1716 = vmatpush1.msra.mxu0 0.0
      %1717 = vmatprep.subr.mxu0 0.0
      %1718 = vmatpush1.msra.mxu0 0.0
      %1719 = vmatprep.subr.mxu0 0.0
      %1720 = vmatpush1.msra.mxu0 0.0
      %1721 = vmatprep.subr.mxu0 0.0
      %1722 = vmatpush1.msra.mxu0 0.0
      %1723 = vmatprep.subr.mxu0 0.0
      %1724 = vmatpush1.msra.mxu0 0.0
      %1725 = vmatprep.subr.mxu0 0.0
      %1726 = vmatpush1.msra.mxu0 0.0
      %1727 = vmatprep.subr.mxu0 0.0
      %1728 = vmatpush1.msra.mxu0 0.0
      %1729 = vmatprep.subr.mxu0 0.0
      %1730 = vmatpush1.msra.mxu0 0.0
      %1731 = vmatprep.mubr.f32.mxu0 0.0
      %1732 = vmatmul.mubr.f32.gmra.mrb[0].mxu0 %v1628
      %v1733 = vpop.f32.mrb[0].mxu0
      %v1734 = vadd.f32 %v1665, %v1733
      %v1735 = vpop.f32.mrb[0].mxu0
      %1736 = vmatprep.mubr.f32.mxu0 0.0
      %1737 = vmatmul.mubr.f32.gmra.mrb[0].mxu0 %v1629
      %v1738 = vpop.f32.mrb[0].mxu0
      %v1739 = vadd.f32 %v1665, %v1738
      %v1740 = vpop.f32.mrb[0].mxu0
      %1741 = vmatprep.mubr.f32.mxu0 0.0
      %1742 = vmatmul.mubr.f32.gmra.mrb[0].mxu0 %v1630
      %v1743 = vpop.f32.mrb[0].mxu0
      %v1744 = vadd.f32 %v1665, %v1743
      %v1745 = vpop.f32.mrb[0].mxu0
      %1746 = vmatprep.mubr.f32.mxu0 0.0
      %1747 = vmatmul.mubr.f32.gmra.mrb[0].mxu0 %v1631
      %v1748 = vpop.f32.mrb[0].mxu0
      %v1749 = vadd.f32 %v1665, %v1748
      %v1750 = vpop.f32.mrb[0].mxu0
      %1751 = vmatprep.mubr.f32.mxu0 0.0
      %1752 = vmatmul.mubr.f32.gmra.mrb[0].mxu0 %v1632
      %v1753 = vpop.f32.mrb[0].mxu0
      %v1754 = vadd.f32 %v1665, %v1753
      %v1755 = vpop.f32.mrb[0].mxu0
      %1756 = vmatprep.mubr.f32.mxu0 0.0
      %1757 = vmatmul.mubr.f32.gmra.mrb[0].mxu0 %v1633
      %v1758 = vpop.f32.mrb[0].mxu0
      %v1759 = vadd.f32 %v1665, %v1758
      %v1760 = vpop.f32.mrb[0].mxu0
      %1761 = vmatprep.mubr.f32.mxu0 0.0
      %1762 = vmatmul.mubr.f32.gmra.mrb[0].mxu0 %v1634
      %v1763 = vpop.f32.mrb[0].mxu0
      %v1764 = vadd.f32 %v1665, %v1763
      %v1765 = vpop.f32.mrb[0].mxu0
      %1766 = vmatprep.mubr.f32.mxu0 0.0
      %1767 = vmatmul.mubr.f32.gmra.mrb[0].mxu0 %v1635
      %v1768 = vpop.f32.mrb[0].mxu0
      %v1769 = vadd.f32 %v1665, %v1768
      %v1770 = vpop.f32.mrb[0].mxu0
      %1771 = vmatprep.mubr.f32.mxu0 0.0
      %1772 = vmatmul.mubr.f32.gmra.mrb[0].mxu0 %v1636
      %v1773 = vpop.f32.mrb[0].mxu0
      %v1774 = vadd.f32 %v1665, %v1773
      %v1775 = vpop.f32.mrb[0].mxu0
      %1776 = vmatprep.mubr.f32.mxu0 0.0
      %1777 = vmatmul.mubr.f32.gmra.mrb[0].mxu0 %v1637
      %v1778 = vpop.f32.mrb[0].mxu0
      %v1779 = vadd.f32 %v1665, %v1778
      %v1780 = vpop.f32.mrb[0].mxu0
      %1781 = vmatprep.mubr.f32.mxu0 0.0
      %1782 = vmatmul.mubr.f32.gmra.mrb[0].mxu0 %v1638
      %v1783 = vpop.f32.mrb[0].mxu0
      %v1784 = vadd.f32 %v1665, %v1783
      %v1785 = vpop.f32.mrb[0].mxu0
      %1786 = vmatprep.mubr.f32.mxu0 0.0
      %1787 = vmatmul.mubr.f32.gmra.mrb[0].mxu0 %v1639
      %v1788 = vpop.f32.mrb[0].mxu0
      %v1789 = vadd.f32 %v1665, %v1788
      %v1790 = vpop.f32.mrb[0].mxu0
      %1791 = vmatprep.mubr.f32.mxu0 0.0
      %1792 = vmatmul.mubr.f32.gmra.mrb[0].mxu0 %v1640
      %v1793 = vpop.f32.mrb[0].mxu0
      %v1794 = vadd.f32 %v1665, %v1793
      %v1795 = vpop.f32.mrb[0].mxu0
      %1796 = vmatprep.mubr.f32.mxu0 0.0
      %1797 = vmatmul.mubr.f32.gmra.mrb[0].mxu0 %v1641
      %v1798 = vpop.f32.mrb[0].mxu0
      %v1799 = vadd.f32 %v1665, %v1798
      %v1800 = vpop.f32.mrb[0].mxu0
      %1801 = vmatprep.mubr.f32.mxu0 0.0
      %1802 = vmatmul.mubr.f32.gmra.mrb[0].mxu0 %v1642
      %v1803 = vpop.f32.mrb[0].mxu0
      %v1804 = vadd.f32 %v1665, %v1803
      %v1805 = vpop.f32.mrb[0].mxu0
      %1806 = vmatprep.mubr.f32.mxu0 0.0
      %1807 = vmatmul.mubr.f32.gmra.mrb[0].mxu0 %v1643
      %v1808 = vpop.f32.mrb[0].mxu0
      %v1809 = vadd.f32 %v1665, %v1808
      %v1810 = vpop.f32.mrb[0].mxu0
      %1811 = vdwg.mxu0
      %v1812 = vtanh.pop %v1734
      %v1813 = vtanh.pop %v1739
      %v1814 = vtanh.pop %v1744
      %v1815 = vtanh.pop %v1749
      %v1816 = vtanh.pop %v1754
      %v1817 = vtanh.pop %v1759
      %v1818 = vtanh.pop %v1764
      %v1819 = vtanh.pop %v1769
      %v1820 = vtanh.pop %v1774
      %v1821 = vtanh.pop %v1779
      %v1822 = vtanh.pop %v1784
      %v1823 = vtanh.pop %v1789
      %v1824 = vtanh.pop %v1794
      %v1825 = vtanh.pop %v1799
      %v1826 = vtanh.pop %v1804
      %v1827 = vtanh.pop %v1809
      %v1828 = vld [vmem:[%s4] sm:$0xff]
      %v1829 = vld [vmem:[%s4 + $0x8] sm:$0xff]
      %v1830 = vld [vmem:[%s4 + $0x10] sm:$0xff]
      %v1831 = vld [vmem:[%s4 + $0x18] sm:$0xff]
      %v1832 = vld [vmem:[%s4 + $0x20] sm:$0xff]
      %v1833 = vld [vmem:[%s4 + $0x28] sm:$0xff]
      %v1834 = vld [vmem:[%s4 + $0x30] sm:$0xff]
      %v1835 = vld [vmem:[%s4 + $0x38] sm:$0xff]
      %v1836 = vld [vmem:[%s4 + $0x40] sm:$0xff]
      %v1837 = vld [vmem:[%s4 + $0x48] sm:$0xff]
      %v1838 = vld [vmem:[%s4 + $0x50] sm:$0xff]
      %v1839 = vld [vmem:[%s4 + $0x58] sm:$0xff]
      %v1840 = vld [vmem:[%s4 + $0x60] sm:$0xff]
      %v1841 = vld [vmem:[%s4 + $0x68] sm:$0xff]
      %v1842 = vld [vmem:[%s4 + $0x70] sm:$0xff]
      %v1843 = vld [vmem:[%s4 + $0x78] sm:$0xff]
      %v1844 = vld [vmem:[%s12] sm:$0x1]
      %v1846 = vlaneseq
      %v1847 = vshrl.u32 %v1846, 7
      %v1848 = vsub.s32 0, %v1847
      %v1849 = vrot.slane %v1844, %v1848
      %1851 = vmatprep.subr.mxu0 0.0
      %1852 = vmatpush1.msra.mxu0 %v1828
      %1853 = vmatprep.subr.mxu0 0.0
      %1854 = vmatpush1.msra.mxu0 %v1829
      %1855 = vmatprep.subr.mxu0 0.0
      %1856 = vmatpush1.msra.mxu0 %v1830
      %1857 = vmatprep.subr.mxu0 0.0
      %1858 = vmatpush1.msra.mxu0 %v1831
      %1859 = vmatprep.subr.mxu0 0.0
      %1860 = vmatpush1.msra.mxu0 %v1832
      %1861 = vmatprep.subr.mxu0 0.0
      %1862 = vmatpush1.msra.mxu0 %v1833
      %1863 = vmatprep.subr.mxu0 0.0
      %1864 = vmatpush1.msra.mxu0 %v1834
      %1865 = vmatprep.subr.mxu0 0.0
      %1866 = vmatpush1.msra.mxu0 %v1835
      %1867 = vmatprep.subr.mxu0 0.0
      %1868 = vmatpush1.msra.mxu0 %v1836
      %1869 = vmatprep.subr.mxu0 0.0
      %1870 = vmatpush1.msra.mxu0 %v1837
      %1871 = vmatprep.subr.mxu0 0.0
      %1872 = vmatpush1.msra.mxu0 %v1838
      %1873 = vmatprep.subr.mxu0 0.0
      %1874 = vmatpush1.msra.mxu0 %v1839
      %1875 = vmatprep.subr.mxu0 0.0
      %1876 = vmatpush1.msra.mxu0 %v1840
      %1877 = vmatprep.subr.mxu0 0.0
      %1878 = vmatpush1.msra.mxu0 %v1841
      %1879 = vmatprep.subr.mxu0 0.0
      %1880 = vmatpush1.msra.mxu0 %v1842
      %1881 = vmatprep.subr.mxu0 0.0
      %1882 = vmatpush1.msra.mxu0 %v1843
      %1883 = vmatprep.subr.mxu0 0.0
      %1884 = vmatpush1.msra.mxu0 0.0
      %1885 = vmatprep.subr.mxu0 0.0
      %1886 = vmatpush1.msra.mxu0 0.0
      %1887 = vmatprep.subr.mxu0 0.0
      %1888 = vmatpush1.msra.mxu0 0.0
      %1889 = vmatprep.subr.mxu0 0.0
      %1890 = vmatpush1.msra.mxu0 0.0
      %1891 = vmatprep.subr.mxu0 0.0
      %1892 = vmatpush1.msra.mxu0 0.0
      %1893 = vmatprep.subr.mxu0 0.0
      %1894 = vmatpush1.msra.mxu0 0.0
      %1895 = vmatprep.subr.mxu0 0.0
      %1896 = vmatpush1.msra.mxu0 0.0
      %1897 = vmatprep.subr.mxu0 0.0
      %1898 = vmatpush1.msra.mxu0 0.0
      %1899 = vmatprep.subr.mxu0 0.0
      %1900 = vmatpush1.msra.mxu0 0.0
      %1901 = vmatprep.subr.mxu0 0.0
      %1902 = vmatpush1.msra.mxu0 0.0
      %1903 = vmatprep.subr.mxu0 0.0
      %1904 = vmatpush1.msra.mxu0 0.0
      %1905 = vmatprep.subr.mxu0 0.0
      %1906 = vmatpush1.msra.mxu0 0.0
      %1907 = vmatprep.subr.mxu0 0.0
      %1908 = vmatpush1.msra.mxu0 0.0
      %1909 = vmatprep.subr.mxu0 0.0
      %1910 = vmatpush1.msra.mxu0 0.0
      %1911 = vmatprep.subr.mxu0 0.0
      %1912 = vmatpush1.msra.mxu0 0.0
      %1913 = vmatprep.subr.mxu0 0.0
      %1914 = vmatpush1.msra.mxu0 0.0
      %1915 = vmatprep.mubr.f32.mxu0 0.0
      %1916 = vmatmul.mubr.f32.gmra.mrb[0].mxu0 %v1812
      %v1917 = vpop.f32.mrb[0].mxu0
      %v1918 = vadd.f32 %v1849, %v1917
      %v1919 = vpop.f32.mrb[0].mxu0
      %1920 = vmatprep.mubr.f32.mxu0 0.0
      %1921 = vmatmul.mubr.f32.gmra.mrb[0].mxu0 %v1813
      %v1922 = vpop.f32.mrb[0].mxu0
      %v1923 = vadd.f32 %v1849, %v1922
      %v1924 = vpop.f32.mrb[0].mxu0
      %1925 = vmatprep.mubr.f32.mxu0 0.0
      %1926 = vmatmul.mubr.f32.gmra.mrb[0].mxu0 %v1814
      %v1927 = vpop.f32.mrb[0].mxu0
      %v1928 = vadd.f32 %v1849, %v1927
      %v1929 = vpop.f32.mrb[0].mxu0
      %1930 = vmatprep.mubr.f32.mxu0 0.0
      %1931 = vmatmul.mubr.f32.gmra.mrb[0].mxu0 %v1815
      %v1932 = vpop.f32.mrb[0].mxu0
      %v1933 = vadd.f32 %v1849, %v1932
      %v1934 = vpop.f32.mrb[0].mxu0
      %1935 = vmatprep.mubr.f32.mxu0 0.0
      %1936 = vmatmul.mubr.f32.gmra.mrb[0].mxu0 %v1816
      %v1937 = vpop.f32.mrb[0].mxu0
      %v1938 = vadd.f32 %v1849, %v1937
      %v1939 = vpop.f32.mrb[0].mxu0
      %1940 = vmatprep.mubr.f32.mxu0 0.0
      %1941 = vmatmul.mubr.f32.gmra.mrb[0].mxu0 %v1817
      %v1942 = vpop.f32.mrb[0].mxu0
      %v1943 = vadd.f32 %v1849, %v1942
      %v1944 = vpop.f32.mrb[0].mxu0
      %1945 = vmatprep.mubr.f32.mxu0 0.0
      %1946 = vmatmul.mubr.f32.gmra.mrb[0].mxu0 %v1818
      %v1947 = vpop.f32.mrb[0].mxu0
      %v1948 = vadd.f32 %v1849, %v1947
      %v1949 = vpop.f32.mrb[0].mxu0
      %1950 = vmatprep.mubr.f32.mxu0 0.0
      %1951 = vmatmul.mubr.f32.gmra.mrb[0].mxu0 %v1819
      %v1952 = vpop.f32.mrb[0].mxu0
      %v1953 = vadd.f32 %v1849, %v1952
      %v1954 = vpop.f32.mrb[0].mxu0
      %1955 = vmatprep.mubr.f32.mxu0 0.0
      %1956 = vmatmul.mubr.f32.gmra.mrb[0].mxu0 %v1820
      %v1957 = vpop.f32.mrb[0].mxu0
      %v1958 = vadd.f32 %v1849, %v1957
      %v1959 = vpop.f32.mrb[0].mxu0
      %1960 = vmatprep.mubr.f32.mxu0 0.0
      %1961 = vmatmul.mubr.f32.gmra.mrb[0].mxu0 %v1821
      %v1962 = vpop.f32.mrb[0].mxu0
      %v1963 = vadd.f32 %v1849, %v1962
      %v1964 = vpop.f32.mrb[0].mxu0
      %1965 = vmatprep.mubr.f32.mxu0 0.0
      %1966 = vmatmul.mubr.f32.gmra.mrb[0].mxu0 %v1822
      %v1967 = vpop.f32.mrb[0].mxu0
      %v1968 = vadd.f32 %v1849, %v1967
      %v1969 = vpop.f32.mrb[0].mxu0
      %1970 = vmatprep.mubr.f32.mxu0 0.0
      %1971 = vmatmul.mubr.f32.gmra.mrb[0].mxu0 %v1823
      %v1972 = vpop.f32.mrb[0].mxu0
      %v1973 = vadd.f32 %v1849, %v1972
      %v1974 = vpop.f32.mrb[0].mxu0
      %1975 = vmatprep.mubr.f32.mxu0 0.0
      %1976 = vmatmul.mubr.f32.gmra.mrb[0].mxu0 %v1824
      %v1977 = vpop.f32.mrb[0].mxu0
      %v1978 = vadd.f32 %v1849, %v1977
      %v1979 = vpop.f32.mrb[0].mxu0
      %1980 = vmatprep.mubr.f32.mxu0 0.0
      %1981 = vmatmul.mubr.f32.gmra.mrb[0].mxu0 %v1825
      %v1982 = vpop.f32.mrb[0].mxu0
      %v1983 = vadd.f32 %v1849, %v1982
      %v1984 = vpop.f32.mrb[0].mxu0
      %1985 = vmatprep.mubr.f32.mxu0 0.0
      %1986 = vmatmul.mubr.f32.gmra.mrb[0].mxu0 %v1826
      %v1987 = vpop.f32.mrb[0].mxu0
      %v1988 = vadd.f32 %v1849, %v1987
      %v1989 = vpop.f32.mrb[0].mxu0
      %1990 = vmatprep.mubr.f32.mxu0 0.0
      %1991 = vmatmul.mubr.f32.gmra.mrb[0].mxu0 %v1827
      %v1992 = vpop.f32.mrb[0].mxu0
      %v1993 = vadd.f32 %v1849, %v1992
      %v1994 = vpop.f32.mrb[0].mxu0
      %1995 = vdwg.mxu0
      %1996 = vst [vmem:[%s589] sm:$0xff] %v1918
      %1997 = vst [vmem:[%s589 + $0x8] sm:$0xff] %v1923
      %1998 = vst [vmem:[%s589 + $0x10] sm:$0xff] %v1928
      %1999 = vst [vmem:[%s589 + $0x18] sm:$0xff] %v1933
      %2000 = vst [vmem:[%s589 + $0x20] sm:$0xff] %v1938
      %2001 = vst [vmem:[%s589 + $0x28] sm:$0xff] %v1943
      %2002 = vst [vmem:[%s589 + $0x30] sm:$0xff] %v1948
      %2003 = vst [vmem:[%s589 + $0x38] sm:$0xff] %v1953
      %2004 = vst [vmem:[%s589 + $0x40] sm:$0xff] %v1958
      %2005 = vst [vmem:[%s589 + $0x48] sm:$0xff] %v1963
      %2006 = vst [vmem:[%s589 + $0x50] sm:$0xff] %v1968
      %2007 = vst [vmem:[%s589 + $0x58] sm:$0xff] %v1973
      %2008 = vst [vmem:[%s589 + $0x60] sm:$0xff] %v1978
      %2009 = vst [vmem:[%s589 + $0x68] sm:$0xff] %v1983
      %2010 = vst [vmem:[%s589 + $0x70] sm:$0xff] %v1988
      %2011 = vst [vmem:[%s589 + $0x78] sm:$0xff] %v1993
      %v2012 = vld [vmem:[%s5] sm:$0xff]
      %v2013 = vld [vmem:[%s5 + $0x8] sm:$0xff]
      %v2014 = vld [vmem:[%s5 + $0x10] sm:$0xff]
      %v2015 = vld [vmem:[%s5 + $0x18] sm:$0xff]
      %v2016 = vld [vmem:[%s5 + $0x20] sm:$0xff]
      %v2017 = vld [vmem:[%s5 + $0x28] sm:$0xff]
      %v2018 = vld [vmem:[%s5 + $0x30] sm:$0xff]
      %v2019 = vld [vmem:[%s5 + $0x38] sm:$0xff]
      %v2020 = vld [vmem:[%s5 + $0x40] sm:$0xff]
      %v2021 = vld [vmem:[%s5 + $0x48] sm:$0xff]
      %v2022 = vld [vmem:[%s5 + $0x50] sm:$0xff]
      %v2023 = vld [vmem:[%s5 + $0x58] sm:$0xff]
      %v2024 = vld [vmem:[%s5 + $0x60] sm:$0xff]
      %v2025 = vld [vmem:[%s5 + $0x68] sm:$0xff]
      %v2026 = vld [vmem:[%s5 + $0x70] sm:$0xff]
      %v2027 = vld [vmem:[%s5 + $0x78] sm:$0xff]
      %v2028 = vld [vmem:[%s13] sm:$0x1]
      %v2030 = vlaneseq
      %v2031 = vshrl.u32 %v2030, 7
      %v2032 = vsub.s32 0, %v2031
      %v2033 = vrot.slane %v2028, %v2032
      %2035 = vmatprep.subr.mxu0 0.0
      %2036 = vmatpush1.msra.mxu0 %v2012
      %2037 = vmatprep.subr.mxu0 0.0
      %2038 = vmatpush1.msra.mxu0 %v2013
      %2039 = vmatprep.subr.mxu0 0.0
      %2040 = vmatpush1.msra.mxu0 %v2014
      %2041 = vmatprep.subr.mxu0 0.0
      %2042 = vmatpush1.msra.mxu0 %v2015
      %2043 = vmatprep.subr.mxu0 0.0
      %2044 = vmatpush1.msra.mxu0 %v2016
      %2045 = vmatprep.subr.mxu0 0.0
      %2046 = vmatpush1.msra.mxu0 %v2017
      %2047 = vmatprep.subr.mxu0 0.0
      %2048 = vmatpush1.msra.mxu0 %v2018
      %2049 = vmatprep.subr.mxu0 0.0
      %2050 = vmatpush1.msra.mxu0 %v2019
      %2051 = vmatprep.subr.mxu0 0.0
      %2052 = vmatpush1.msra.mxu0 %v2020
      %2053 = vmatprep.subr.mxu0 0.0
      %2054 = vmatpush1.msra.mxu0 %v2021
      %2055 = vmatprep.subr.mxu0 0.0
      %2056 = vmatpush1.msra.mxu0 %v2022
      %2057 = vmatprep.subr.mxu0 0.0
      %2058 = vmatpush1.msra.mxu0 %v2023
      %2059 = vmatprep.subr.mxu0 0.0
      %2060 = vmatpush1.msra.mxu0 %v2024
      %2061 = vmatprep.subr.mxu0 0.0
      %2062 = vmatpush1.msra.mxu0 %v2025
      %2063 = vmatprep.subr.mxu0 0.0
      %2064 = vmatpush1.msra.mxu0 %v2026
      %2065 = vmatprep.subr.mxu0 0.0
      %2066 = vmatpush1.msra.mxu0 %v2027
      %2067 = vmatprep.subr.mxu0 0.0
      %2068 = vmatpush1.msra.mxu0 0.0
      %2069 = vmatprep.subr.mxu0 0.0
      %2070 = vmatpush1.msra.mxu0 0.0
      %2071 = vmatprep.subr.mxu0 0.0
      %2072 = vmatpush1.msra.mxu0 0.0
      %2073 = vmatprep.subr.mxu0 0.0
      %2074 = vmatpush1.msra.mxu0 0.0
      %2075 = vmatprep.subr.mxu0 0.0
      %2076 = vmatpush1.msra.mxu0 0.0
      %2077 = vmatprep.subr.mxu0 0.0
      %2078 = vmatpush1.msra.mxu0 0.0
      %2079 = vmatprep.subr.mxu0 0.0
      %2080 = vmatpush1.msra.mxu0 0.0
      %2081 = vmatprep.subr.mxu0 0.0
      %2082 = vmatpush1.msra.mxu0 0.0
      %2083 = vmatprep.subr.mxu0 0.0
      %2084 = vmatpush1.msra.mxu0 0.0
      %2085 = vmatprep.subr.mxu0 0.0
      %2086 = vmatpush1.msra.mxu0 0.0
      %2087 = vmatprep.subr.mxu0 0.0
      %2088 = vmatpush1.msra.mxu0 0.0
      %2089 = vmatprep.subr.mxu0 0.0
      %2090 = vmatpush1.msra.mxu0 0.0
      %2091 = vmatprep.subr.mxu0 0.0
      %2092 = vmatpush1.msra.mxu0 0.0
      %2093 = vmatprep.subr.mxu0 0.0
      %2094 = vmatpush1.msra.mxu0 0.0
      %2095 = vmatprep.subr.mxu0 0.0
      %2096 = vmatpush1.msra.mxu0 0.0
      %2097 = vmatprep.subr.mxu0 0.0
      %2098 = vmatpush1.msra.mxu0 0.0
      %2099 = vmatprep.mubr.f32.mxu0 0.0
      %2100 = vmatmul.mubr.f32.gmra.mrb[0].mxu0 %v1918
      %v2101 = vpop.f32.mrb[0].mxu0
      %v2102 = vadd.f32 %v2033, %v2101
      %v2103 = vpop.f32.mrb[0].mxu0
      %2104 = vmatprep.mubr.f32.mxu0 0.0
      %2105 = vmatmul.mubr.f32.gmra.mrb[0].mxu0 %v1923
      %v2106 = vpop.f32.mrb[0].mxu0
      %v2107 = vadd.f32 %v2033, %v2106
      %v2108 = vpop.f32.mrb[0].mxu0
      %2109 = vmatprep.mubr.f32.mxu0 0.0
      %2110 = vmatmul.mubr.f32.gmra.mrb[0].mxu0 %v1928
      %v2111 = vpop.f32.mrb[0].mxu0
      %v2112 = vadd.f32 %v2033, %v2111
      %v2113 = vpop.f32.mrb[0].mxu0
      %2114 = vmatprep.mubr.f32.mxu0 0.0
      %2115 = vmatmul.mubr.f32.gmra.mrb[0].mxu0 %v1933
      %v2116 = vpop.f32.mrb[0].mxu0
      %v2117 = vadd.f32 %v2033, %v2116
      %v2118 = vpop.f32.mrb[0].mxu0
      %2119 = vmatprep.mubr.f32.mxu0 0.0
      %2120 = vmatmul.mubr.f32.gmra.mrb[0].mxu0 %v1938
      %v2121 = vpop.f32.mrb[0].mxu0
      %v2122 = vadd.f32 %v2033, %v2121
      %v2123 = vpop.f32.mrb[0].mxu0
      %2124 = vmatprep.mubr.f32.mxu0 0.0
      %2125 = vmatmul.mubr.f32.gmra.mrb[0].mxu0 %v1943
      %v2126 = vpop.f32.mrb[0].mxu0
      %v2127 = vadd.f32 %v2033, %v2126
      %v2128 = vpop.f32.mrb[0].mxu0
      %2129 = vmatprep.mubr.f32.mxu0 0.0
      %2130 = vmatmul.mubr.f32.gmra.mrb[0].mxu0 %v1948
      %v2131 = vpop.f32.mrb[0].mxu0
      %v2132 = vadd.f32 %v2033, %v2131
      %v2133 = vpop.f32.mrb[0].mxu0
      %2134 = vmatprep.mubr.f32.mxu0 0.0
      %2135 = vmatmul.mubr.f32.gmra.mrb[0].mxu0 %v1953
      %v2136 = vpop.f32.mrb[0].mxu0
      %v2137 = vadd.f32 %v2033, %v2136
      %v2138 = vpop.f32.mrb[0].mxu0
      %2139 = vmatprep.mubr.f32.mxu0 0.0
      %2140 = vmatmul.mubr.f32.gmra.mrb[0].mxu0 %v1958
      %v2141 = vpop.f32.mrb[0].mxu0
      %v2142 = vadd.f32 %v2033, %v2141
      %v2143 = vpop.f32.mrb[0].mxu0
      %2144 = vmatprep.mubr.f32.mxu0 0.0
      %2145 = vmatmul.mubr.f32.gmra.mrb[0].mxu0 %v1963
      %v2146 = vpop.f32.mrb[0].mxu0
      %v2147 = vadd.f32 %v2033, %v2146
      %v2148 = vpop.f32.mrb[0].mxu0
      %2149 = vmatprep.mubr.f32.mxu0 0.0
      %2150 = vmatmul.mubr.f32.gmra.mrb[0].mxu0 %v1968
      %v2151 = vpop.f32.mrb[0].mxu0
      %v2152 = vadd.f32 %v2033, %v2151
      %v2153 = vpop.f32.mrb[0].mxu0
      %2154 = vmatprep.mubr.f32.mxu0 0.0
      %2155 = vmatmul.mubr.f32.gmra.mrb[0].mxu0 %v1973
      %v2156 = vpop.f32.mrb[0].mxu0
      %v2157 = vadd.f32 %v2033, %v2156
      %v2158 = vpop.f32.mrb[0].mxu0
      %2159 = vmatprep.mubr.f32.mxu0 0.0
      %2160 = vmatmul.mubr.f32.gmra.mrb[0].mxu0 %v1978
      %v2161 = vpop.f32.mrb[0].mxu0
      %v2162 = vadd.f32 %v2033, %v2161
      %v2163 = vpop.f32.mrb[0].mxu0
      %2164 = vmatprep.mubr.f32.mxu0 0.0
      %2165 = vmatmul.mubr.f32.gmra.mrb[0].mxu0 %v1983
      %v2166 = vpop.f32.mrb[0].mxu0
      %v2167 = vadd.f32 %v2033, %v2166
      %v2168 = vpop.f32.mrb[0].mxu0
      %2169 = vmatprep.mubr.f32.mxu0 0.0
      %2170 = vmatmul.mubr.f32.gmra.mrb[0].mxu0 %v1988
      %v2171 = vpop.f32.mrb[0].mxu0
      %v2172 = vadd.f32 %v2033, %v2171
      %v2173 = vpop.f32.mrb[0].mxu0
      %2174 = vmatprep.mubr.f32.mxu0 0.0
      %2175 = vmatmul.mubr.f32.gmra.mrb[0].mxu0 %v1993
      %v2176 = vpop.f32.mrb[0].mxu0
      %v2177 = vadd.f32 %v2033, %v2176
      %v2178 = vpop.f32.mrb[0].mxu0
      %2179 = vdwg.mxu0
      %v2180 = vtanh.pop %v2102
      %v2181 = vtanh.pop %v2107
      %v2182 = vtanh.pop %v2112
      %v2183 = vtanh.pop %v2117
      %v2184 = vtanh.pop %v2122
      %v2185 = vtanh.pop %v2127
      %v2186 = vtanh.pop %v2132
      %v2187 = vtanh.pop %v2137
      %v2188 = vtanh.pop %v2142
      %v2189 = vtanh.pop %v2147
      %v2190 = vtanh.pop %v2152
      %v2191 = vtanh.pop %v2157
      %v2192 = vtanh.pop %v2162
      %v2193 = vtanh.pop %v2167
      %v2194 = vtanh.pop %v2172
      %v2195 = vtanh.pop %v2177
      %v2196 = vld [vmem:[%s6] sm:$0xff]
      %v2197 = vld [vmem:[%s6 + $0x8] sm:$0xff]
      %v2198 = vld [vmem:[%s6 + $0x10] sm:$0xff]
      %v2199 = vld [vmem:[%s6 + $0x18] sm:$0xff]
      %v2200 = vld [vmem:[%s6 + $0x20] sm:$0xff]
      %v2201 = vld [vmem:[%s6 + $0x28] sm:$0xff]
      %v2202 = vld [vmem:[%s6 + $0x30] sm:$0xff]
      %v2203 = vld [vmem:[%s6 + $0x38] sm:$0xff]
      %v2204 = vld [vmem:[%s6 + $0x40] sm:$0xff]
      %v2205 = vld [vmem:[%s6 + $0x48] sm:$0xff]
      %v2206 = vld [vmem:[%s6 + $0x50] sm:$0xff]
      %v2207 = vld [vmem:[%s6 + $0x58] sm:$0xff]
      %v2208 = vld [vmem:[%s6 + $0x60] sm:$0xff]
      %v2209 = vld [vmem:[%s6 + $0x68] sm:$0xff]
      %v2210 = vld [vmem:[%s6 + $0x70] sm:$0xff]
      %v2211 = vld [vmem:[%s6 + $0x78] sm:$0xff]
      %v2212 = vld [vmem:[%s14] sm:$0x1]
      %v2214 = vlaneseq
      %v2215 = vshrl.u32 %v2214, 7
      %v2216 = vsub.s32 0, %v2215
      %v2217 = vrot.slane %v2212, %v2216
      %2219 = vmatprep.subr.mxu0 0.0
      %2220 = vmatpush1.msra.mxu0 %v2196
      %2221 = vmatprep.subr.mxu0 0.0
      %2222 = vmatpush1.msra.mxu0 %v2197
      %2223 = vmatprep.subr.mxu0 0.0
      %2224 = vmatpush1.msra.mxu0 %v2198
      %2225 = vmatprep.subr.mxu0 0.0
      %2226 = vmatpush1.msra.mxu0 %v2199
      %2227 = vmatprep.subr.mxu0 0.0
      %2228 = vmatpush1.msra.mxu0 %v2200
      %2229 = vmatprep.subr.mxu0 0.0
      %2230 = vmatpush1.msra.mxu0 %v2201
      %2231 = vmatprep.subr.mxu0 0.0
      %2232 = vmatpush1.msra.mxu0 %v2202
      %2233 = vmatprep.subr.mxu0 0.0
      %2234 = vmatpush1.msra.mxu0 %v2203
      %2235 = vmatprep.subr.mxu0 0.0
      %2236 = vmatpush1.msra.mxu0 %v2204
      %2237 = vmatprep.subr.mxu0 0.0
      %2238 = vmatpush1.msra.mxu0 %v2205
      %2239 = vmatprep.subr.mxu0 0.0
      %2240 = vmatpush1.msra.mxu0 %v2206
      %2241 = vmatprep.subr.mxu0 0.0
      %2242 = vmatpush1.msra.mxu0 %v2207
      %2243 = vmatprep.subr.mxu0 0.0
      %2244 = vmatpush1.msra.mxu0 %v2208
      %2245 = vmatprep.subr.mxu0 0.0
      %2246 = vmatpush1.msra.mxu0 %v2209
      %2247 = vmatprep.subr.mxu0 0.0
      %2248 = vmatpush1.msra.mxu0 %v2210
      %2249 = vmatprep.subr.mxu0 0.0
      %2250 = vmatpush1.msra.mxu0 %v2211
      %2251 = vmatprep.subr.mxu0 0.0
      %2252 = vmatpush1.msra.mxu0 0.0
      %2253 = vmatprep.subr.mxu0 0.0
      %2254 = vmatpush1.msra.mxu0 0.0
      %2255 = vmatprep.subr.mxu0 0.0
      %2256 = vmatpush1.msra.mxu0 0.0
      %2257 = vmatprep.subr.mxu0 0.0
      %2258 = vmatpush1.msra.mxu0 0.0
      %2259 = vmatprep.subr.mxu0 0.0
      %2260 = vmatpush1.msra.mxu0 0.0
      %2261 = vmatprep.subr.mxu0 0.0
      %2262 = vmatpush1.msra.mxu0 0.0
      %2263 = vmatprep.subr.mxu0 0.0
      %2264 = vmatpush1.msra.mxu0 0.0
      %2265 = vmatprep.subr.mxu0 0.0
      %2266 = vmatpush1.msra.mxu0 0.0
      %2267 = vmatprep.subr.mxu0 0.0
      %2268 = vmatpush1.msra.mxu0 0.0
      %2269 = vmatprep.subr.mxu0 0.0
      %2270 = vmatpush1.msra.mxu0 0.0
      %2271 = vmatprep.subr.mxu0 0.0
      %2272 = vmatpush1.msra.mxu0 0.0
      %2273 = vmatprep.subr.mxu0 0.0
      %2274 = vmatpush1.msra.mxu0 0.0
      %2275 = vmatprep.subr.mxu0 0.0
      %2276 = vmatpush1.msra.mxu0 0.0
      %2277 = vmatprep.subr.mxu0 0.0
      %2278 = vmatpush1.msra.mxu0 0.0
      %2279 = vmatprep.subr.mxu0 0.0
      %2280 = vmatpush1.msra.mxu0 0.0
      %2281 = vmatprep.subr.mxu0 0.0
      %2282 = vmatpush1.msra.mxu0 0.0
      %2283 = vmatprep.mubr.f32.mxu0 0.0
      %2284 = vmatmul.mubr.f32.gmra.mrb[0].mxu0 %v2180
      %v2285 = vpop.f32.mrb[0].mxu0
      %v2286 = vadd.f32 %v2217, %v2285
      %v2287 = vpop.f32.mrb[0].mxu0
      %2288 = vmatprep.mubr.f32.mxu0 0.0
      %2289 = vmatmul.mubr.f32.gmra.mrb[0].mxu0 %v2181
      %v2290 = vpop.f32.mrb[0].mxu0
      %v2291 = vadd.f32 %v2217, %v2290
      %v2292 = vpop.f32.mrb[0].mxu0
      %2293 = vmatprep.mubr.f32.mxu0 0.0
      %2294 = vmatmul.mubr.f32.gmra.mrb[0].mxu0 %v2182
      %v2295 = vpop.f32.mrb[0].mxu0
      %v2296 = vadd.f32 %v2217, %v2295
      %v2297 = vpop.f32.mrb[0].mxu0
      %2298 = vmatprep.mubr.f32.mxu0 0.0
      %2299 = vmatmul.mubr.f32.gmra.mrb[0].mxu0 %v2183
      %v2300 = vpop.f32.mrb[0].mxu0
      %v2301 = vadd.f32 %v2217, %v2300
      %v2302 = vpop.f32.mrb[0].mxu0
      %2303 = vmatprep.mubr.f32.mxu0 0.0
      %2304 = vmatmul.mubr.f32.gmra.mrb[0].mxu0 %v2184
      %v2305 = vpop.f32.mrb[0].mxu0
      %v2306 = vadd.f32 %v2217, %v2305
      %v2307 = vpop.f32.mrb[0].mxu0
      %2308 = vmatprep.mubr.f32.mxu0 0.0
      %2309 = vmatmul.mubr.f32.gmra.mrb[0].mxu0 %v2185
      %v2310 = vpop.f32.mrb[0].mxu0
      %v2311 = vadd.f32 %v2217, %v2310
      %v2312 = vpop.f32.mrb[0].mxu0
      %2313 = vmatprep.mubr.f32.mxu0 0.0
      %2314 = vmatmul.mubr.f32.gmra.mrb[0].mxu0 %v2186
      %v2315 = vpop.f32.mrb[0].mxu0
      %v2316 = vadd.f32 %v2217, %v2315
      %v2317 = vpop.f32.mrb[0].mxu0
      %2318 = vmatprep.mubr.f32.mxu0 0.0
      %2319 = vmatmul.mubr.f32.gmra.mrb[0].mxu0 %v2187
      %v2320 = vpop.f32.mrb[0].mxu0
      %v2321 = vadd.f32 %v2217, %v2320
      %v2322 = vpop.f32.mrb[0].mxu0
      %2323 = vmatprep.mubr.f32.mxu0 0.0
      %2324 = vmatmul.mubr.f32.gmra.mrb[0].mxu0 %v2188
      %v2325 = vpop.f32.mrb[0].mxu0
      %v2326 = vadd.f32 %v2217, %v2325
      %v2327 = vpop.f32.mrb[0].mxu0
      %2328 = vmatprep.mubr.f32.mxu0 0.0
      %2329 = vmatmul.mubr.f32.gmra.mrb[0].mxu0 %v2189
      %v2330 = vpop.f32.mrb[0].mxu0
      %v2331 = vadd.f32 %v2217, %v2330
      %v2332 = vpop.f32.mrb[0].mxu0
      %2333 = vmatprep.mubr.f32.mxu0 0.0
      %2334 = vmatmul.mubr.f32.gmra.mrb[0].mxu0 %v2190
      %v2335 = vpop.f32.mrb[0].mxu0
      %v2336 = vadd.f32 %v2217, %v2335
      %v2337 = vpop.f32.mrb[0].mxu0
      %2338 = vmatprep.mubr.f32.mxu0 0.0
      %2339 = vmatmul.mubr.f32.gmra.mrb[0].mxu0 %v2191
      %v2340 = vpop.f32.mrb[0].mxu0
      %v2341 = vadd.f32 %v2217, %v2340
      %v2342 = vpop.f32.mrb[0].mxu0
      %2343 = vmatprep.mubr.f32.mxu0 0.0
      %2344 = vmatmul.mubr.f32.gmra.mrb[0].mxu0 %v2192
      %v2345 = vpop.f32.mrb[0].mxu0
      %v2346 = vadd.f32 %v2217, %v2345
      %v2347 = vpop.f32.mrb[0].mxu0
      %2348 = vmatprep.mubr.f32.mxu0 0.0
      %2349 = vmatmul.mubr.f32.gmra.mrb[0].mxu0 %v2193
      %v2350 = vpop.f32.mrb[0].mxu0
      %v2351 = vadd.f32 %v2217, %v2350
      %v2352 = vpop.f32.mrb[0].mxu0
      %2353 = vmatprep.mubr.f32.mxu0 0.0
      %2354 = vmatmul.mubr.f32.gmra.mrb[0].mxu0 %v2194
      %v2355 = vpop.f32.mrb[0].mxu0
      %v2356 = vadd.f32 %v2217, %v2355
      %v2357 = vpop.f32.mrb[0].mxu0
      %2358 = vmatprep.mubr.f32.mxu0 0.0
      %2359 = vmatmul.mubr.f32.gmra.mrb[0].mxu0 %v2195
      %v2360 = vpop.f32.mrb[0].mxu0
      %v2361 = vadd.f32 %v2217, %v2360
      %v2362 = vpop.f32.mrb[0].mxu0
      %2363 = vdwg.mxu0
      %v2364 = vtanh.pop %v2286
      %v2365 = vtanh.pop %v2291
      %v2366 = vtanh.pop %v2296
      %v2367 = vtanh.pop %v2301
      %v2368 = vtanh.pop %v2306
      %v2369 = vtanh.pop %v2311
      %v2370 = vtanh.pop %v2316
      %v2371 = vtanh.pop %v2321
      %v2372 = vtanh.pop %v2326
      %v2373 = vtanh.pop %v2331
      %v2374 = vtanh.pop %v2336
      %v2375 = vtanh.pop %v2341
      %v2376 = vtanh.pop %v2346
      %v2377 = vtanh.pop %v2351
      %v2378 = vtanh.pop %v2356
      %v2379 = vtanh.pop %v2361
      %v2380 = vld [vmem:[%s7] sm:$0xff]
      %v2381 = vld [vmem:[%s7 + $0x8] sm:$0xff]
      %v2382 = vld [vmem:[%s7 + $0x10] sm:$0xff]
      %v2383 = vld [vmem:[%s7 + $0x18] sm:$0xff]
      %v2384 = vld [vmem:[%s7 + $0x20] sm:$0xff]
      %v2385 = vld [vmem:[%s7 + $0x28] sm:$0xff]
      %v2386 = vld [vmem:[%s7 + $0x30] sm:$0xff]
      %v2387 = vld [vmem:[%s7 + $0x38] sm:$0xff]
      %v2388 = vld [vmem:[%s7 + $0x40] sm:$0xff]
      %v2389 = vld [vmem:[%s7 + $0x48] sm:$0xff]
      %v2390 = vld [vmem:[%s7 + $0x50] sm:$0xff]
      %v2391 = vld [vmem:[%s7 + $0x58] sm:$0xff]
      %v2392 = vld [vmem:[%s7 + $0x60] sm:$0xff]
      %v2393 = vld [vmem:[%s7 + $0x68] sm:$0xff]
      %v2394 = vld [vmem:[%s7 + $0x70] sm:$0xff]
      %v2395 = vld [vmem:[%s7 + $0x78] sm:$0xff]
      %v2396 = vld [vmem:[%s15] sm:$0x1]
      %v2398 = vlaneseq
      %v2399 = vshrl.u32 %v2398, 7
      %v2400 = vsub.s32 0, %v2399
      %v2401 = vrot.slane %v2396, %v2400
      %2403 = vmatprep.subr.mxu0 0.0
      %2404 = vmatpush1.msra.mxu0 %v2380
      %2405 = vmatprep.subr.mxu0 0.0
      %2406 = vmatpush1.msra.mxu0 %v2381
      %2407 = vmatprep.subr.mxu0 0.0
      %2408 = vmatpush1.msra.mxu0 %v2382
      %2409 = vmatprep.subr.mxu0 0.0
      %2410 = vmatpush1.msra.mxu0 %v2383
      %2411 = vmatprep.subr.mxu0 0.0
      %2412 = vmatpush1.msra.mxu0 %v2384
      %2413 = vmatprep.subr.mxu0 0.0
      %2414 = vmatpush1.msra.mxu0 %v2385
      %2415 = vmatprep.subr.mxu0 0.0
      %2416 = vmatpush1.msra.mxu0 %v2386
      %2417 = vmatprep.subr.mxu0 0.0
      %2418 = vmatpush1.msra.mxu0 %v2387
      %2419 = vmatprep.subr.mxu0 0.0
      %2420 = vmatpush1.msra.mxu0 %v2388
      %2421 = vmatprep.subr.mxu0 0.0
      %2422 = vmatpush1.msra.mxu0 %v2389
      %2423 = vmatprep.subr.mxu0 0.0
      %2424 = vmatpush1.msra.mxu0 %v2390
      %2425 = vmatprep.subr.mxu0 0.0
      %2426 = vmatpush1.msra.mxu0 %v2391
      %2427 = vmatprep.subr.mxu0 0.0
      %2428 = vmatpush1.msra.mxu0 %v2392
      %2429 = vmatprep.subr.mxu0 0.0
      %2430 = vmatpush1.msra.mxu0 %v2393
      %2431 = vmatprep.subr.mxu0 0.0
      %2432 = vmatpush1.msra.mxu0 %v2394
      %2433 = vmatprep.subr.mxu0 0.0
      %2434 = vmatpush1.msra.mxu0 %v2395
      %2435 = vmatprep.subr.mxu0 0.0
      %2436 = vmatpush1.msra.mxu0 0.0
      %2437 = vmatprep.subr.mxu0 0.0
      %2438 = vmatpush1.msra.mxu0 0.0
      %2439 = vmatprep.subr.mxu0 0.0
      %2440 = vmatpush1.msra.mxu0 0.0
      %2441 = vmatprep.subr.mxu0 0.0
      %2442 = vmatpush1.msra.mxu0 0.0
      %2443 = vmatprep.subr.mxu0 0.0
      %2444 = vmatpush1.msra.mxu0 0.0
      %2445 = vmatprep.subr.mxu0 0.0
      %2446 = vmatpush1.msra.mxu0 0.0
      %2447 = vmatprep.subr.mxu0 0.0
      %2448 = vmatpush1.msra.mxu0 0.0
      %2449 = vmatprep.subr.mxu0 0.0
      %2450 = vmatpush1.msra.mxu0 0.0
      %2451 = vmatprep.subr.mxu0 0.0
      %2452 = vmatpush1.msra.mxu0 0.0
      %2453 = vmatprep.subr.mxu0 0.0
      %2454 = vmatpush1.msra.mxu0 0.0
      %2455 = vmatprep.subr.mxu0 0.0
      %2456 = vmatpush1.msra.mxu0 0.0
      %2457 = vmatprep.subr.mxu0 0.0
      %2458 = vmatpush1.msra.mxu0 0.0
      %2459 = vmatprep.subr.mxu0 0.0
      %2460 = vmatpush1.msra.mxu0 0.0
      %2461 = vmatprep.subr.mxu0 0.0
      %2462 = vmatpush1.msra.mxu0 0.0
      %2463 = vmatprep.subr.mxu0 0.0
      %2464 = vmatpush1.msra.mxu0 0.0
      %2465 = vmatprep.subr.mxu0 0.0
      %2466 = vmatpush1.msra.mxu0 0.0
      %2467 = vmatprep.mubr.f32.mxu0 0.0
      %2468 = vmatmul.mubr.f32.gmra.mrb[0].mxu0 %v2364
      %v2469 = vpop.f32.mrb[0].mxu0
      %v2470 = vadd.f32 %v2401, %v2469
      %v2471 = vpop.f32.mrb[0].mxu0
      %2472 = vmatprep.mubr.f32.mxu0 0.0
      %2473 = vmatmul.mubr.f32.gmra.mrb[0].mxu0 %v2365
      %v2474 = vpop.f32.mrb[0].mxu0
      %v2475 = vadd.f32 %v2401, %v2474
      %v2476 = vpop.f32.mrb[0].mxu0
      %2477 = vmatprep.mubr.f32.mxu0 0.0
      %2478 = vmatmul.mubr.f32.gmra.mrb[0].mxu0 %v2366
      %v2479 = vpop.f32.mrb[0].mxu0
      %v2480 = vadd.f32 %v2401, %v2479
      %v2481 = vpop.f32.mrb[0].mxu0
      %2482 = vmatprep.mubr.f32.mxu0 0.0
      %2483 = vmatmul.mubr.f32.gmra.mrb[0].mxu0 %v2367
      %v2484 = vpop.f32.mrb[0].mxu0
      %v2485 = vadd.f32 %v2401, %v2484
      %v2486 = vpop.f32.mrb[0].mxu0
      %2487 = vmatprep.mubr.f32.mxu0 0.0
      %2488 = vmatmul.mubr.f32.gmra.mrb[0].mxu0 %v2368
      %v2489 = vpop.f32.mrb[0].mxu0
      %v2490 = vadd.f32 %v2401, %v2489
      %v2491 = vpop.f32.mrb[0].mxu0
      %2492 = vmatprep.mubr.f32.mxu0 0.0
      %2493 = vmatmul.mubr.f32.gmra.mrb[0].mxu0 %v2369
      %v2494 = vpop.f32.mrb[0].mxu0
      %v2495 = vadd.f32 %v2401, %v2494
      %v2496 = vpop.f32.mrb[0].mxu0
      %2497 = vmatprep.mubr.f32.mxu0 0.0
      %2498 = vmatmul.mubr.f32.gmra.mrb[0].mxu0 %v2370
      %v2499 = vpop.f32.mrb[0].mxu0
      %v2500 = vadd.f32 %v2401, %v2499
      %v2501 = vpop.f32.mrb[0].mxu0
      %2502 = vmatprep.mubr.f32.mxu0 0.0
      %2503 = vmatmul.mubr.f32.gmra.mrb[0].mxu0 %v2371
      %v2504 = vpop.f32.mrb[0].mxu0
      %v2505 = vadd.f32 %v2401, %v2504
      %v2506 = vpop.f32.mrb[0].mxu0
      %2507 = vmatprep.mubr.f32.mxu0 0.0
      %2508 = vmatmul.mubr.f32.gmra.mrb[0].mxu0 %v2372
      %v2509 = vpop.f32.mrb[0].mxu0
      %v2510 = vadd.f32 %v2401, %v2509
      %v2511 = vpop.f32.mrb[0].mxu0
      %2512 = vmatprep.mubr.f32.mxu0 0.0
      %2513 = vmatmul.mubr.f32.gmra.mrb[0].mxu0 %v2373
      %v2514 = vpop.f32.mrb[0].mxu0
      %v2515 = vadd.f32 %v2401, %v2514
      %v2516 = vpop.f32.mrb[0].mxu0
      %2517 = vmatprep.mubr.f32.mxu0 0.0
      %2518 = vmatmul.mubr.f32.gmra.mrb[0].mxu0 %v2374
      %v2519 = vpop.f32.mrb[0].mxu0
      %v2520 = vadd.f32 %v2401, %v2519
      %v2521 = vpop.f32.mrb[0].mxu0
      %2522 = vmatprep.mubr.f32.mxu0 0.0
      %2523 = vmatmul.mubr.f32.gmra.mrb[0].mxu0 %v2375
      %v2524 = vpop.f32.mrb[0].mxu0
      %v2525 = vadd.f32 %v2401, %v2524
      %v2526 = vpop.f32.mrb[0].mxu0
      %2527 = vmatprep.mubr.f32.mxu0 0.0
      %2528 = vmatmul.mubr.f32.gmra.mrb[0].mxu0 %v2376
      %v2529 = vpop.f32.mrb[0].mxu0
      %v2530 = vadd.f32 %v2401, %v2529
      %v2531 = vpop.f32.mrb[0].mxu0
      %2532 = vmatprep.mubr.f32.mxu0 0.0
      %2533 = vmatmul.mubr.f32.gmra.mrb[0].mxu0 %v2377
      %v2534 = vpop.f32.mrb[0].mxu0
      %v2535 = vadd.f32 %v2401, %v2534
      %v2536 = vpop.f32.mrb[0].mxu0
      %2537 = vmatprep.mubr.f32.mxu0 0.0
      %2538 = vmatmul.mubr.f32.gmra.mrb[0].mxu0 %v2378
      %v2539 = vpop.f32.mrb[0].mxu0
      %v2540 = vadd.f32 %v2401, %v2539
      %v2541 = vpop.f32.mrb[0].mxu0
      %2542 = vmatprep.mubr.f32.mxu0 0.0
      %2543 = vmatmul.mubr.f32.gmra.mrb[0].mxu0 %v2379
      %v2544 = vpop.f32.mrb[0].mxu0
      %v2545 = vadd.f32 %v2401, %v2544
      %v2546 = vpop.f32.mrb[0].mxu0
      %2547 = vdwg.mxu0
      %v2548 = vtanh.pop %v2470
      %v2549 = vtanh.pop %v2475
      %v2550 = vtanh.pop %v2480
      %v2551 = vtanh.pop %v2485
      %v2552 = vtanh.pop %v2490
      %v2553 = vtanh.pop %v2495
      %v2554 = vtanh.pop %v2500
      %v2555 = vtanh.pop %v2505
      %v2556 = vtanh.pop %v2510
      %v2557 = vtanh.pop %v2515
      %v2558 = vtanh.pop %v2520
      %v2559 = vtanh.pop %v2525
      %v2560 = vtanh.pop %v2530
      %v2561 = vtanh.pop %v2535
      %v2562 = vtanh.pop %v2540
      %v2563 = vtanh.pop %v2545
      %v2564 = vld [vmem:[%s8] sm:$0xff]
      %v2565 = vld [vmem:[%s8 + $0x8] sm:$0xff]
      %v2566 = vld [vmem:[%s8 + $0x10] sm:$0xff]
      %v2567 = vld [vmem:[%s8 + $0x18] sm:$0xff]
      %v2568 = vld [vmem:[%s8 + $0x20] sm:$0xff]
      %v2569 = vld [vmem:[%s8 + $0x28] sm:$0xff]
      %v2570 = vld [vmem:[%s8 + $0x30] sm:$0xff]
      %v2571 = vld [vmem:[%s8 + $0x38] sm:$0xff]
      %v2572 = vld [vmem:[%s8 + $0x40] sm:$0xff]
      %v2573 = vld [vmem:[%s8 + $0x48] sm:$0xff]
      %v2574 = vld [vmem:[%s8 + $0x50] sm:$0xff]
      %v2575 = vld [vmem:[%s8 + $0x58] sm:$0xff]
      %v2576 = vld [vmem:[%s8 + $0x60] sm:$0xff]
      %v2577 = vld [vmem:[%s8 + $0x68] sm:$0xff]
      %v2578 = vld [vmem:[%s8 + $0x70] sm:$0xff]
      %v2579 = vld [vmem:[%s8 + $0x78] sm:$0xff]
      %v2580 = vld [vmem:[%s8 + $0x80] sm:$0xff]
      %v2581 = vld [vmem:[%s8 + $0x88] sm:$0xff]
      %v2582 = vld [vmem:[%s8 + $0x90] sm:$0xff]
      %v2583 = vld [vmem:[%s8 + $0x98] sm:$0xff]
      %v2584 = vld [vmem:[%s8 + $0xa0] sm:$0xff]
      %v2585 = vld [vmem:[%s8 + $0xa8] sm:$0xff]
      %v2586 = vld [vmem:[%s8 + $0xb0] sm:$0xff]
      %v2587 = vld [vmem:[%s8 + $0xb8] sm:$0xff]
      %v2588 = vld [vmem:[%s8 + $0xc0] sm:$0xff]
      %v2589 = vld [vmem:[%s8 + $0xc8] sm:$0xff]
      %v2590 = vld [vmem:[%s8 + $0xd0] sm:$0xff]
      %v2591 = vld [vmem:[%s8 + $0xd8] sm:$0xff]
      %v2592 = vld [vmem:[%s8 + $0xe0] sm:$0xff]
      %v2593 = vld [vmem:[%s8 + $0xe8] sm:$0xff]
      %v2594 = vld [vmem:[%s8 + $0xf0] sm:$0xff]
      %v2595 = vld [vmem:[%s8 + $0xf8] sm:$0xff]
      %v2596 = vld [vmem:[%s8 + $0x100] sm:$0xff]
      %v2597 = vld [vmem:[%s8 + $0x108] sm:$0xff]
      %v2598 = vld [vmem:[%s8 + $0x110] sm:$0xff]
      %v2599 = vld [vmem:[%s8 + $0x118] sm:$0xff]
      %v2600 = vld [vmem:[%s8 + $0x120] sm:$0xff]
      %v2601 = vld [vmem:[%s8 + $0x128] sm:$0xff]
      %v2602 = vld [vmem:[%s8 + $0x130] sm:$0xff]
      %v2603 = vld [vmem:[%s8 + $0x138] sm:$0xff]
      %v2604 = vld [vmem:[%s8 + $0x140] sm:$0xff]
      %v2605 = vld [vmem:[%s8 + $0x148] sm:$0xff]
      %v2606 = vld [vmem:[%s8 + $0x150] sm:$0xff]
      %v2607 = vld [vmem:[%s8 + $0x158] sm:$0xff]
      %v2608 = vld [vmem:[%s8 + $0x160] sm:$0xff]
      %v2609 = vld [vmem:[%s8 + $0x168] sm:$0xff]
      %v2610 = vld [vmem:[%s8 + $0x170] sm:$0xff]
      %v2611 = vld [vmem:[%s8 + $0x178] sm:$0xff]
      %v2612 = vld [vmem:[%s8 + $0x180] sm:$0xff]
      %v2613 = vld [vmem:[%s8 + $0x188] sm:$0xff]
      %v2614 = vld [vmem:[%s8 + $0x190] sm:$0xff]
      %v2615 = vld [vmem:[%s8 + $0x198] sm:$0xff]
      %v2616 = vld [vmem:[%s8 + $0x1a0] sm:$0xff]
      %v2617 = vld [vmem:[%s8 + $0x1a8] sm:$0xff]
      %v2618 = vld [vmem:[%s8 + $0x1b0] sm:$0xff]
      %v2619 = vld [vmem:[%s8 + $0x1b8] sm:$0xff]
      %v2620 = vld [vmem:[%s8 + $0x1c0] sm:$0xff]
      %v2621 = vld [vmem:[%s8 + $0x1c8] sm:$0xff]
      %v2622 = vld [vmem:[%s8 + $0x1d0] sm:$0xff]
      %v2623 = vld [vmem:[%s8 + $0x1d8] sm:$0xff]
      %v2624 = vld [vmem:[%s8 + $0x1e0] sm:$0xff]
      %v2625 = vld [vmem:[%s8 + $0x1e8] sm:$0xff]
      %v2626 = vld [vmem:[%s8 + $0x1f0] sm:$0xff]
      %v2627 = vld [vmem:[%s8 + $0x1f8] sm:$0xff]
      %v2628 = vld [vmem:[%s8 + $0x200] sm:$0xff]
      %v2629 = vld [vmem:[%s8 + $0x208] sm:$0xff]
      %v2630 = vld [vmem:[%s8 + $0x210] sm:$0xff]
      %v2631 = vld [vmem:[%s8 + $0x218] sm:$0xff]
      %v2632 = vld [vmem:[%s8 + $0x220] sm:$0xff]
      %v2633 = vld [vmem:[%s8 + $0x228] sm:$0xff]
      %v2634 = vld [vmem:[%s8 + $0x230] sm:$0xff]
      %v2635 = vld [vmem:[%s8 + $0x238] sm:$0xff]
      %v2636 = vld [vmem:[%s8 + $0x240] sm:$0xff]
      %v2637 = vld [vmem:[%s8 + $0x248] sm:$0xff]
      %v2638 = vld [vmem:[%s8 + $0x250] sm:$0xff]
      %v2639 = vld [vmem:[%s8 + $0x258] sm:$0xff]
      %v2640 = vld [vmem:[%s8 + $0x260] sm:$0xff]
      %v2641 = vld [vmem:[%s8 + $0x268] sm:$0xff]
      %v2642 = vld [vmem:[%s8 + $0x270] sm:$0xff]
      %v2643 = vld [vmem:[%s8 + $0x278] sm:$0xff]
      %v2644 = vld [vmem:[%s8 + $0x280] sm:$0xff]
      %v2645 = vld [vmem:[%s8 + $0x288] sm:$0xff]
      %v2646 = vld [vmem:[%s8 + $0x290] sm:$0xff]
      %v2647 = vld [vmem:[%s8 + $0x298] sm:$0xff]
      %v2648 = vld [vmem:[%s8 + $0x2a0] sm:$0xff]
      %v2649 = vld [vmem:[%s8 + $0x2a8] sm:$0xff]
      %v2650 = vld [vmem:[%s8 + $0x2b0] sm:$0xff]
      %v2651 = vld [vmem:[%s8 + $0x2b8] sm:$0xff]
      %v2652 = vld [vmem:[%s8 + $0x2c0] sm:$0xff]
      %v2653 = vld [vmem:[%s8 + $0x2c8] sm:$0xff]
      %v2654 = vld [vmem:[%s8 + $0x2d0] sm:$0xff]
      %v2655 = vld [vmem:[%s8 + $0x2d8] sm:$0xff]
      %v2656 = vld [vmem:[%s8 + $0x2e0] sm:$0xff]
      %v2657 = vld [vmem:[%s8 + $0x2e8] sm:$0xff]
      %v2658 = vld [vmem:[%s8 + $0x2f0] sm:$0xff]
      %v2659 = vld [vmem:[%s8 + $0x2f8] sm:$0xff]
      %v2660 = vld [vmem:[%s8 + $0x300] sm:$0xff]
      %v2661 = vld [vmem:[%s8 + $0x308] sm:$0xff]
      %v2662 = vld [vmem:[%s8 + $0x310] sm:$0xff]
      %v2663 = vld [vmem:[%s8 + $0x318] sm:$0xff]
      %v2664 = vld [vmem:[%s8 + $0x320] sm:$0xff]
      %v2665 = vld [vmem:[%s8 + $0x328] sm:$0xff]
      %v2666 = vld [vmem:[%s8 + $0x330] sm:$0xff]
      %v2667 = vld [vmem:[%s8 + $0x338] sm:$0xff]
      %v2668 = vld [vmem:[%s8 + $0x340] sm:$0xff]
      %v2669 = vld [vmem:[%s8 + $0x348] sm:$0xff]
      %v2670 = vld [vmem:[%s8 + $0x350] sm:$0xff]
      %v2671 = vld [vmem:[%s8 + $0x358] sm:$0xff]
      %v2672 = vld [vmem:[%s8 + $0x360] sm:$0xff]
      %v2673 = vld [vmem:[%s8 + $0x368] sm:$0xff]
      %v2674 = vld [vmem:[%s8 + $0x370] sm:$0xff]
      %v2675 = vld [vmem:[%s8 + $0x378] sm:$0xff]
      %v2676 = vld [vmem:[%s16] sm:$0xff]
      %v2678 = vlaneseq
      %v2679 = vshrl.u32 %v2678, 7
      %v2680 = vsub.s32 0, %v2679
      %v2681 = vrot.slane %v2676, %v2680
      %v2682 = vlaneseq
      %v2683 = vshrl.u32 %v2682, 7
      %v2684 = vsub.s32 1, %v2683
      %v2685 = vrot.slane %v2676, %v2684
      %v2686 = vlaneseq
      %v2687 = vshrl.u32 %v2686, 7
      %v2688 = vsub.s32 2, %v2687
      %v2689 = vrot.slane %v2676, %v2688
      %v2690 = vlaneseq
      %v2691 = vshrl.u32 %v2690, 7
      %v2692 = vsub.s32 3, %v2691
      %v2693 = vrot.slane %v2676, %v2692
      %v2694 = vlaneseq
      %v2695 = vshrl.u32 %v2694, 7
      %v2696 = vsub.s32 4, %v2695
      %v2697 = vrot.slane %v2676, %v2696
      %v2698 = vlaneseq
      %v2699 = vshrl.u32 %v2698, 7
      %v2700 = vsub.s32 5, %v2699
      %v2701 = vrot.slane %v2676, %v2700
      %v2702 = vlaneseq
      %v2703 = vshrl.u32 %v2702, 7
      %v2704 = vsub.s32 6, %v2703
      %v2705 = vrot.slane %v2676, %v2704
      %2713 = vmatprep.subr.mxu0 %v2565
      %2714 = vmatpush1.msra.mxu0 %v2564
      %2715 = vmatprep.subr.mxu0 %v2572
      %2716 = vmatpush1.msra.mxu0 %v2571
      %2717 = vmatprep.subr.mxu0 %v2579
      %2718 = vmatpush1.msra.mxu0 %v2578
      %2719 = vmatprep.subr.mxu0 %v2586
      %2720 = vmatpush1.msra.mxu0 %v2585
      %2721 = vmatprep.subr.mxu0 %v2593
      %2722 = vmatpush1.msra.mxu0 %v2592
      %2723 = vmatprep.subr.mxu0 %v2600
      %2724 = vmatpush1.msra.mxu0 %v2599
      %2725 = vmatprep.subr.mxu0 %v2607
      %2726 = vmatpush1.msra.mxu0 %v2606
      %2727 = vmatprep.subr.mxu0 %v2614
      %2728 = vmatpush1.msra.mxu0 %v2613
      %2729 = vmatprep.subr.mxu0 %v2621
      %2730 = vmatpush1.msra.mxu0 %v2620
      %2731 = vmatprep.subr.mxu0 %v2628
      %2732 = vmatpush1.msra.mxu0 %v2627
      %2733 = vmatprep.subr.mxu0 %v2635
      %2734 = vmatpush1.msra.mxu0 %v2634
      %2735 = vmatprep.subr.mxu0 %v2642
      %2736 = vmatpush1.msra.mxu0 %v2641
      %2737 = vmatprep.subr.mxu0 %v2649
      %2738 = vmatpush1.msra.mxu0 %v2648
      %2739 = vmatprep.subr.mxu0 %v2656
      %2740 = vmatpush1.msra.mxu0 %v2655
      %2741 = vmatprep.subr.mxu0 %v2663
      %2742 = vmatpush1.msra.mxu0 %v2662
      %2743 = vmatprep.subr.mxu0 %v2670
      %2744 = vmatpush1.msra.mxu0 %v2669
      %2745 = vmatprep.subr.mxu0 0.0
      %2746 = vmatpush1.msra.mxu0 0.0
      %2747 = vmatprep.subr.mxu0 0.0
      %2748 = vmatpush1.msra.mxu0 0.0
      %2749 = vmatprep.subr.mxu0 0.0
      %2750 = vmatpush1.msra.mxu0 0.0
      %2751 = vmatprep.subr.mxu0 0.0
      %2752 = vmatpush1.msra.mxu0 0.0
      %2753 = vmatprep.subr.mxu0 0.0
      %2754 = vmatpush1.msra.mxu0 0.0
      %2755 = vmatprep.subr.mxu0 0.0
      %2756 = vmatpush1.msra.mxu0 0.0
      %2757 = vmatprep.subr.mxu0 0.0
      %2758 = vmatpush1.msra.mxu0 0.0
      %2759 = vmatprep.subr.mxu0 0.0
      %2760 = vmatpush1.msra.mxu0 0.0
      %2761 = vmatprep.subr.mxu0 0.0
      %2762 = vmatpush1.msra.mxu0 0.0
      %2763 = vmatprep.subr.mxu0 0.0
      %2764 = vmatpush1.msra.mxu0 0.0
      %2765 = vmatprep.subr.mxu0 0.0
      %2766 = vmatpush1.msra.mxu0 0.0
      %2767 = vmatprep.subr.mxu0 0.0
      %2768 = vmatpush1.msra.mxu0 0.0
      %2769 = vmatprep.subr.mxu0 0.0
      %2770 = vmatpush1.msra.mxu0 0.0
      %2771 = vmatprep.subr.mxu0 0.0
      %2772 = vmatpush1.msra.mxu0 0.0
      %2773 = vmatprep.subr.mxu0 0.0
      %2774 = vmatpush1.msra.mxu0 0.0
      %2775 = vmatprep.subr.mxu0 0.0
      %2776 = vmatpush1.msra.mxu0 0.0
      %2777 = vmatprep.mubr.f32.mxu0 0.0
      %2778 = vmatmul.mubr.f32.gmra.mrb[0].mxu0 %v2548
      %v2779 = vpop.f32.mrb[0].mxu0
      %v2780 = vadd.f32 %v2681, %v2779
      %v2781 = vpop.f32.mrb[0].mxu0
      %v2782 = vadd.f32 %v2685, %v2781
      %2783 = vmatprep.mubr.f32.mxu0 0.0
      %2784 = vmatmul.mubr.f32.gmra.mrb[0].mxu0 %v2549
      %v2785 = vpop.f32.mrb[0].mxu0
      %v2786 = vadd.f32 %v2681, %v2785
      %v2787 = vpop.f32.mrb[0].mxu0
      %v2788 = vadd.f32 %v2685, %v2787
      %2789 = vmatprep.mubr.f32.mxu0 0.0
      %2790 = vmatmul.mubr.f32.gmra.mrb[0].mxu0 %v2550
      %v2791 = vpop.f32.mrb[0].mxu0
      %v2792 = vadd.f32 %v2681, %v2791
      %v2793 = vpop.f32.mrb[0].mxu0
      %v2794 = vadd.f32 %v2685, %v2793
      %2795 = vmatprep.mubr.f32.mxu0 0.0
      %2796 = vmatmul.mubr.f32.gmra.mrb[0].mxu0 %v2551
      %v2797 = vpop.f32.mrb[0].mxu0
      %v2798 = vadd.f32 %v2681, %v2797
      %v2799 = vpop.f32.mrb[0].mxu0
      %v2800 = vadd.f32 %v2685, %v2799
      %2801 = vmatprep.mubr.f32.mxu0 0.0
      %2802 = vmatmul.mubr.f32.gmra.mrb[0].mxu0 %v2552
      %v2803 = vpop.f32.mrb[0].mxu0
      %v2804 = vadd.f32 %v2681, %v2803
      %v2805 = vpop.f32.mrb[0].mxu0
      %v2806 = vadd.f32 %v2685, %v2805
      %2807 = vmatprep.mubr.f32.mxu0 0.0
      %2808 = vmatmul.mubr.f32.gmra.mrb[0].mxu0 %v2553
      %v2809 = vpop.f32.mrb[0].mxu0
      %v2810 = vadd.f32 %v2681, %v2809
      %v2811 = vpop.f32.mrb[0].mxu0
      %v2812 = vadd.f32 %v2685, %v2811
      %2813 = vmatprep.mubr.f32.mxu0 0.0
      %2814 = vmatmul.mubr.f32.gmra.mrb[0].mxu0 %v2554
      %v2815 = vpop.f32.mrb[0].mxu0
      %v2816 = vadd.f32 %v2681, %v2815
      %v2817 = vpop.f32.mrb[0].mxu0
      %v2818 = vadd.f32 %v2685, %v2817
      %2819 = vmatprep.mubr.f32.mxu0 0.0
      %2820 = vmatmul.mubr.f32.gmra.mrb[0].mxu0 %v2555
      %v2821 = vpop.f32.mrb[0].mxu0
      %v2822 = vadd.f32 %v2681, %v2821
      %v2823 = vpop.f32.mrb[0].mxu0
      %v2824 = vadd.f32 %v2685, %v2823
      %2825 = vmatprep.mubr.f32.mxu0 0.0
      %2826 = vmatmul.mubr.f32.gmra.mrb[0].mxu0 %v2556
      %v2827 = vpop.f32.mrb[0].mxu0
      %v2828 = vadd.f32 %v2681, %v2827
      %v2829 = vpop.f32.mrb[0].mxu0
      %v2830 = vadd.f32 %v2685, %v2829
      %2831 = vmatprep.mubr.f32.mxu0 0.0
      %2832 = vmatmul.mubr.f32.gmra.mrb[0].mxu0 %v2557
      %v2833 = vpop.f32.mrb[0].mxu0
      %v2834 = vadd.f32 %v2681, %v2833
      %v2835 = vpop.f32.mrb[0].mxu0
      %v2836 = vadd.f32 %v2685, %v2835
      %2837 = vmatprep.mubr.f32.mxu0 0.0
      %2838 = vmatmul.mubr.f32.gmra.mrb[0].mxu0 %v2558
      %v2839 = vpop.f32.mrb[0].mxu0
      %v2840 = vadd.f32 %v2681, %v2839
      %v2841 = vpop.f32.mrb[0].mxu0
      %v2842 = vadd.f32 %v2685, %v2841
      %2843 = vmatprep.mubr.f32.mxu0 0.0
      %2844 = vmatmul.mubr.f32.gmra.mrb[0].mxu0 %v2559
      %v2845 = vpop.f32.mrb[0].mxu0
      %v2846 = vadd.f32 %v2681, %v2845
      %v2847 = vpop.f32.mrb[0].mxu0
      %v2848 = vadd.f32 %v2685, %v2847
      %2849 = vmatprep.mubr.f32.mxu0 0.0
      %2850 = vmatmul.mubr.f32.gmra.mrb[0].mxu0 %v2560
      %v2851 = vpop.f32.mrb[0].mxu0
      %v2852 = vadd.f32 %v2681, %v2851
      %v2853 = vpop.f32.mrb[0].mxu0
      %v2854 = vadd.f32 %v2685, %v2853
      %2855 = vmatprep.mubr.f32.mxu0 0.0
      %2856 = vmatmul.mubr.f32.gmra.mrb[0].mxu0 %v2561
      %v2857 = vpop.f32.mrb[0].mxu0
      %v2858 = vadd.f32 %v2681, %v2857
      %v2859 = vpop.f32.mrb[0].mxu0
      %v2860 = vadd.f32 %v2685, %v2859
      %2861 = vmatprep.mubr.f32.mxu0 0.0
      %2862 = vmatmul.mubr.f32.gmra.mrb[0].mxu0 %v2562
      %v2863 = vpop.f32.mrb[0].mxu0
      %v2864 = vadd.f32 %v2681, %v2863
      %v2865 = vpop.f32.mrb[0].mxu0
      %v2866 = vadd.f32 %v2685, %v2865
      %2867 = vmatprep.mubr.f32.mxu0 0.0
      %2868 = vmatmul.mubr.f32.gmra.mrb[0].mxu0 %v2563
      %v2869 = vpop.f32.mrb[0].mxu0
      %v2870 = vadd.f32 %v2681, %v2869
      %v2871 = vpop.f32.mrb[0].mxu0
      %v2872 = vadd.f32 %v2685, %v2871
      %2873 = vdwg.mxu0
      %2874 = vmatprep.subr.mxu0 %v2567
      %2875 = vmatpush1.msra.mxu0 %v2566
      %2876 = vmatprep.subr.mxu0 %v2574
      %2877 = vmatpush1.msra.mxu0 %v2573
      %2878 = vmatprep.subr.mxu0 %v2581
      %2879 = vmatpush1.msra.mxu0 %v2580
      %2880 = vmatprep.subr.mxu0 %v2588
      %2881 = vmatpush1.msra.mxu0 %v2587
      %2882 = vmatprep.subr.mxu0 %v2595
      %2883 = vmatpush1.msra.mxu0 %v2594
      %2884 = vmatprep.subr.mxu0 %v2602
      %2885 = vmatpush1.msra.mxu0 %v2601
      %2886 = vmatprep.subr.mxu0 %v2609
      %2887 = vmatpush1.msra.mxu0 %v2608
      %2888 = vmatprep.subr.mxu0 %v2616
      %2889 = vmatpush1.msra.mxu0 %v2615
      %2890 = vmatprep.subr.mxu0 %v2623
      %2891 = vmatpush1.msra.mxu0 %v2622
      %2892 = vmatprep.subr.mxu0 %v2630
      %2893 = vmatpush1.msra.mxu0 %v2629
      %2894 = vmatprep.subr.mxu0 %v2637
      %2895 = vmatpush1.msra.mxu0 %v2636
      %2896 = vmatprep.subr.mxu0 %v2644
      %2897 = vmatpush1.msra.mxu0 %v2643
      %2898 = vmatprep.subr.mxu0 %v2651
      %2899 = vmatpush1.msra.mxu0 %v2650
      %2900 = vmatprep.subr.mxu0 %v2658
      %2901 = vmatpush1.msra.mxu0 %v2657
      %2902 = vmatprep.subr.mxu0 %v2665
      %2903 = vmatpush1.msra.mxu0 %v2664
      %2904 = vmatprep.subr.mxu0 %v2672
      %2905 = vmatpush1.msra.mxu0 %v2671
      %2906 = vmatprep.subr.mxu0 0.0
      %2907 = vmatpush1.msra.mxu0 0.0
      %2908 = vmatprep.subr.mxu0 0.0
      %2909 = vmatpush1.msra.mxu0 0.0
      %2910 = vmatprep.subr.mxu0 0.0
      %2911 = vmatpush1.msra.mxu0 0.0
      %2912 = vmatprep.subr.mxu0 0.0
      %2913 = vmatpush1.msra.mxu0 0.0
      %2914 = vmatprep.subr.mxu0 0.0
      %2915 = vmatpush1.msra.mxu0 0.0
      %2916 = vmatprep.subr.mxu0 0.0
      %2917 = vmatpush1.msra.mxu0 0.0
      %2918 = vmatprep.subr.mxu0 0.0
      %2919 = vmatpush1.msra.mxu0 0.0
      %2920 = vmatprep.subr.mxu0 0.0
      %2921 = vmatpush1.msra.mxu0 0.0
      %2922 = vmatprep.subr.mxu0 0.0
      %2923 = vmatpush1.msra.mxu0 0.0
      %2924 = vmatprep.subr.mxu0 0.0
      %2925 = vmatpush1.msra.mxu0 0.0
      %2926 = vmatprep.subr.mxu0 0.0
      %2927 = vmatpush1.msra.mxu0 0.0
      %2928 = vmatprep.subr.mxu0 0.0
      %2929 = vmatpush1.msra.mxu0 0.0
      %2930 = vmatprep.subr.mxu0 0.0
      %2931 = vmatpush1.msra.mxu0 0.0
      %2932 = vmatprep.subr.mxu0 0.0
      %2933 = vmatpush1.msra.mxu0 0.0
      %2934 = vmatprep.subr.mxu0 0.0
      %2935 = vmatpush1.msra.mxu0 0.0
      %2936 = vmatprep.subr.mxu0 0.0
      %2937 = vmatpush1.msra.mxu0 0.0
      %2938 = vmatprep.mubr.f32.mxu0 0.0
      %2939 = vmatmul.mubr.f32.gmra.mrb[0].mxu0 %v2548
      %v2940 = vpop.f32.mrb[0].mxu0
      %v2941 = vadd.f32 %v2689, %v2940
      %v2942 = vpop.f32.mrb[0].mxu0
      %v2943 = vadd.f32 %v2693, %v2942
      %2944 = vmatprep.mubr.f32.mxu0 0.0
      %2945 = vmatmul.mubr.f32.gmra.mrb[0].mxu0 %v2549
      %v2946 = vpop.f32.mrb[0].mxu0
      %v2947 = vadd.f32 %v2689, %v2946
      %v2948 = vpop.f32.mrb[0].mxu0
      %v2949 = vadd.f32 %v2693, %v2948
      %2950 = vmatprep.mubr.f32.mxu0 0.0
      %2951 = vmatmul.mubr.f32.gmra.mrb[0].mxu0 %v2550
      %v2952 = vpop.f32.mrb[0].mxu0
      %v2953 = vadd.f32 %v2689, %v2952
      %v2954 = vpop.f32.mrb[0].mxu0
      %v2955 = vadd.f32 %v2693, %v2954
      %2956 = vmatprep.mubr.f32.mxu0 0.0
      %2957 = vmatmul.mubr.f32.gmra.mrb[0].mxu0 %v2551
      %v2958 = vpop.f32.mrb[0].mxu0
      %v2959 = vadd.f32 %v2689, %v2958
      %v2960 = vpop.f32.mrb[0].mxu0
      %v2961 = vadd.f32 %v2693, %v2960
      %2962 = vmatprep.mubr.f32.mxu0 0.0
      %2963 = vmatmul.mubr.f32.gmra.mrb[0].mxu0 %v2552
      %v2964 = vpop.f32.mrb[0].mxu0
      %v2965 = vadd.f32 %v2689, %v2964
      %v2966 = vpop.f32.mrb[0].mxu0
      %v2967 = vadd.f32 %v2693, %v2966
      %2968 = vmatprep.mubr.f32.mxu0 0.0
      %2969 = vmatmul.mubr.f32.gmra.mrb[0].mxu0 %v2553
      %v2970 = vpop.f32.mrb[0].mxu0
      %v2971 = vadd.f32 %v2689, %v2970
      %v2972 = vpop.f32.mrb[0].mxu0
      %v2973 = vadd.f32 %v2693, %v2972
      %2974 = vmatprep.mubr.f32.mxu0 0.0
      %2975 = vmatmul.mubr.f32.gmra.mrb[0].mxu0 %v2554
      %v2976 = vpop.f32.mrb[0].mxu0
      %v2977 = vadd.f32 %v2689, %v2976
      %v2978 = vpop.f32.mrb[0].mxu0
      %v2979 = vadd.f32 %v2693, %v2978
      %2980 = vmatprep.mubr.f32.mxu0 0.0
      %2981 = vmatmul.mubr.f32.gmra.mrb[0].mxu0 %v2555
      %v2982 = vpop.f32.mrb[0].mxu0
      %v2983 = vadd.f32 %v2689, %v2982
      %v2984 = vpop.f32.mrb[0].mxu0
      %v2985 = vadd.f32 %v2693, %v2984
      %2986 = vmatprep.mubr.f32.mxu0 0.0
      %2987 = vmatmul.mubr.f32.gmra.mrb[0].mxu0 %v2556
      %v2988 = vpop.f32.mrb[0].mxu0
      %v2989 = vadd.f32 %v2689, %v2988
      %v2990 = vpop.f32.mrb[0].mxu0
      %v2991 = vadd.f32 %v2693, %v2990
      %2992 = vmatprep.mubr.f32.mxu0 0.0
      %2993 = vmatmul.mubr.f32.gmra.mrb[0].mxu0 %v2557
      %v2994 = vpop.f32.mrb[0].mxu0
      %v2995 = vadd.f32 %v2689, %v2994
      %v2996 = vpop.f32.mrb[0].mxu0
      %v2997 = vadd.f32 %v2693, %v2996
      %2998 = vmatprep.mubr.f32.mxu0 0.0
      %2999 = vmatmul.mubr.f32.gmra.mrb[0].mxu0 %v2558
      %v3000 = vpop.f32.mrb[0].mxu0
      %v3001 = vadd.f32 %v2689, %v3000
      %v3002 = vpop.f32.mrb[0].mxu0
      %v3003 = vadd.f32 %v2693, %v3002
      %3004 = vmatprep.mubr.f32.mxu0 0.0
      %3005 = vmatmul.mubr.f32.gmra.mrb[0].mxu0 %v2559
      %v3006 = vpop.f32.mrb[0].mxu0
      %v3007 = vadd.f32 %v2689, %v3006
      %v3008 = vpop.f32.mrb[0].mxu0
      %v3009 = vadd.f32 %v2693, %v3008
      %3010 = vmatprep.mubr.f32.mxu0 0.0
      %3011 = vmatmul.mubr.f32.gmra.mrb[0].mxu0 %v2560
      %v3012 = vpop.f32.mrb[0].mxu0
      %v3013 = vadd.f32 %v2689, %v3012
      %v3014 = vpop.f32.mrb[0].mxu0
      %v3015 = vadd.f32 %v2693, %v3014
      %3016 = vmatprep.mubr.f32.mxu0 0.0
      %3017 = vmatmul.mubr.f32.gmra.mrb[0].mxu0 %v2561
      %v3018 = vpop.f32.mrb[0].mxu0
      %v3019 = vadd.f32 %v2689, %v3018
      %v3020 = vpop.f32.mrb[0].mxu0
      %v3021 = vadd.f32 %v2693, %v3020
      %3022 = vmatprep.mubr.f32.mxu0 0.0
      %3023 = vmatmul.mubr.f32.gmra.mrb[0].mxu0 %v2562
      %v3024 = vpop.f32.mrb[0].mxu0
      %v3025 = vadd.f32 %v2689, %v3024
      %v3026 = vpop.f32.mrb[0].mxu0
      %v3027 = vadd.f32 %v2693, %v3026
      %3028 = vmatprep.mubr.f32.mxu0 0.0
      %3029 = vmatmul.mubr.f32.gmra.mrb[0].mxu0 %v2563
      %v3030 = vpop.f32.mrb[0].mxu0
      %v3031 = vadd.f32 %v2689, %v3030
      %v3032 = vpop.f32.mrb[0].mxu0
      %v3033 = vadd.f32 %v2693, %v3032
      %3034 = vdwg.mxu0
      %3035 = vmatprep.subr.mxu0 %v2569
      %3036 = vmatpush1.msra.mxu0 %v2568
      %3037 = vmatprep.subr.mxu0 %v2576
      %3038 = vmatpush1.msra.mxu0 %v2575
      %3039 = vmatprep.subr.mxu0 %v2583
      %3040 = vmatpush1.msra.mxu0 %v2582
      %3041 = vmatprep.subr.mxu0 %v2590
      %3042 = vmatpush1.msra.mxu0 %v2589
      %3043 = vmatprep.subr.mxu0 %v2597
      %3044 = vmatpush1.msra.mxu0 %v2596
      %3045 = vmatprep.subr.mxu0 %v2604
      %3046 = vmatpush1.msra.mxu0 %v2603
      %3047 = vmatprep.subr.mxu0 %v2611
      %3048 = vmatpush1.msra.mxu0 %v2610
      %3049 = vmatprep.subr.mxu0 %v2618
      %3050 = vmatpush1.msra.mxu0 %v2617
      %3051 = vmatprep.subr.mxu0 %v2625
      %3052 = vmatpush1.msra.mxu0 %v2624
      %3053 = vmatprep.subr.mxu0 %v2632
      %3054 = vmatpush1.msra.mxu0 %v2631
      %3055 = vmatprep.subr.mxu0 %v2639
      %3056 = vmatpush1.msra.mxu0 %v2638
      %3057 = vmatprep.subr.mxu0 %v2646
      %3058 = vmatpush1.msra.mxu0 %v2645
      %3059 = vmatprep.subr.mxu0 %v2653
      %3060 = vmatpush1.msra.mxu0 %v2652
      %3061 = vmatprep.subr.mxu0 %v2660
      %3062 = vmatpush1.msra.mxu0 %v2659
      %3063 = vmatprep.subr.mxu0 %v2667
      %3064 = vmatpush1.msra.mxu0 %v2666
      %3065 = vmatprep.subr.mxu0 %v2674
      %3066 = vmatpush1.msra.mxu0 %v2673
      %3067 = vmatprep.subr.mxu0 0.0
      %3068 = vmatpush1.msra.mxu0 0.0
      %3069 = vmatprep.subr.mxu0 0.0
      %3070 = vmatpush1.msra.mxu0 0.0
      %3071 = vmatprep.subr.mxu0 0.0
      %3072 = vmatpush1.msra.mxu0 0.0
      %3073 = vmatprep.subr.mxu0 0.0
      %3074 = vmatpush1.msra.mxu0 0.0
      %3075 = vmatprep.subr.mxu0 0.0
      %3076 = vmatpush1.msra.mxu0 0.0
      %3077 = vmatprep.subr.mxu0 0.0
      %3078 = vmatpush1.msra.mxu0 0.0
      %3079 = vmatprep.subr.mxu0 0.0
      %3080 = vmatpush1.msra.mxu0 0.0
      %3081 = vmatprep.subr.mxu0 0.0
      %3082 = vmatpush1.msra.mxu0 0.0
      %3083 = vmatprep.subr.mxu0 0.0
      %3084 = vmatpush1.msra.mxu0 0.0
      %3085 = vmatprep.subr.mxu0 0.0
      %3086 = vmatpush1.msra.mxu0 0.0
      %3087 = vmatprep.subr.mxu0 0.0
      %3088 = vmatpush1.msra.mxu0 0.0
      %3089 = vmatprep.subr.mxu0 0.0
      %3090 = vmatpush1.msra.mxu0 0.0
      %3091 = vmatprep.subr.mxu0 0.0
      %3092 = vmatpush1.msra.mxu0 0.0
      %3093 = vmatprep.subr.mxu0 0.0
      %3094 = vmatpush1.msra.mxu0 0.0
      %3095 = vmatprep.subr.mxu0 0.0
      %3096 = vmatpush1.msra.mxu0 0.0
      %3097 = vmatprep.subr.mxu0 0.0
      %3098 = vmatpush1.msra.mxu0 0.0
      %3099 = vmatprep.mubr.f32.mxu0 0.0
      %3100 = vmatmul.mubr.f32.gmra.mrb[0].mxu0 %v2548
      %v3101 = vpop.f32.mrb[0].mxu0
      %v3102 = vadd.f32 %v2697, %v3101
      %v3103 = vpop.f32.mrb[0].mxu0
      %v3104 = vadd.f32 %v2701, %v3103
      %3105 = vmatprep.mubr.f32.mxu0 0.0
      %3106 = vmatmul.mubr.f32.gmra.mrb[0].mxu0 %v2549
      %v3107 = vpop.f32.mrb[0].mxu0
      %v3108 = vadd.f32 %v2697, %v3107
      %v3109 = vpop.f32.mrb[0].mxu0
      %v3110 = vadd.f32 %v2701, %v3109
      %3111 = vmatprep.mubr.f32.mxu0 0.0
      %3112 = vmatmul.mubr.f32.gmra.mrb[0].mxu0 %v2550
      %v3113 = vpop.f32.mrb[0].mxu0
      %v3114 = vadd.f32 %v2697, %v3113
      %v3115 = vpop.f32.mrb[0].mxu0
      %v3116 = vadd.f32 %v2701, %v3115
      %3117 = vmatprep.mubr.f32.mxu0 0.0
      %3118 = vmatmul.mubr.f32.gmra.mrb[0].mxu0 %v2551
      %v3119 = vpop.f32.mrb[0].mxu0
      %v3120 = vadd.f32 %v2697, %v3119
      %v3121 = vpop.f32.mrb[0].mxu0
      %v3122 = vadd.f32 %v2701, %v3121
      %3123 = vmatprep.mubr.f32.mxu0 0.0
      %3124 = vmatmul.mubr.f32.gmra.mrb[0].mxu0 %v2552
      %v3125 = vpop.f32.mrb[0].mxu0
      %v3126 = vadd.f32 %v2697, %v3125
      %v3127 = vpop.f32.mrb[0].mxu0
      %v3128 = vadd.f32 %v2701, %v3127
      %3129 = vmatprep.mubr.f32.mxu0 0.0
      %3130 = vmatmul.mubr.f32.gmra.mrb[0].mxu0 %v2553
      %v3131 = vpop.f32.mrb[0].mxu0
      %v3132 = vadd.f32 %v2697, %v3131
      %v3133 = vpop.f32.mrb[0].mxu0
      %v3134 = vadd.f32 %v2701, %v3133
      %3135 = vmatprep.mubr.f32.mxu0 0.0
      %3136 = vmatmul.mubr.f32.gmra.mrb[0].mxu0 %v2554
      %v3137 = vpop.f32.mrb[0].mxu0
      %v3138 = vadd.f32 %v2697, %v3137
      %v3139 = vpop.f32.mrb[0].mxu0
      %v3140 = vadd.f32 %v2701, %v3139
      %3141 = vmatprep.mubr.f32.mxu0 0.0
      %3142 = vmatmul.mubr.f32.gmra.mrb[0].mxu0 %v2555
      %v3143 = vpop.f32.mrb[0].mxu0
      %v3144 = vadd.f32 %v2697, %v3143
      %v3145 = vpop.f32.mrb[0].mxu0
      %v3146 = vadd.f32 %v2701, %v3145
      %3147 = vmatprep.mubr.f32.mxu0 0.0
      %3148 = vmatmul.mubr.f32.gmra.mrb[0].mxu0 %v2556
      %v3149 = vpop.f32.mrb[0].mxu0
      %v3150 = vadd.f32 %v2697, %v3149
      %v3151 = vpop.f32.mrb[0].mxu0
      %v3152 = vadd.f32 %v2701, %v3151
      %3153 = vmatprep.mubr.f32.mxu0 0.0
      %3154 = vmatmul.mubr.f32.gmra.mrb[0].mxu0 %v2557
      %v3155 = vpop.f32.mrb[0].mxu0
      %v3156 = vadd.f32 %v2697, %v3155
      %v3157 = vpop.f32.mrb[0].mxu0
      %v3158 = vadd.f32 %v2701, %v3157
      %3159 = vmatprep.mubr.f32.mxu0 0.0
      %3160 = vmatmul.mubr.f32.gmra.mrb[0].mxu0 %v2558
      %v3161 = vpop.f32.mrb[0].mxu0
      %v3162 = vadd.f32 %v2697, %v3161
      %v3163 = vpop.f32.mrb[0].mxu0
      %v3164 = vadd.f32 %v2701, %v3163
      %3165 = vmatprep.mubr.f32.mxu0 0.0
      %3166 = vmatmul.mubr.f32.gmra.mrb[0].mxu0 %v2559
      %v3167 = vpop.f32.mrb[0].mxu0
      %v3168 = vadd.f32 %v2697, %v3167
      %v3169 = vpop.f32.mrb[0].mxu0
      %v3170 = vadd.f32 %v2701, %v3169
      %3171 = vmatprep.mubr.f32.mxu0 0.0
      %3172 = vmatmul.mubr.f32.gmra.mrb[0].mxu0 %v2560
      %v3173 = vpop.f32.mrb[0].mxu0
      %v3174 = vadd.f32 %v2697, %v3173
      %v3175 = vpop.f32.mrb[0].mxu0
      %v3176 = vadd.f32 %v2701, %v3175
      %3177 = vmatprep.mubr.f32.mxu0 0.0
      %3178 = vmatmul.mubr.f32.gmra.mrb[0].mxu0 %v2561
      %v3179 = vpop.f32.mrb[0].mxu0
      %v3180 = vadd.f32 %v2697, %v3179
      %v3181 = vpop.f32.mrb[0].mxu0
      %v3182 = vadd.f32 %v2701, %v3181
      %3183 = vmatprep.mubr.f32.mxu0 0.0
      %3184 = vmatmul.mubr.f32.gmra.mrb[0].mxu0 %v2562
      %v3185 = vpop.f32.mrb[0].mxu0
      %v3186 = vadd.f32 %v2697, %v3185
      %v3187 = vpop.f32.mrb[0].mxu0
      %v3188 = vadd.f32 %v2701, %v3187
      %3189 = vmatprep.mubr.f32.mxu0 0.0
      %3190 = vmatmul.mubr.f32.gmra.mrb[0].mxu0 %v2563
      %v3191 = vpop.f32.mrb[0].mxu0
      %v3192 = vadd.f32 %v2697, %v3191
      %v3193 = vpop.f32.mrb[0].mxu0
      %v3194 = vadd.f32 %v2701, %v3193
      %3195 = vdwg.mxu0
      %3196 = vmatprep.subr.mxu0 0.0
      %3197 = vmatpush1.msra.mxu0 %v2570
      %3198 = vmatprep.subr.mxu0 0.0
      %3199 = vmatpush1.msra.mxu0 %v2577
      %3200 = vmatprep.subr.mxu0 0.0
      %3201 = vmatpush1.msra.mxu0 %v2584
      %3202 = vmatprep.subr.mxu0 0.0
      %3203 = vmatpush1.msra.mxu0 %v2591
      %3204 = vmatprep.subr.mxu0 0.0
      %3205 = vmatpush1.msra.mxu0 %v2598
      %3206 = vmatprep.subr.mxu0 0.0
      %3207 = vmatpush1.msra.mxu0 %v2605
      %3208 = vmatprep.subr.mxu0 0.0
      %3209 = vmatpush1.msra.mxu0 %v2612
      %3210 = vmatprep.subr.mxu0 0.0
      %3211 = vmatpush1.msra.mxu0 %v2619
      %3212 = vmatprep.subr.mxu0 0.0
      %3213 = vmatpush1.msra.mxu0 %v2626
      %3214 = vmatprep.subr.mxu0 0.0
      %3215 = vmatpush1.msra.mxu0 %v2633
      %3216 = vmatprep.subr.mxu0 0.0
      %3217 = vmatpush1.msra.mxu0 %v2640
      %3218 = vmatprep.subr.mxu0 0.0
      %3219 = vmatpush1.msra.mxu0 %v2647
      %3220 = vmatprep.subr.mxu0 0.0
      %3221 = vmatpush1.msra.mxu0 %v2654
      %3222 = vmatprep.subr.mxu0 0.0
      %3223 = vmatpush1.msra.mxu0 %v2661
      %3224 = vmatprep.subr.mxu0 0.0
      %3225 = vmatpush1.msra.mxu0 %v2668
      %3226 = vmatprep.subr.mxu0 0.0
      %3227 = vmatpush1.msra.mxu0 %v2675
      %3228 = vmatprep.subr.mxu0 0.0
      %3229 = vmatpush1.msra.mxu0 0.0
      %3230 = vmatprep.subr.mxu0 0.0
      %3231 = vmatpush1.msra.mxu0 0.0
      %3232 = vmatprep.subr.mxu0 0.0
      %3233 = vmatpush1.msra.mxu0 0.0
      %3234 = vmatprep.subr.mxu0 0.0
      %3235 = vmatpush1.msra.mxu0 0.0
      %3236 = vmatprep.subr.mxu0 0.0
      %3237 = vmatpush1.msra.mxu0 0.0
      %3238 = vmatprep.subr.mxu0 0.0
      %3239 = vmatpush1.msra.mxu0 0.0
      %3240 = vmatprep.subr.mxu0 0.0
      %3241 = vmatpush1.msra.mxu0 0.0
      %3242 = vmatprep.subr.mxu0 0.0
      %3243 = vmatpush1.msra.mxu0 0.0
      %3244 = vmatprep.subr.mxu0 0.0
      %3245 = vmatpush1.msra.mxu0 0.0
      %3246 = vmatprep.subr.mxu0 0.0
      %3247 = vmatpush1.msra.mxu0 0.0
      %3248 = vmatprep.subr.mxu0 0.0
      %3249 = vmatpush1.msra.mxu0 0.0
      %3250 = vmatprep.subr.mxu0 0.0
      %3251 = vmatpush1.msra.mxu0 0.0
      %3252 = vmatprep.subr.mxu0 0.0
      %3253 = vmatpush1.msra.mxu0 0.0
      %3254 = vmatprep.subr.mxu0 0.0
      %3255 = vmatpush1.msra.mxu0 0.0
      %3256 = vmatprep.subr.mxu0 0.0
      %3257 = vmatpush1.msra.mxu0 0.0
      %3258 = vmatprep.subr.mxu0 0.0
      %3259 = vmatpush1.msra.mxu0 0.0
      %3260 = vmatprep.mubr.f32.mxu0 0.0
      %3261 = vmatmul.mubr.f32.gmra.mrb[0].mxu0 %v2548
      %v3262 = vpop.f32.mrb[0].mxu0
      %v3263 = vadd.f32 %v2705, %v3262
      %v3264 = vpop.f32.mrb[0].mxu0
      %3265 = vmatprep.mubr.f32.mxu0 0.0
      %3266 = vmatmul.mubr.f32.gmra.mrb[0].mxu0 %v2549
      %v3267 = vpop.f32.mrb[0].mxu0
      %v3268 = vadd.f32 %v2705, %v3267
      %v3269 = vpop.f32.mrb[0].mxu0
      %3270 = vmatprep.mubr.f32.mxu0 0.0
      %3271 = vmatmul.mubr.f32.gmra.mrb[0].mxu0 %v2550
      %v3272 = vpop.f32.mrb[0].mxu0
      %v3273 = vadd.f32 %v2705, %v3272
      %v3274 = vpop.f32.mrb[0].mxu0
      %3275 = vmatprep.mubr.f32.mxu0 0.0
      %3276 = vmatmul.mubr.f32.gmra.mrb[0].mxu0 %v2551
      %v3277 = vpop.f32.mrb[0].mxu0
      %v3278 = vadd.f32 %v2705, %v3277
      %v3279 = vpop.f32.mrb[0].mxu0
      %3280 = vmatprep.mubr.f32.mxu0 0.0
      %3281 = vmatmul.mubr.f32.gmra.mrb[0].mxu0 %v2552
      %v3282 = vpop.f32.mrb[0].mxu0
      %v3283 = vadd.f32 %v2705, %v3282
      %v3284 = vpop.f32.mrb[0].mxu0
      %3285 = vmatprep.mubr.f32.mxu0 0.0
      %3286 = vmatmul.mubr.f32.gmra.mrb[0].mxu0 %v2553
      %v3287 = vpop.f32.mrb[0].mxu0
      %v3288 = vadd.f32 %v2705, %v3287
      %v3289 = vpop.f32.mrb[0].mxu0
      %3290 = vmatprep.mubr.f32.mxu0 0.0
      %3291 = vmatmul.mubr.f32.gmra.mrb[0].mxu0 %v2554
      %v3292 = vpop.f32.mrb[0].mxu0
      %v3293 = vadd.f32 %v2705, %v3292
      %v3294 = vpop.f32.mrb[0].mxu0
      %3295 = vmatprep.mubr.f32.mxu0 0.0
      %3296 = vmatmul.mubr.f32.gmra.mrb[0].mxu0 %v2555
      %v3297 = vpop.f32.mrb[0].mxu0
      %v3298 = vadd.f32 %v2705, %v3297
      %v3299 = vpop.f32.mrb[0].mxu0
      %3300 = vmatprep.mubr.f32.mxu0 0.0
      %3301 = vmatmul.mubr.f32.gmra.mrb[0].mxu0 %v2556
      %v3302 = vpop.f32.mrb[0].mxu0
      %v3303 = vadd.f32 %v2705, %v3302
      %v3304 = vpop.f32.mrb[0].mxu0
      %3305 = vmatprep.mubr.f32.mxu0 0.0
      %3306 = vmatmul.mubr.f32.gmra.mrb[0].mxu0 %v2557
      %v3307 = vpop.f32.mrb[0].mxu0
      %v3308 = vadd.f32 %v2705, %v3307
      %v3309 = vpop.f32.mrb[0].mxu0
      %3310 = vmatprep.mubr.f32.mxu0 0.0
      %3311 = vmatmul.mubr.f32.gmra.mrb[0].mxu0 %v2558
      %v3312 = vpop.f32.mrb[0].mxu0
      %v3313 = vadd.f32 %v2705, %v3312
      %v3314 = vpop.f32.mrb[0].mxu0
      %3315 = vmatprep.mubr.f32.mxu0 0.0
      %3316 = vmatmul.mubr.f32.gmra.mrb[0].mxu0 %v2559
      %v3317 = vpop.f32.mrb[0].mxu0
      %v3318 = vadd.f32 %v2705, %v3317
      %v3319 = vpop.f32.mrb[0].mxu0
      %3320 = vmatprep.mubr.f32.mxu0 0.0
      %3321 = vmatmul.mubr.f32.gmra.mrb[0].mxu0 %v2560
      %v3322 = vpop.f32.mrb[0].mxu0
      %v3323 = vadd.f32 %v2705, %v3322
      %v3324 = vpop.f32.mrb[0].mxu0
      %3325 = vmatprep.mubr.f32.mxu0 0.0
      %3326 = vmatmul.mubr.f32.gmra.mrb[0].mxu0 %v2561
      %v3327 = vpop.f32.mrb[0].mxu0
      %v3328 = vadd.f32 %v2705, %v3327
      %v3329 = vpop.f32.mrb[0].mxu0
      %3330 = vmatprep.mubr.f32.mxu0 0.0
      %3331 = vmatmul.mubr.f32.gmra.mrb[0].mxu0 %v2562
      %v3332 = vpop.f32.mrb[0].mxu0
      %v3333 = vadd.f32 %v2705, %v3332
      %v3334 = vpop.f32.mrb[0].mxu0
      %3335 = vmatprep.mubr.f32.mxu0 0.0
      %3336 = vmatmul.mubr.f32.gmra.mrb[0].mxu0 %v2563
      %v3337 = vpop.f32.mrb[0].mxu0
      %v3338 = vadd.f32 %v2705, %v3337
      %v3339 = vpop.f32.mrb[0].mxu0
      %3340 = vdwg.mxu0
      %v3341 = vxor.u32 %v2780, 2147483648
      %v3342 = vxor.u32 %v2782, 2147483648
      %v3343 = vxor.u32 %v2941, 2147483648
      %v3344 = vxor.u32 %v2943, 2147483648
      %v3345 = vxor.u32 %v3102, 2147483648
      %v3346 = vxor.u32 %v3104, 2147483648
      %v3347 = vxor.u32 %v3263, 2147483648
      %v3348 = vxor.u32 %v2786, 2147483648
      %v3349 = vxor.u32 %v2788, 2147483648
      %v3350 = vxor.u32 %v2947, 2147483648
      %v3351 = vxor.u32 %v2949, 2147483648
      %v3352 = vxor.u32 %v3108, 2147483648
      %v3353 = vxor.u32 %v3110, 2147483648
      %v3354 = vxor.u32 %v3268, 2147483648
      %v3355 = vxor.u32 %v2792, 2147483648
      %v3356 = vxor.u32 %v2794, 2147483648
      %v3357 = vxor.u32 %v2953, 2147483648
      %v3358 = vxor.u32 %v2955, 2147483648
      %v3359 = vxor.u32 %v3114, 2147483648
      %v3360 = vxor.u32 %v3116, 2147483648
      %v3361 = vxor.u32 %v3273, 2147483648
      %v3362 = vxor.u32 %v2798, 2147483648
      %v3363 = vxor.u32 %v2800, 2147483648
      %v3364 = vxor.u32 %v2959, 2147483648
      %v3365 = vxor.u32 %v2961, 2147483648
      %v3366 = vxor.u32 %v3120, 2147483648
      %v3367 = vxor.u32 %v3122, 2147483648
      %v3368 = vxor.u32 %v3278, 2147483648
      %v3369 = vxor.u32 %v2804, 2147483648
      %v3370 = vxor.u32 %v2806, 2147483648
      %v3371 = vxor.u32 %v2965, 2147483648
      %v3372 = vxor.u32 %v2967, 2147483648
      %v3373 = vxor.u32 %v3126, 2147483648
      %v3374 = vxor.u32 %v3128, 2147483648
      %v3375 = vxor.u32 %v3283, 2147483648
      %v3376 = vxor.u32 %v2810, 2147483648
      %v3377 = vxor.u32 %v2812, 2147483648
      %v3378 = vxor.u32 %v2971, 2147483648
      %v3379 = vxor.u32 %v2973, 2147483648
      %v3380 = vxor.u32 %v3132, 2147483648
      %v3381 = vxor.u32 %v3134, 2147483648
      %v3382 = vxor.u32 %v3288, 2147483648
      %v3383 = vxor.u32 %v2816, 2147483648
      %v3384 = vxor.u32 %v2818, 2147483648
      %v3385 = vxor.u32 %v2977, 2147483648
      %v3386 = vxor.u32 %v2979, 2147483648
      %v3387 = vxor.u32 %v3138, 2147483648
      %v3388 = vxor.u32 %v3140, 2147483648
      %v3389 = vxor.u32 %v3293, 2147483648
      %v3390 = vxor.u32 %v2822, 2147483648
      %v3391 = vxor.u32 %v2824, 2147483648
      %v3392 = vxor.u32 %v2983, 2147483648
      %v3393 = vxor.u32 %v2985, 2147483648
      %v3394 = vxor.u32 %v3144, 2147483648
      %v3395 = vxor.u32 %v3146, 2147483648
      %v3396 = vxor.u32 %v3298, 2147483648
      %v3397 = vxor.u32 %v2828, 2147483648
      %v3398 = vxor.u32 %v2830, 2147483648
      %v3399 = vxor.u32 %v2989, 2147483648
      %v3400 = vxor.u32 %v2991, 2147483648
      %v3401 = vxor.u32 %v3150, 2147483648
      %v3402 = vxor.u32 %v3152, 2147483648
      %v3403 = vxor.u32 %v3303, 2147483648
      %v3404 = vxor.u32 %v2834, 2147483648
      %v3405 = vxor.u32 %v2836, 2147483648
      %v3406 = vxor.u32 %v2995, 2147483648
      %v3407 = vxor.u32 %v2997, 2147483648
      %v3408 = vxor.u32 %v3156, 2147483648
      %v3409 = vxor.u32 %v3158, 2147483648
      %v3410 = vxor.u32 %v3308, 2147483648
      %v3411 = vxor.u32 %v2840, 2147483648
      %v3412 = vxor.u32 %v2842, 2147483648
      %v3413 = vxor.u32 %v3001, 2147483648
      %v3414 = vxor.u32 %v3003, 2147483648
      %v3415 = vxor.u32 %v3162, 2147483648
      %v3416 = vxor.u32 %v3164, 2147483648
      %v3417 = vxor.u32 %v3313, 2147483648
      %v3418 = vxor.u32 %v2846, 2147483648
      %v3419 = vxor.u32 %v2848, 2147483648
      %v3420 = vxor.u32 %v3007, 2147483648
      %v3421 = vxor.u32 %v3009, 2147483648
      %v3422 = vxor.u32 %v3168, 2147483648
      %v3423 = vxor.u32 %v3170, 2147483648
      %v3424 = vxor.u32 %v3318, 2147483648
      %v3425 = vxor.u32 %v2852, 2147483648
      %v3426 = vxor.u32 %v2854, 2147483648
      %v3427 = vxor.u32 %v3013, 2147483648
      %v3428 = vxor.u32 %v3015, 2147483648
      %v3429 = vxor.u32 %v3174, 2147483648
      %v3430 = vxor.u32 %v3176, 2147483648
      %v3431 = vxor.u32 %v3323, 2147483648
      %v3432 = vxor.u32 %v2858, 2147483648
      %v3433 = vxor.u32 %v2860, 2147483648
      %v3434 = vxor.u32 %v3019, 2147483648
      %v3435 = vxor.u32 %v3021, 2147483648
      %v3436 = vxor.u32 %v3180, 2147483648
      %v3437 = vxor.u32 %v3182, 2147483648
      %v3438 = vxor.u32 %v3328, 2147483648
      %v3439 = vxor.u32 %v2864, 2147483648
      %v3440 = vxor.u32 %v2866, 2147483648
      %v3441 = vxor.u32 %v3025, 2147483648
      %v3442 = vxor.u32 %v3027, 2147483648
      %v3443 = vxor.u32 %v3186, 2147483648
      %v3444 = vxor.u32 %v3188, 2147483648
      %v3445 = vxor.u32 %v3333, 2147483648
      %v3446 = vxor.u32 %v2870, 2147483648
      %v3447 = vxor.u32 %v2872, 2147483648
      %v3448 = vxor.u32 %v3031, 2147483648
      %v3449 = vxor.u32 %v3033, 2147483648
      %v3450 = vxor.u32 %v3192, 2147483648
      %v3451 = vxor.u32 %v3194, 2147483648
      %v3452 = vxor.u32 %v3338, 2147483648
      %v3453 = vmul.f32 %v3341, 1.442695
      %v3454 = vpow.pop %v3453
      %v3455 = vmul.f32 %v3342, 1.442695
      %v3456 = vpow.pop %v3455
      %v3457 = vmul.f32 %v3343, 1.442695
      %v3458 = vpow.pop %v3457
      %v3459 = vmul.f32 %v3344, 1.442695
      %v3460 = vpow.pop %v3459
      %v3461 = vmul.f32 %v3345, 1.442695
      %v3462 = vpow.pop %v3461
      %v3463 = vmul.f32 %v3346, 1.442695
      %v3464 = vpow.pop %v3463
      %v3465 = vmul.f32 %v3347, 1.442695
      %v3466 = vpow.pop %v3465
      %v3467 = vmul.f32 %v3348, 1.442695
      %v3468 = vpow.pop %v3467
      %v3469 = vmul.f32 %v3349, 1.442695
      %v3470 = vpow.pop %v3469
      %v3471 = vmul.f32 %v3350, 1.442695
      %v3472 = vpow.pop %v3471
      %v3473 = vmul.f32 %v3351, 1.442695
      %v3474 = vpow.pop %v3473
      %v3475 = vmul.f32 %v3352, 1.442695
      %v3476 = vpow.pop %v3475
      %v3477 = vmul.f32 %v3353, 1.442695
      %v3478 = vpow.pop %v3477
      %v3479 = vmul.f32 %v3354, 1.442695
      %v3480 = vpow.pop %v3479
      %v3481 = vmul.f32 %v3355, 1.442695
      %v3482 = vpow.pop %v3481
      %v3483 = vmul.f32 %v3356, 1.442695
      %v3484 = vpow.pop %v3483
      %v3485 = vmul.f32 %v3357, 1.442695
      %v3486 = vpow.pop %v3485
      %v3487 = vmul.f32 %v3358, 1.442695
      %v3488 = vpow.pop %v3487
      %v3489 = vmul.f32 %v3359, 1.442695
      %v3490 = vpow.pop %v3489
      %v3491 = vmul.f32 %v3360, 1.442695
      %v3492 = vpow.pop %v3491
      %v3493 = vmul.f32 %v3361, 1.442695
      %v3494 = vpow.pop %v3493
      %v3495 = vmul.f32 %v3362, 1.442695
      %v3496 = vpow.pop %v3495
      %v3497 = vmul.f32 %v3363, 1.442695
      %v3498 = vpow.pop %v3497
      %v3499 = vmul.f32 %v3364, 1.442695
      %v3500 = vpow.pop %v3499
      %v3501 = vmul.f32 %v3365, 1.442695
      %v3502 = vpow.pop %v3501
      %v3503 = vmul.f32 %v3366, 1.442695
      %v3504 = vpow.pop %v3503
      %v3505 = vmul.f32 %v3367, 1.442695
      %v3506 = vpow.pop %v3505
      %v3507 = vmul.f32 %v3368, 1.442695
      %v3508 = vpow.pop %v3507
      %v3509 = vmul.f32 %v3369, 1.442695
      %v3510 = vpow.pop %v3509
      %v3511 = vmul.f32 %v3370, 1.442695
      %v3512 = vpow.pop %v3511
      %v3513 = vmul.f32 %v3371, 1.442695
      %v3514 = vpow.pop %v3513
      %v3515 = vmul.f32 %v3372, 1.442695
      %v3516 = vpow.pop %v3515
      %v3517 = vmul.f32 %v3373, 1.442695
      %v3518 = vpow.pop %v3517
      %v3519 = vmul.f32 %v3374, 1.442695
      %v3520 = vpow.pop %v3519
      %v3521 = vmul.f32 %v3375, 1.442695
      %v3522 = vpow.pop %v3521
      %v3523 = vmul.f32 %v3376, 1.442695
      %v3524 = vpow.pop %v3523
      %v3525 = vmul.f32 %v3377, 1.442695
      %v3526 = vpow.pop %v3525
      %v3527 = vmul.f32 %v3378, 1.442695
      %v3528 = vpow.pop %v3527
      %v3529 = vmul.f32 %v3379, 1.442695
      %v3530 = vpow.pop %v3529
      %v3531 = vmul.f32 %v3380, 1.442695
      %v3532 = vpow.pop %v3531
      %v3533 = vmul.f32 %v3381, 1.442695
      %v3534 = vpow.pop %v3533
      %v3535 = vmul.f32 %v3382, 1.442695
      %v3536 = vpow.pop %v3535
      %v3537 = vmul.f32 %v3383, 1.442695
      %v3538 = vpow.pop %v3537
      %v3539 = vmul.f32 %v3384, 1.442695
      %v3540 = vpow.pop %v3539
      %v3541 = vmul.f32 %v3385, 1.442695
      %v3542 = vpow.pop %v3541
      %v3543 = vmul.f32 %v3386, 1.442695
      %v3544 = vpow.pop %v3543
      %v3545 = vmul.f32 %v3387, 1.442695
      %v3546 = vpow.pop %v3545
      %v3547 = vmul.f32 %v3388, 1.442695
      %v3548 = vpow.pop %v3547
      %v3549 = vmul.f32 %v3389, 1.442695
      %v3550 = vpow.pop %v3549
      %v3551 = vmul.f32 %v3390, 1.442695
      %v3552 = vpow.pop %v3551
      %v3553 = vmul.f32 %v3391, 1.442695
      %v3554 = vpow.pop %v3553
      %v3555 = vmul.f32 %v3392, 1.442695
      %v3556 = vpow.pop %v3555
      %v3557 = vmul.f32 %v3393, 1.442695
      %v3558 = vpow.pop %v3557
      %v3559 = vmul.f32 %v3394, 1.442695
      %v3560 = vpow.pop %v3559
      %v3561 = vmul.f32 %v3395, 1.442695
      %v3562 = vpow.pop %v3561
      %v3563 = vmul.f32 %v3396, 1.442695
      %v3564 = vpow.pop %v3563
      %v3565 = vmul.f32 %v3397, 1.442695
      %v3566 = vpow.pop %v3565
      %v3567 = vmul.f32 %v3398, 1.442695
      %v3568 = vpow.pop %v3567
      %v3569 = vmul.f32 %v3399, 1.442695
      %v3570 = vpow.pop %v3569
      %v3571 = vmul.f32 %v3400, 1.442695
      %v3572 = vpow.pop %v3571
      %v3573 = vmul.f32 %v3401, 1.442695
      %v3574 = vpow.pop %v3573
      %v3575 = vmul.f32 %v3402, 1.442695
      %v3576 = vpow.pop %v3575
      %v3577 = vmul.f32 %v3403, 1.442695
      %v3578 = vpow.pop %v3577
      %v3579 = vmul.f32 %v3404, 1.442695
      %v3580 = vpow.pop %v3579
      %v3581 = vmul.f32 %v3405, 1.442695
      %v3582 = vpow.pop %v3581
      %v3583 = vmul.f32 %v3406, 1.442695
      %v3584 = vpow.pop %v3583
      %v3585 = vmul.f32 %v3407, 1.442695
      %v3586 = vpow.pop %v3585
      %v3587 = vmul.f32 %v3408, 1.442695
      %v3588 = vpow.pop %v3587
      %v3589 = vmul.f32 %v3409, 1.442695
      %v3590 = vpow.pop %v3589
      %v3591 = vmul.f32 %v3410, 1.442695
      %v3592 = vpow.pop %v3591
      %v3593 = vmul.f32 %v3411, 1.442695
      %v3594 = vpow.pop %v3593
      %v3595 = vmul.f32 %v3412, 1.442695
      %v3596 = vpow.pop %v3595
      %v3597 = vmul.f32 %v3413, 1.442695
      %v3598 = vpow.pop %v3597
      %v3599 = vmul.f32 %v3414, 1.442695
      %v3600 = vpow.pop %v3599
      %v3601 = vmul.f32 %v3415, 1.442695
      %v3602 = vpow.pop %v3601
      %v3603 = vmul.f32 %v3416, 1.442695
      %v3604 = vpow.pop %v3603
      %v3605 = vmul.f32 %v3417, 1.442695
      %v3606 = vpow.pop %v3605
      %v3607 = vmul.f32 %v3418, 1.442695
      %v3608 = vpow.pop %v3607
      %v3609 = vmul.f32 %v3419, 1.442695
      %v3610 = vpow.pop %v3609
      %v3611 = vmul.f32 %v3420, 1.442695
      %v3612 = vpow.pop %v3611
      %v3613 = vmul.f32 %v3421, 1.442695
      %v3614 = vpow.pop %v3613
      %v3615 = vmul.f32 %v3422, 1.442695
      %v3616 = vpow.pop %v3615
      %v3617 = vmul.f32 %v3423, 1.442695
      %v3618 = vpow.pop %v3617
      %v3619 = vmul.f32 %v3424, 1.442695
      %v3620 = vpow.pop %v3619
      %v3621 = vmul.f32 %v3425, 1.442695
      %v3622 = vpow.pop %v3621
      %v3623 = vmul.f32 %v3426, 1.442695
      %v3624 = vpow.pop %v3623
      %v3625 = vmul.f32 %v3427, 1.442695
      %v3626 = vpow.pop %v3625
      %v3627 = vmul.f32 %v3428, 1.442695
      %v3628 = vpow.pop %v3627
      %v3629 = vmul.f32 %v3429, 1.442695
      %v3630 = vpow.pop %v3629
      %v3631 = vmul.f32 %v3430, 1.442695
      %v3632 = vpow.pop %v3631
      %v3633 = vmul.f32 %v3431, 1.442695
      %v3634 = vpow.pop %v3633
      %v3635 = vmul.f32 %v3432, 1.442695
      %v3636 = vpow.pop %v3635
      %v3637 = vmul.f32 %v3433, 1.442695
      %v3638 = vpow.pop %v3637
      %v3639 = vmul.f32 %v3434, 1.442695
      %v3640 = vpow.pop %v3639
      %v3641 = vmul.f32 %v3435, 1.442695
      %v3642 = vpow.pop %v3641
      %v3643 = vmul.f32 %v3436, 1.442695
      %v3644 = vpow.pop %v3643
      %v3645 = vmul.f32 %v3437, 1.442695
      %v3646 = vpow.pop %v3645
      %v3647 = vmul.f32 %v3438, 1.442695
      %v3648 = vpow.pop %v3647
      %v3649 = vmul.f32 %v3439, 1.442695
      %v3650 = vpow.pop %v3649
      %v3651 = vmul.f32 %v3440, 1.442695
      %v3652 = vpow.pop %v3651
      %v3653 = vmul.f32 %v3441, 1.442695
      %v3654 = vpow.pop %v3653
      %v3655 = vmul.f32 %v3442, 1.442695
      %v3656 = vpow.pop %v3655
      %v3657 = vmul.f32 %v3443, 1.442695
      %v3658 = vpow.pop %v3657
      %v3659 = vmul.f32 %v3444, 1.442695
      %v3660 = vpow.pop %v3659
      %v3661 = vmul.f32 %v3445, 1.442695
      %v3662 = vpow.pop %v3661
      %v3663 = vmul.f32 %v3446, 1.442695
      %v3664 = vpow.pop %v3663
      %v3665 = vmul.f32 %v3447, 1.442695
      %v3666 = vpow.pop %v3665
      %v3667 = vmul.f32 %v3448, 1.442695
      %v3668 = vpow.pop %v3667
      %v3669 = vmul.f32 %v3449, 1.442695
      %v3670 = vpow.pop %v3669
      %v3671 = vmul.f32 %v3450, 1.442695
      %v3672 = vpow.pop %v3671
      %v3673 = vmul.f32 %v3451, 1.442695
      %v3674 = vpow.pop %v3673
      %v3675 = vmul.f32 %v3452, 1.442695
      %v3676 = vpow.pop %v3675
      %v3677 = vadd.f32 %v3454, 1.0
      %v3678 = vadd.f32 %v3456, 1.0
      %v3679 = vadd.f32 %v3458, 1.0
      %v3680 = vadd.f32 %v3460, 1.0
      %v3681 = vadd.f32 %v3462, 1.0
      %v3682 = vadd.f32 %v3464, 1.0
      %v3683 = vadd.f32 %v3466, 1.0
      %v3684 = vadd.f32 %v3468, 1.0
      %v3685 = vadd.f32 %v3470, 1.0
      %v3686 = vadd.f32 %v3472, 1.0
      %v3687 = vadd.f32 %v3474, 1.0
      %v3688 = vadd.f32 %v3476, 1.0
      %v3689 = vadd.f32 %v3478, 1.0
      %v3690 = vadd.f32 %v3480, 1.0
      %v3691 = vadd.f32 %v3482, 1.0
      %v3692 = vadd.f32 %v3484, 1.0
      %v3693 = vadd.f32 %v3486, 1.0
      %v3694 = vadd.f32 %v3488, 1.0
      %v3695 = vadd.f32 %v3490, 1.0
      %v3696 = vadd.f32 %v3492, 1.0
      %v3697 = vadd.f32 %v3494, 1.0
      %v3698 = vadd.f32 %v3496, 1.0
      %v3699 = vadd.f32 %v3498, 1.0
      %v3700 = vadd.f32 %v3500, 1.0
      %v3701 = vadd.f32 %v3502, 1.0
      %v3702 = vadd.f32 %v3504, 1.0
      %v3703 = vadd.f32 %v3506, 1.0
      %v3704 = vadd.f32 %v3508, 1.0
      %v3705 = vadd.f32 %v3510, 1.0
      %v3706 = vadd.f32 %v3512, 1.0
      %v3707 = vadd.f32 %v3514, 1.0
      %v3708 = vadd.f32 %v3516, 1.0
      %v3709 = vadd.f32 %v3518, 1.0
      %v3710 = vadd.f32 %v3520, 1.0
      %v3711 = vadd.f32 %v3522, 1.0
      %v3712 = vadd.f32 %v3524, 1.0
      %v3713 = vadd.f32 %v3526, 1.0
      %v3714 = vadd.f32 %v3528, 1.0
      %v3715 = vadd.f32 %v3530, 1.0
      %v3716 = vadd.f32 %v3532, 1.0
      %v3717 = vadd.f32 %v3534, 1.0
      %v3718 = vadd.f32 %v3536, 1.0
      %v3719 = vadd.f32 %v3538, 1.0
      %v3720 = vadd.f32 %v3540, 1.0
      %v3721 = vadd.f32 %v3542, 1.0
      %v3722 = vadd.f32 %v3544, 1.0
      %v3723 = vadd.f32 %v3546, 1.0
      %v3724 = vadd.f32 %v3548, 1.0
      %v3725 = vadd.f32 %v3550, 1.0
      %v3726 = vadd.f32 %v3552, 1.0
      %v3727 = vadd.f32 %v3554, 1.0
      %v3728 = vadd.f32 %v3556, 1.0
      %v3729 = vadd.f32 %v3558, 1.0
      %v3730 = vadd.f32 %v3560, 1.0
      %v3731 = vadd.f32 %v3562, 1.0
      %v3732 = vadd.f32 %v3564, 1.0
      %v3733 = vadd.f32 %v3566, 1.0
      %v3734 = vadd.f32 %v3568, 1.0
      %v3735 = vadd.f32 %v3570, 1.0
      %v3736 = vadd.f32 %v3572, 1.0
      %v3737 = vadd.f32 %v3574, 1.0
      %v3738 = vadd.f32 %v3576, 1.0
      %v3739 = vadd.f32 %v3578, 1.0
      %v3740 = vadd.f32 %v3580, 1.0
      %v3741 = vadd.f32 %v3582, 1.0
      %v3742 = vadd.f32 %v3584, 1.0
      %v3743 = vadd.f32 %v3586, 1.0
      %v3744 = vadd.f32 %v3588, 1.0
      %v3745 = vadd.f32 %v3590, 1.0
      %v3746 = vadd.f32 %v3592, 1.0
      %v3747 = vadd.f32 %v3594, 1.0
      %v3748 = vadd.f32 %v3596, 1.0
      %v3749 = vadd.f32 %v3598, 1.0
      %v3750 = vadd.f32 %v3600, 1.0
      %v3751 = vadd.f32 %v3602, 1.0
      %v3752 = vadd.f32 %v3604, 1.0
      %v3753 = vadd.f32 %v3606, 1.0
      %v3754 = vadd.f32 %v3608, 1.0
      %v3755 = vadd.f32 %v3610, 1.0
      %v3756 = vadd.f32 %v3612, 1.0
      %v3757 = vadd.f32 %v3614, 1.0
      %v3758 = vadd.f32 %v3616, 1.0
      %v3759 = vadd.f32 %v3618, 1.0
      %v3760 = vadd.f32 %v3620, 1.0
      %v3761 = vadd.f32 %v3622, 1.0
      %v3762 = vadd.f32 %v3624, 1.0
      %v3763 = vadd.f32 %v3626, 1.0
      %v3764 = vadd.f32 %v3628, 1.0
      %v3765 = vadd.f32 %v3630, 1.0
      %v3766 = vadd.f32 %v3632, 1.0
      %v3767 = vadd.f32 %v3634, 1.0
      %v3768 = vadd.f32 %v3636, 1.0
      %v3769 = vadd.f32 %v3638, 1.0
      %v3770 = vadd.f32 %v3640, 1.0
      %v3771 = vadd.f32 %v3642, 1.0
      %v3772 = vadd.f32 %v3644, 1.0
      %v3773 = vadd.f32 %v3646, 1.0
      %v3774 = vadd.f32 %v3648, 1.0
      %v3775 = vadd.f32 %v3650, 1.0
      %v3776 = vadd.f32 %v3652, 1.0
      %v3777 = vadd.f32 %v3654, 1.0
      %v3778 = vadd.f32 %v3656, 1.0
      %v3779 = vadd.f32 %v3658, 1.0
      %v3780 = vadd.f32 %v3660, 1.0
      %v3781 = vadd.f32 %v3662, 1.0
      %v3782 = vadd.f32 %v3664, 1.0
      %v3783 = vadd.f32 %v3666, 1.0
      %v3784 = vadd.f32 %v3668, 1.0
      %v3785 = vadd.f32 %v3670, 1.0
      %v3786 = vadd.f32 %v3672, 1.0
      %v3787 = vadd.f32 %v3674, 1.0
      %v3788 = vadd.f32 %v3676, 1.0
      %v3789 = vrcp.pop %v3677
      %v3790 = vmul.f32 1.0, %v3789
      %v3791 = vrcp.pop %v3678
      %v3792 = vmul.f32 1.0, %v3791
      %v3793 = vrcp.pop %v3679
      %v3794 = vmul.f32 1.0, %v3793
      %v3795 = vrcp.pop %v3680
      %v3796 = vmul.f32 1.0, %v3795
      %v3797 = vrcp.pop %v3681
      %v3798 = vmul.f32 1.0, %v3797
      %v3799 = vrcp.pop %v3682
      %v3800 = vmul.f32 1.0, %v3799
      %v3801 = vrcp.pop %v3683
      %v3802 = vmul.f32 1.0, %v3801
      %v3803 = vrcp.pop %v3684
      %v3804 = vmul.f32 1.0, %v3803
      %v3805 = vrcp.pop %v3685
      %v3806 = vmul.f32 1.0, %v3805
      %v3807 = vrcp.pop %v3686
      %v3808 = vmul.f32 1.0, %v3807
      %v3809 = vrcp.pop %v3687
      %v3810 = vmul.f32 1.0, %v3809
      %v3811 = vrcp.pop %v3688
      %v3812 = vmul.f32 1.0, %v3811
      %v3813 = vrcp.pop %v3689
      %v3814 = vmul.f32 1.0, %v3813
      %v3815 = vrcp.pop %v3690
      %v3816 = vmul.f32 1.0, %v3815
      %v3817 = vrcp.pop %v3691
      %v3818 = vmul.f32 1.0, %v3817
      %v3819 = vrcp.pop %v3692
      %v3820 = vmul.f32 1.0, %v3819
      %v3821 = vrcp.pop %v3693
      %v3822 = vmul.f32 1.0, %v3821
      %v3823 = vrcp.pop %v3694
      %v3824 = vmul.f32 1.0, %v3823
      %v3825 = vrcp.pop %v3695
      %v3826 = vmul.f32 1.0, %v3825
      %v3827 = vrcp.pop %v3696
      %v3828 = vmul.f32 1.0, %v3827
      %v3829 = vrcp.pop %v3697
      %v3830 = vmul.f32 1.0, %v3829
      %v3831 = vrcp.pop %v3698
      %v3832 = vmul.f32 1.0, %v3831
      %v3833 = vrcp.pop %v3699
      %v3834 = vmul.f32 1.0, %v3833
      %v3835 = vrcp.pop %v3700
      %v3836 = vmul.f32 1.0, %v3835
      %v3837 = vrcp.pop %v3701
      %v3838 = vmul.f32 1.0, %v3837
      %v3839 = vrcp.pop %v3702
      %v3840 = vmul.f32 1.0, %v3839
      %v3841 = vrcp.pop %v3703
      %v3842 = vmul.f32 1.0, %v3841
      %v3843 = vrcp.pop %v3704
      %v3844 = vmul.f32 1.0, %v3843
      %v3845 = vrcp.pop %v3705
      %v3846 = vmul.f32 1.0, %v3845
      %v3847 = vrcp.pop %v3706
      %v3848 = vmul.f32 1.0, %v3847
      %v3849 = vrcp.pop %v3707
      %v3850 = vmul.f32 1.0, %v3849
      %v3851 = vrcp.pop %v3708
      %v3852 = vmul.f32 1.0, %v3851
      %v3853 = vrcp.pop %v3709
      %v3854 = vmul.f32 1.0, %v3853
      %v3855 = vrcp.pop %v3710
      %v3856 = vmul.f32 1.0, %v3855
      %v3857 = vrcp.pop %v3711
      %v3858 = vmul.f32 1.0, %v3857
      %v3859 = vrcp.pop %v3712
      %v3860 = vmul.f32 1.0, %v3859
      %v3861 = vrcp.pop %v3713
      %v3862 = vmul.f32 1.0, %v3861
      %v3863 = vrcp.pop %v3714
      %v3864 = vmul.f32 1.0, %v3863
      %v3865 = vrcp.pop %v3715
      %v3866 = vmul.f32 1.0, %v3865
      %v3867 = vrcp.pop %v3716
      %v3868 = vmul.f32 1.0, %v3867
      %v3869 = vrcp.pop %v3717
      %v3870 = vmul.f32 1.0, %v3869
      %v3871 = vrcp.pop %v3718
      %v3872 = vmul.f32 1.0, %v3871
      %v3873 = vrcp.pop %v3719
      %v3874 = vmul.f32 1.0, %v3873
      %v3875 = vrcp.pop %v3720
      %v3876 = vmul.f32 1.0, %v3875
      %v3877 = vrcp.pop %v3721
      %v3878 = vmul.f32 1.0, %v3877
      %v3879 = vrcp.pop %v3722
      %v3880 = vmul.f32 1.0, %v3879
      %v3881 = vrcp.pop %v3723
      %v3882 = vmul.f32 1.0, %v3881
      %v3883 = vrcp.pop %v3724
      %v3884 = vmul.f32 1.0, %v3883
      %v3885 = vrcp.pop %v3725
      %v3886 = vmul.f32 1.0, %v3885
      %v3887 = vrcp.pop %v3726
      %v3888 = vmul.f32 1.0, %v3887
      %v3889 = vrcp.pop %v3727
      %v3890 = vmul.f32 1.0, %v3889
      %v3891 = vrcp.pop %v3728
      %v3892 = vmul.f32 1.0, %v3891
      %v3893 = vrcp.pop %v3729
      %v3894 = vmul.f32 1.0, %v3893
      %v3895 = vrcp.pop %v3730
      %v3896 = vmul.f32 1.0, %v3895
      %v3897 = vrcp.pop %v3731
      %v3898 = vmul.f32 1.0, %v3897
      %v3899 = vrcp.pop %v3732
      %v3900 = vmul.f32 1.0, %v3899
      %v3901 = vrcp.pop %v3733
      %v3902 = vmul.f32 1.0, %v3901
      %v3903 = vrcp.pop %v3734
      %v3904 = vmul.f32 1.0, %v3903
      %v3905 = vrcp.pop %v3735
      %v3906 = vmul.f32 1.0, %v3905
      %v3907 = vrcp.pop %v3736
      %v3908 = vmul.f32 1.0, %v3907
      %v3909 = vrcp.pop %v3737
      %v3910 = vmul.f32 1.0, %v3909
      %v3911 = vrcp.pop %v3738
      %v3912 = vmul.f32 1.0, %v3911
      %v3913 = vrcp.pop %v3739
      %v3914 = vmul.f32 1.0, %v3913
      %v3915 = vrcp.pop %v3740
      %v3916 = vmul.f32 1.0, %v3915
      %v3917 = vrcp.pop %v3741
      %v3918 = vmul.f32 1.0, %v3917
      %v3919 = vrcp.pop %v3742
      %v3920 = vmul.f32 1.0, %v3919
      %v3921 = vrcp.pop %v3743
      %v3922 = vmul.f32 1.0, %v3921
      %v3923 = vrcp.pop %v3744
      %v3924 = vmul.f32 1.0, %v3923
      %v3925 = vrcp.pop %v3745
      %v3926 = vmul.f32 1.0, %v3925
      %v3927 = vrcp.pop %v3746
      %v3928 = vmul.f32 1.0, %v3927
      %v3929 = vrcp.pop %v3747
      %v3930 = vmul.f32 1.0, %v3929
      %v3931 = vrcp.pop %v3748
      %v3932 = vmul.f32 1.0, %v3931
      %v3933 = vrcp.pop %v3749
      %v3934 = vmul.f32 1.0, %v3933
      %v3935 = vrcp.pop %v3750
      %v3936 = vmul.f32 1.0, %v3935
      %v3937 = vrcp.pop %v3751
      %v3938 = vmul.f32 1.0, %v3937
      %v3939 = vrcp.pop %v3752
      %v3940 = vmul.f32 1.0, %v3939
      %v3941 = vrcp.pop %v3753
      %v3942 = vmul.f32 1.0, %v3941
      %v3943 = vrcp.pop %v3754
      %v3944 = vmul.f32 1.0, %v3943
      %v3945 = vrcp.pop %v3755
      %v3946 = vmul.f32 1.0, %v3945
      %v3947 = vrcp.pop %v3756
      %v3948 = vmul.f32 1.0, %v3947
      %v3949 = vrcp.pop %v3757
      %v3950 = vmul.f32 1.0, %v3949
      %v3951 = vrcp.pop %v3758
      %v3952 = vmul.f32 1.0, %v3951
      %v3953 = vrcp.pop %v3759
      %v3954 = vmul.f32 1.0, %v3953
      %v3955 = vrcp.pop %v3760
      %v3956 = vmul.f32 1.0, %v3955
      %v3957 = vrcp.pop %v3761
      %v3958 = vmul.f32 1.0, %v3957
      %v3959 = vrcp.pop %v3762
      %v3960 = vmul.f32 1.0, %v3959
      %v3961 = vrcp.pop %v3763
      %v3962 = vmul.f32 1.0, %v3961
      %v3963 = vrcp.pop %v3764
      %v3964 = vmul.f32 1.0, %v3963
      %v3965 = vrcp.pop %v3765
      %v3966 = vmul.f32 1.0, %v3965
      %v3967 = vrcp.pop %v3766
      %v3968 = vmul.f32 1.0, %v3967
      %v3969 = vrcp.pop %v3767
      %v3970 = vmul.f32 1.0, %v3969
      %v3971 = vrcp.pop %v3768
      %v3972 = vmul.f32 1.0, %v3971
      %v3973 = vrcp.pop %v3769
      %v3974 = vmul.f32 1.0, %v3973
      %v3975 = vrcp.pop %v3770
      %v3976 = vmul.f32 1.0, %v3975
      %v3977 = vrcp.pop %v3771
      %v3978 = vmul.f32 1.0, %v3977
      %v3979 = vrcp.pop %v3772
      %v3980 = vmul.f32 1.0, %v3979
      %v3981 = vrcp.pop %v3773
      %v3982 = vmul.f32 1.0, %v3981
      %v3983 = vrcp.pop %v3774
      %v3984 = vmul.f32 1.0, %v3983
      %v3985 = vrcp.pop %v3775
      %v3986 = vmul.f32 1.0, %v3985
      %v3987 = vrcp.pop %v3776
      %v3988 = vmul.f32 1.0, %v3987
      %v3989 = vrcp.pop %v3777
      %v3990 = vmul.f32 1.0, %v3989
      %v3991 = vrcp.pop %v3778
      %v3992 = vmul.f32 1.0, %v3991
      %v3993 = vrcp.pop %v3779
      %v3994 = vmul.f32 1.0, %v3993
      %v3995 = vrcp.pop %v3780
      %v3996 = vmul.f32 1.0, %v3995
      %v3997 = vrcp.pop %v3781
      %v3998 = vmul.f32 1.0, %v3997
      %v3999 = vrcp.pop %v3782
      %v4000 = vmul.f32 1.0, %v3999
      %v4001 = vrcp.pop %v3783
      %v4002 = vmul.f32 1.0, %v4001
      %v4003 = vrcp.pop %v3784
      %v4004 = vmul.f32 1.0, %v4003
      %v4005 = vrcp.pop %v3785
      %v4006 = vmul.f32 1.0, %v4005
      %v4007 = vrcp.pop %v3786
      %v4008 = vmul.f32 1.0, %v4007
      %v4009 = vrcp.pop %v3787
      %v4010 = vmul.f32 1.0, %v4009
      %v4011 = vrcp.pop %v3788
      %v4012 = vmul.f32 1.0, %v4011
      %4013 = vst [vmem:[%s596] sm:$0xff] %v3790
      %4014 = vst [vmem:[%s596 + $0x8] sm:$0xff] %v3792
      %4015 = vst [vmem:[%s596 + $0x10] sm:$0xff] %v3794
      %4016 = vst [vmem:[%s596 + $0x18] sm:$0xff] %v3796
      %4017 = vst [vmem:[%s596 + $0x20] sm:$0xff] %v3798
      %4018 = vst [vmem:[%s596 + $0x28] sm:$0xff] %v3800
      %4019 = vst [vmem:[%s596 + $0x30] sm:$0xff] %v3802
      %4020 = vst [vmem:[%s596 + $0x38] sm:$0xff] %v3804
      %4021 = vst [vmem:[%s596 + $0x40] sm:$0xff] %v3806
      %4022 = vst [vmem:[%s596 + $0x48] sm:$0xff] %v3808
      %4023 = vst [vmem:[%s596 + $0x50] sm:$0xff] %v3810
      %4024 = vst [vmem:[%s596 + $0x58] sm:$0xff] %v3812
      %4025 = vst [vmem:[%s596 + $0x60] sm:$0xff] %v3814
      %4026 = vst [vmem:[%s596 + $0x68] sm:$0xff] %v3816
      %4027 = vst [vmem:[%s596 + $0x70] sm:$0xff] %v3818
      %4028 = vst [vmem:[%s596 + $0x78] sm:$0xff] %v3820
      %4029 = vst [vmem:[%s596 + $0x80] sm:$0xff] %v3822
      %4030 = vst [vmem:[%s596 + $0x88] sm:$0xff] %v3824
      %4031 = vst [vmem:[%s596 + $0x90] sm:$0xff] %v3826
      %4032 = vst [vmem:[%s596 + $0x98] sm:$0xff] %v3828
      %4033 = vst [vmem:[%s596 + $0xa0] sm:$0xff] %v3830
      %4034 = vst [vmem:[%s596 + $0xa8] sm:$0xff] %v3832
      %4035 = vst [vmem:[%s596 + $0xb0] sm:$0xff] %v3834
      %4036 = vst [vmem:[%s596 + $0xb8] sm:$0xff] %v3836
      %4037 = vst [vmem:[%s596 + $0xc0] sm:$0xff] %v3838
      %4038 = vst [vmem:[%s596 + $0xc8] sm:$0xff] %v3840
      %4039 = vst [vmem:[%s596 + $0xd0] sm:$0xff] %v3842
      %4040 = vst [vmem:[%s596 + $0xd8] sm:$0xff] %v3844
      %4041 = vst [vmem:[%s596 + $0xe0] sm:$0xff] %v3846
      %4042 = vst [vmem:[%s596 + $0xe8] sm:$0xff] %v3848
      %4043 = vst [vmem:[%s596 + $0xf0] sm:$0xff] %v3850
      %4044 = vst [vmem:[%s596 + $0xf8] sm:$0xff] %v3852
      %4045 = vst [vmem:[%s596 + $0x100] sm:$0xff] %v3854
      %4046 = vst [vmem:[%s596 + $0x108] sm:$0xff] %v3856
      %4047 = vst [vmem:[%s596 + $0x110] sm:$0xff] %v3858
      %4048 = vst [vmem:[%s596 + $0x118] sm:$0xff] %v3860
      %4049 = vst [vmem:[%s596 + $0x120] sm:$0xff] %v3862
      %4050 = vst [vmem:[%s596 + $0x128] sm:$0xff] %v3864
      %4051 = vst [vmem:[%s596 + $0x130] sm:$0xff] %v3866
      %4052 = vst [vmem:[%s596 + $0x138] sm:$0xff] %v3868
      %4053 = vst [vmem:[%s596 + $0x140] sm:$0xff] %v3870
      %4054 = vst [vmem:[%s596 + $0x148] sm:$0xff] %v3872
      %4055 = vst [vmem:[%s596 + $0x150] sm:$0xff] %v3874
      %4056 = vst [vmem:[%s596 + $0x158] sm:$0xff] %v3876
      %4057 = vst [vmem:[%s596 + $0x160] sm:$0xff] %v3878
      %4058 = vst [vmem:[%s596 + $0x168] sm:$0xff] %v3880
      %4059 = vst [vmem:[%s596 + $0x170] sm:$0xff] %v3882
      %4060 = vst [vmem:[%s596 + $0x178] sm:$0xff] %v3884
      %4061 = vst [vmem:[%s596 + $0x180] sm:$0xff] %v3886
      %4062 = vst [vmem:[%s596 + $0x188] sm:$0xff] %v3888
      %4063 = vst [vmem:[%s596 + $0x190] sm:$0xff] %v3890
      %4064 = vst [vmem:[%s596 + $0x198] sm:$0xff] %v3892
      %4065 = vst [vmem:[%s596 + $0x1a0] sm:$0xff] %v3894
      %4066 = vst [vmem:[%s596 + $0x1a8] sm:$0xff] %v3896
      %4067 = vst [vmem:[%s596 + $0x1b0] sm:$0xff] %v3898
      %4068 = vst [vmem:[%s596 + $0x1b8] sm:$0xff] %v3900
      %4069 = vst [vmem:[%s596 + $0x1c0] sm:$0xff] %v3902
      %4070 = vst [vmem:[%s596 + $0x1c8] sm:$0xff] %v3904
      %4071 = vst [vmem:[%s596 + $0x1d0] sm:$0xff] %v3906
      %4072 = vst [vmem:[%s596 + $0x1d8] sm:$0xff] %v3908
      %4073 = vst [vmem:[%s596 + $0x1e0] sm:$0xff] %v3910
      %4074 = vst [vmem:[%s596 + $0x1e8] sm:$0xff] %v3912
      %4075 = vst [vmem:[%s596 + $0x1f0] sm:$0xff] %v3914
      %4076 = vst [vmem:[%s596 + $0x1f8] sm:$0xff] %v3916
      %4077 = vst [vmem:[%s596 + $0x200] sm:$0xff] %v3918
      %4078 = vst [vmem:[%s596 + $0x208] sm:$0xff] %v3920
      %4079 = vst [vmem:[%s596 + $0x210] sm:$0xff] %v3922
      %4080 = vst [vmem:[%s596 + $0x218] sm:$0xff] %v3924
      %4081 = vst [vmem:[%s596 + $0x220] sm:$0xff] %v3926
      %4082 = vst [vmem:[%s596 + $0x228] sm:$0xff] %v3928
      %4083 = vst [vmem:[%s596 + $0x230] sm:$0xff] %v3930
      %4084 = vst [vmem:[%s596 + $0x238] sm:$0xff] %v3932
      %4085 = vst [vmem:[%s596 + $0x240] sm:$0xff] %v3934
      %4086 = vst [vmem:[%s596 + $0x248] sm:$0xff] %v3936
      %4087 = vst [vmem:[%s596 + $0x250] sm:$0xff] %v3938
      %4088 = vst [vmem:[%s596 + $0x258] sm:$0xff] %v3940
      %4089 = vst [vmem:[%s596 + $0x260] sm:$0xff] %v3942
      %4090 = vst [vmem:[%s596 + $0x268] sm:$0xff] %v3944
      %4091 = vst [vmem:[%s596 + $0x270] sm:$0xff] %v3946
      %4092 = vst [vmem:[%s596 + $0x278] sm:$0xff] %v3948
      %4093 = vst [vmem:[%s596 + $0x280] sm:$0xff] %v3950
      %4094 = vst [vmem:[%s596 + $0x288] sm:$0xff] %v3952
      %4095 = vst [vmem:[%s596 + $0x290] sm:$0xff] %v3954
      %4096 = vst [vmem:[%s596 + $0x298] sm:$0xff] %v3956
      %4097 = vst [vmem:[%s596 + $0x2a0] sm:$0xff] %v3958
      %4098 = vst [vmem:[%s596 + $0x2a8] sm:$0xff] %v3960
      %4099 = vst [vmem:[%s596 + $0x2b0] sm:$0xff] %v3962
      %4100 = vst [vmem:[%s596 + $0x2b8] sm:$0xff] %v3964
      %4101 = vst [vmem:[%s596 + $0x2c0] sm:$0xff] %v3966
      %4102 = vst [vmem:[%s596 + $0x2c8] sm:$0xff] %v3968
      %4103 = vst [vmem:[%s596 + $0x2d0] sm:$0xff] %v3970
      %4104 = vst [vmem:[%s596 + $0x2d8] sm:$0xff] %v3972
      %4105 = vst [vmem:[%s596 + $0x2e0] sm:$0xff] %v3974
      %4106 = vst [vmem:[%s596 + $0x2e8] sm:$0xff] %v3976
      %4107 = vst [vmem:[%s596 + $0x2f0] sm:$0xff] %v3978
      %4108 = vst [vmem:[%s596 + $0x2f8] sm:$0xff] %v3980
      %4109 = vst [vmem:[%s596 + $0x300] sm:$0xff] %v3982
      %4110 = vst [vmem:[%s596 + $0x308] sm:$0xff] %v3984
      %4111 = vst [vmem:[%s596 + $0x310] sm:$0xff] %v3986
      %4112 = vst [vmem:[%s596 + $0x318] sm:$0xff] %v3988
      %4113 = vst [vmem:[%s596 + $0x320] sm:$0xff] %v3990
      %4114 = vst [vmem:[%s596 + $0x328] sm:$0xff] %v3992
      %4115 = vst [vmem:[%s596 + $0x330] sm:$0xff] %v3994
      %4116 = vst [vmem:[%s596 + $0x338] sm:$0xff] %v3996
      %4117 = vst [vmem:[%s596 + $0x340] sm:$0xff] %v3998
      %4118 = vst [vmem:[%s596 + $0x348] sm:$0xff] %v4000
      %4119 = vst [vmem:[%s596 + $0x350] sm:$0xff] %v4002
      %4120 = vst [vmem:[%s596 + $0x358] sm:$0xff] %v4004
      %4121 = vst [vmem:[%s596 + $0x360] sm:$0xff] %v4006
      %4122 = vst [vmem:[%s596 + $0x368] sm:$0xff] %v4008
      %4123 = vst [vmem:[%s596 + $0x370] sm:$0xff] %v4010
      %4124 = vst [vmem:[%s596 + $0x378] sm:$0xff] %v4012
      %s4125 = smul.u32 16, %s30
      %p4126 = scmp.lt.s32.totalorder %s4125, 31
      %s4127 = scalar_select %p4126, %s4125, 31
      %s4128 = smul.addr %s4127, 8
      %s4129 = scalar_lea.vmem %s17, %s4128
      %s4130 = smul.u32 16, %s30
      %p4131 = scmp.lt.s32.totalorder %s4130, 31
      %s4132 = scalar_select %p4131, %s4130, 31
      %s4133 = smul.addr %s4132, 7
      %s4134 = smul.addr %s4133, 8
      %s4135 = scalar_lea.vmem %s18, %s4134
      // Predicated region
      $region89: #{autoencoder_forward.1} parent=87 // pred_check
        %p4136 = pneg %p410
      $region90: #{autoencoder_forward.1} parent=87 // pred_check_branch
        %4138 = sbr.rel (%p4136) target = $region92
      $region91: #{autoencoder_forward.1} parent=87 // pred_region
        %s4139 = smul.u32 16, %s30
      $region92: #{autoencoder_forward.1} parent=87 // pred_fallthru
        _
      // Predicated region
      $region93: #{autoencoder_forward.1} parent=87 // pred_check
        %p4140 = pneg %p436
      $region94: #{autoencoder_forward.1} parent=87 // pred_check_branch
        %4142 = sbr.rel (%p4140) target = $region96
      $region95: #{autoencoder_forward.1} parent=87 // pred_region
        %s4143 = smul.u32 16, %s30
      $region96: #{autoencoder_forward.1} parent=87 // pred_fallthru
        _
    $region88: #{autoencoder_forward.1} parent=5 // pred_fallthru
      _
    %p4144 = scmp.le.s32.totalorder 2, %s25
    // Predicated region
    $region97: #{autoencoder_forward.1} parent=5 // pred_check
      %p4145 = pneg %p4144
    $region98: #{autoencoder_forward.1} parent=5 // pred_check_branch
      %4147 = sbr.rel (%p4145) target = $region100
    $region99: #{autoencoder_forward.1} parent=5 // pred_region
      %s4148 = ssub.s32 %s25, 2
      // Predicated region
      $region101: #{autoencoder_forward.1} parent=99 // pred_check
        %p4149 = pneg %p416
      $region102: #{autoencoder_forward.1} parent=99 // pred_check_branch
        %4151 = sbr.rel (%p4149) target = $region104
      $region103: #{autoencoder_forward.1} parent=99 // pred_region
        %s4152 = smul.u32 16, %s31
        %p4153 = scmp.lt.s32.totalorder %s4152, 31
        %s4154 = scalar_select %p4153, %s4152, 31
        %s4155 = smul.addr %s4154, 8
        %s4156 = scalar_lea.vmem %s17, %s4155
      $region104: #{autoencoder_forward.1} parent=99 // pred_fallthru
        _
      // Predicated region
      $region105: #{autoencoder_forward.1} parent=99 // pred_check
        %p4157 = pneg %p442
      $region106: #{autoencoder_forward.1} parent=99 // pred_check_branch
        %4159 = sbr.rel (%p4157) target = $region108
      $region107: #{autoencoder_forward.1} parent=99 // pred_region
        %s4160 = smul.u32 16, %s31
        %p4161 = scmp.lt.s32.totalorder %s4160, 31
        %s4162 = scalar_select %p4161, %s4160, 31
        %s4163 = smul.addr %s4162, 7
        %s4164 = smul.addr %s4163, 8
        %s4165 = scalar_lea.vmem %s18, %s4164
      $region108: #{autoencoder_forward.1} parent=99 // pred_fallthru
        _
    $region100: #{autoencoder_forward.1} parent=5 // pred_fallthru
      _
  $region6: #{autoencoder_forward.1} parent=0 // loop_footer
    %s29 = sadd.s32 1, %s25
  $region7: #{autoencoder_forward.1} parent=0 // loop_footer_branch
    %24 = sbr.rel target = $region3
  $region8: #{autoencoder_forward.1} parent=0 // loop_exit
    _

</llo_original>
